<compile_context>
chip_gen: v6e
topology: v6e:2x2x1
jax: 0.10.0
libtpu: 0.0.40
codegen_flags: <defaults>
</compile_context>

<pallas_src>
from typing import NamedTuple

import numpy as np
import jax
import jax.numpy as jnp
from jax import lax
from jax.experimental import pallas as pl
from jax.experimental.pallas import tpu as pltpu

EPS = 1e-3  # BatchRenorm eps from the module (bn = BatchRenorm(v, eps=0.001))


# -----------------------------------------------------------------------------
# Generic stride-1 VALID 3-D convolution (correlation) Pallas kernel.
#
# grid = (B, Do, KD): one step accumulates the contribution of input depth
# plane (d + kd) into output plane (b, d).  The full weight is resident in VMEM
# (constant index_map); KH/KW taps are unrolled in-kernel.
# -----------------------------------------------------------------------------
def _make_conv_kernel(KH, KW, Ho, Wo, Cin):
    def kernel(x_ref, w_ref, b_ref, o_ref, acc_ref):
        kd = pl.program_id(2)

        @pl.when(kd == 0)
        def _init():
            acc_ref[...] = jnp.broadcast_to(b_ref[...], acc_ref.shape)

        acc = acc_ref[...]
        for kh in range(KH):
            for kw in range(KW):
                lhs = x_ref[0, kh:kh + Ho, kw:kw + Wo, :].reshape(Ho * Wo, Cin)
                acc += jnp.dot(lhs, w_ref[(kd * KH + kh) * KW + kw],
                               preferred_element_type=jnp.float32)
        acc_ref[...] = acc

        @pl.when(kd == pl.num_programs(2) - 1)
        def _store():
            o_ref[...] = acc_ref[...].reshape(o_ref.shape).astype(o_ref.dtype)

    return kernel


def _conv3d_valid(xpad, w, bias, out_dtype):
    """VALID stride-1 3-D correlation.

    xpad: [B, Dp, Hp, Wp, Cin] (bf16)   w: [KD, KH, KW, Cin, Cout] (bf16)
    bias: [Cout] (f32)                  returns [B, Do, Ho, Wo, Cout] out_dtype
    """
    B, Dp, Hp, Wp, Cin = xpad.shape
    KD, KH, KW, _, Cout = w.shape
    Do, Ho, Wo = Dp - KD + 1, Hp - KH + 1, Wp - KW + 1

    x4 = xpad.reshape(B * Dp, Hp, Wp, Cin)
    w3 = w.reshape(KD * KH * KW, Cin, Cout)
    b2 = bias.reshape(1, Cout).astype(jnp.float32)

    out = pl.pallas_call(
        _make_conv_kernel(KH, KW, Ho, Wo, Cin),
        out_shape=jax.ShapeDtypeStruct((B * Do, Ho, Wo, Cout), out_dtype),
        grid=(B, Do, KD),
        in_specs=[
            # One full (padded) H x W input plane at depth (d + kd).
            pl.BlockSpec((1, Hp, Wp, Cin),
                         lambda bi, di, ki: (bi * Dp + di + ki, 0, 0, 0)),
            # Full weight tensor, resident in VMEM (constant index -> one DMA).
            pl.BlockSpec((KD * KH * KW, Cin, Cout), lambda bi, di, ki: (0, 0, 0)),
            pl.BlockSpec((1, Cout), lambda bi, di, ki: (0, 0)),
        ],
        # Output plane revisited across kd (accumulator pattern).
        out_specs=pl.BlockSpec((1, Ho, Wo, Cout),
                               lambda bi, di, ki: (bi * Do + di, 0, 0, 0)),
        scratch_shapes=[pltpu.VMEM((Ho * Wo, Cout), jnp.float32)],
        compiler_params=pltpu.CompilerParams(
            dimension_semantics=("parallel", "parallel", "arbitrary"),
            vmem_limit_bytes=40 * 1024 * 1024),
    )(x4, w3, b2)
    return out.reshape(B, Do, Ho, Wo, Cout)


# -----------------------------------------------------------------------------
# Wrappers: fused ReLU + BatchRenorm(eval) + bf16 cast + halo padding, then the
# Pallas conv.  ConvTranspose3d goes through the sub-pixel decomposition.
# -----------------------------------------------------------------------------
def _affine_relu(x, bn, relu):
    y = x.astype(jnp.float32)
    if relu:
        y = jnp.maximum(y, 0.0)
    if bn is not None:
        gamma, beta, mean, var = bn
        a = gamma * lax.rsqrt(var + EPS)
        y = y * a + (beta - mean * a)
    return y


def conv3d_block(x, w_oidhw, bias, padding, bn=None, relu=False,
                 out_dtype=jnp.bfloat16):
    """[ReLU ->] [BatchRenorm ->] PyTorch Conv3d (stride 1, symmetric pad)."""
    y = _affine_relu(x, bn, relu).astype(jnp.bfloat16)
    p = padding
    xp = jnp.pad(y, ((0, 0), (p, p), (p, p), (p, p), (0, 0)))
    w = jnp.transpose(w_oidhw, (2, 3, 4, 1, 0)).astype(jnp.bfloat16)
    return _conv3d_valid(xp, w, bias.astype(jnp.float32), out_dtype)


def _subpixel_geometry(k, s, p):
    # Tap index t used by output phase phi at sub-kernel position j satisfies
    # t = phi + p + (L - j) * s;  L / N chosen so every phase's taps fit.
    r_hi = [(k - 1 - phi - p) // s for phi in range(s)]
    r_lo = [-((phi + p) // s) for phi in range(s)]
    L = max(0, max(r_hi))
    N = L - min(r_lo) + 1
    return L, N


def _phase_expand_weight(w_iodhw, k, s, p, L, N):
    """[Cin, Cout, k, k, k] -> [N, N, N, Cin, s^3*Cout] sub-pixel decomposition."""
    cin, cout = w_iodhw.shape[0], w_iodhw.shape[1]
    j = np.arange(N)
    phi = np.arange(s)
    t = phi[:, None] + p + (L - j[None, :]) * s          # (s, N), static
    valid = (t >= 0) & (t < k)
    tc = np.clip(t, 0, k - 1)
    wt = jnp.transpose(w_iodhw, (2, 3, 4, 0, 1))         # (k, k, k, Cin, Cout)
    g = wt[tc[:, :, None, None, None, None],
           tc[None, None, :, :, None, None],
           tc[None, None, None, None, :, :]]             # (s,N,s,N,s,N,Cin,Cout)
    m = (valid[:, :, None, None, None, None]
         & valid[None, None, :, :, None, None]
         & valid[None, None, None, None, :, :])
    g = jnp.where(m[..., None, None], g, 0.0)
    g = jnp.transpose(g, (1, 3, 5, 6, 0, 2, 4, 7))       # (N,N,N,Cin, s,s,s, Cout)
    return g.reshape(N, N, N, cin, (s ** 3) * cout)


def conv_transpose3d_block(x, w_iodhw, bias, stride, padding, output_padding,
                           bn=None, relu=False, out_dtype=jnp.bfloat16):
    """[ReLU ->] [BatchRenorm ->] PyTorch ConvTranspose3d via sub-pixel conv."""
    s, p, op = stride, padding, output_padding
    cin, cout, k = w_iodhw.shape[0], w_iodhw.shape[1], w_iodhw.shape[2]
    B, D, H, W, _ = x.shape
    Dout, Hout, Wout = [(n - 1) * s - 2 * p + k + op for n in (D, H, W)]
    L, N = _subpixel_geometry(k, s, p)
    Qd, Qh, Qw = [-(-o // s) for o in (Dout, Hout, Wout)]
    Rd, Rh, Rw = [q + N - 1 - n - L for q, n in ((Qd, D), (Qh, H), (Qw, W))]
    assert L >= 0 and min(Rd, Rh, Rw) >= 0

    y = _affine_relu(x, bn, relu).astype(jnp.bfloat16)
    xp = jnp.pad(y, ((0, 0), (L, Rd), (L, Rh), (L, Rw), (0, 0)))
    wph = _phase_expand_weight(w_iodhw, k, s, p, L, N).astype(jnp.bfloat16)
    bph = jnp.tile(bias.astype(jnp.float32), (s ** 3,))

    out = _conv3d_valid(xp, wph, bph, out_dtype)          # (B, Qd, Qh, Qw, s^3*C)
    out = out.reshape(B, Qd, Qh, Qw, s, s, s, cout)
    out = jnp.transpose(out, (0, 1, 4, 2, 5, 3, 6, 7))    # depth-to-space
    out = out.reshape(B, Qd * s, Qh * s, Qw * s, cout)
    return out[:, :Dout, :Hout, :Wout, :]


# -----------------------------------------------------------------------------
# Parameters (deterministic, synthetic, PyTorch layouts)
# -----------------------------------------------------------------------------
def _he(key, shape, fan_in):
    return jax.random.normal(key, shape, jnp.float32) * jnp.sqrt(2.0 / fan_in)


def _bn_params(key, c):
    k1, k2, k3, k4 = jax.random.split(key, 4)
    gamma = 1.0 + 0.05 * jax.random.normal(k1, (c,), jnp.float32)
    beta = 0.05 * jax.random.normal(k2, (c,), jnp.float32)
    mean = 0.05 * jax.random.normal(k3, (c,), jnp.float32)
    var = 1.0 + 0.1 * jax.random.uniform(k4, (c,), jnp.float32)
    return (gamma, beta, mean, var)


def init_params(key, cfg):
    lat = cfg["latent_channels"]
    keys = iter(jax.random.split(key, 64))
    p = {}
    p["stage0_w"] = _he(next(keys), (2048, lat), 2048)
    p["stage0_b"] = 0.01 * jax.random.normal(next(keys), (lat,), jnp.float32)

    c1in = lat + 3
    p["stage1_bn"] = _bn_params(next(keys), c1in)
    p["stage1_t1_w"] = _he(next(keys), (c1in, 256, 4, 4, 4), c1in * 64)
    p["stage1_t1_b"] = 0.01 * jax.random.normal(next(keys), (256,), jnp.float32)

    def conv_block(cin, cmid, cout, kc, kt):
        return {
            "bn1": _bn_params(next(keys), cin),
            "c1_w": _he(next(keys), (cmid, cin, kc, kc, kc), cin * kc ** 3),
            "c1_b": 0.01 * jax.random.normal(next(keys), (cmid,), jnp.float32),
            "bn2": _bn_params(next(keys), cmid),
            "t1_w": _he(next(keys), (cmid, cout, kt, kt, kt), cmid * kt ** 3),
            "t1_b": 0.01 * jax.random.normal(next(keys), (cout,), jnp.float32),
        }

    # skip_fraction = 0.0 -> in3c = 128, in4c = 64, in5c = 32, in6c = 16
    p["stage2"] = conv_block(256, 256, 128, 3, 3)
    p["stage3"] = conv_block(128, 128, 64, 5, 7)
    p["stage4"] = conv_block(64, 64, 32, 5, 7)
    p["stage5"] = conv_block(32, 32, 16, 5, 7)
    p["stage6"] = conv_block(16, 16, cfg["num_output_channels"], 5, 7)
    return p


# -----------------------------------------------------------------------------
# Forward pass
# -----------------------------------------------------------------------------
class ResNet50Features(NamedTuple):
    global_average_2048: jax.Array
    stage5_2048x8x8: jax.Array
    stage4_1024x16x16: jax.Array
    stage3_512x32x32: jax.Array
    stage2_256x64x64: jax.Array


def reconstruction_decoder_forward(params, cfg, image_features,
                                   voxel_projection_matrix,
                                   voxel_sample_locations):
    del voxel_projection_matrix  # only used by the (disabled) skip connections
    luf = cfg["last_upscale_factor"]

    # stage_0: Linear(2048 -> latent), concat sample locations (plain matmul).
    x = image_features.global_average_2048 @ params["stage0_w"] + params["stage0_b"]
    x = jnp.concatenate([x, voxel_sample_locations], axis=1)     # [B, latent+3]

    # stage_1: ReLU -> BatchRenorm -> ConvTranspose3d(k=4) on a 1x1x1 grid,
    # which is exactly a dense matmul producing the 4^3 seed grid.
    y = _affine_relu(x, params["stage1_bn"], relu=True)
    wt = params["stage1_t1_w"]                                   # [Cin,256,4,4,4]
    cin, cout, k = wt.shape[0], wt.shape[1], wt.shape[2]
    wmat = jnp.transpose(wt, (0, 2, 3, 4, 1)).reshape(cin, k ** 3 * cout)
    x = (y @ wmat).reshape(-1, k, k, k, cout) + params["stage1_t1_b"]

    def stage(x, sp, conv_pad, t_stride, t_pad, t_opad, final=False):
        x = conv3d_block(x, sp["c1_w"], sp["c1_b"], conv_pad,
                         bn=sp["bn1"], relu=True)
        x = conv_transpose3d_block(
            x, sp["t1_w"], sp["t1_b"], t_stride, t_pad, t_opad,
            bn=sp["bn2"], relu=True,
            out_dtype=jnp.float32 if final else jnp.bfloat16)
        return x

    x = stage(x, params["stage2"], 1, 2, 1, 1)        # -> [B,  8^3, 128]
    x = stage(x, params["stage3"], 2, 2, 3, 1)        # -> [B, 16^3,  64]
    x = stage(x, params["stage4"], 2, 2, 3, 1)        # -> [B, 32^3,  32]
    x = stage(x, params["stage5"], 2, 2, 3, 1)        # -> [B, 64^3,  16]
    x = stage(x, params["stage6"], 2, luf, 3, 1, final=True)   # -> [B,128^3,C]

    return jnp.transpose(x, (0, 4, 1, 2, 3))          # NCDHW, as PyTorch returns


# -----------------------------------------------------------------------------
# Main
# -----------------------------------------------------------------------------
if __name__ == "__main__":
    cfg = dict(resolution=(128, 128, 128), latent_channels=8,
               last_upscale_factor=2, skip_fraction=0.0, num_output_channels=1)
    d, h, w = cfg["resolution"]
    div = 16 * cfg["last_upscale_factor"]
    assert d % div == 0 and h % div == 0 and w % div == 0

    key = jax.random.PRNGKey(0)
    kp, kf, kv, kc = jax.random.split(key, 4)
    params = init_params(kp, cfg)

    # --- small self-checks of the Pallas conv / sub-pixel transposed conv ----
    kc1, kc2, kc3, kc4 = jax.random.split(kc, 4)

    def _q(a):  # bf16-round (the kernels feed the MXU in bf16)
        return a.astype(jnp.bfloat16).astype(jnp.float32)

    xt = jax.random.normal(kc1, (1, 5, 6, 7, 8), jnp.float32)
    wt_ = 0.1 * jax.random.normal(kc2, (16, 8, 3, 3, 3), jnp.float32)
    bt = jnp.linspace(-0.2, 0.2, 16, dtype=jnp.float32)
    got = conv3d_block(xt, wt_, bt, padding=1, out_dtype=jnp.float32)
    ref = lax.conv_general_dilated(
        _q(xt), jnp.transpose(_q(wt_), (2, 3, 4, 1, 0)), (1, 1, 1), [(1, 1)] * 3,
        dimension_numbers=("NDHWC", "DHWIO", "NDHWC")) + bt
    assert got.shape == ref.shape
    assert float(jnp.max(jnp.abs(got - ref))) < 2e-2

    def _check_convt(key, cin, cout, k, s, p, op, spatial):
        k1, k2 = jax.random.split(key)
        x = jax.random.normal(k1, (1, *spatial, cin), jnp.float32)
        wgt = 0.05 * jax.random.normal(k2, (cin, cout, k, k, k), jnp.float32)
        b = jnp.linspace(-0.1, 0.1, cout, dtype=jnp.float32)
        got = conv_transpose3d_block(x, wgt, b, s, p, op, out_dtype=jnp.float32)
        wref = jnp.transpose(_q(wgt)[:, :, ::-1, ::-1, ::-1], (2, 3, 4, 0, 1))
        ref = lax.conv_general_dilated(
            _q(x), wref, (1, 1, 1), [(k - 1 - p, k - 1 - p + op)] * 3,
            lhs_dilation=(s, s, s),
            dimension_numbers=("NDHWC", "DHWIO", "NDHWC")) + b
        assert got.shape == ref.shape
        assert float(jnp.max(jnp.abs(got - ref))) < 2e-2

    _check_convt(kc3, 8, 6, 7, 2, 3, 1, (4, 5, 6))   # stage 3..6 geometry
    _check_convt(kc4, 8, 10, 3, 2, 1, 1, (3, 4, 5))  # stage 2 geometry

    # --- full forward pass ----------------------------------------------------
    batch = 1
    kf1, kf2, kf3, kf4, kf5 = jax.random.split(kf, 5)
    feats = ResNet50Features(
        global_average_2048=jax.random.normal(kf1, (batch, 2048), jnp.float32),
        stage5_2048x8x8=jax.random.normal(kf2, (batch, 2048, 8, 8), jnp.float32),
        stage4_1024x16x16=jax.random.normal(kf3, (batch, 1024, 16, 16), jnp.float32),
        stage3_512x32x32=jax.random.normal(kf4, (batch, 512, 32, 32), jnp.float32),
        stage2_256x64x64=jax.random.normal(kf5, (batch, 256, 64, 64), jnp.float32),
    )
    vpm = jnp.tile(jnp.eye(4, dtype=jnp.float32)[None], (batch, 1, 1))
    vsl = jax.random.normal(kv, (batch, 3), jnp.float32)

    fwd = jax.jit(lambda prm, ft, m, loc:
                  reconstruction_decoder_forward(prm, cfg, ft, m, loc))
    out = jax.block_until_ready(fwd(params, feats, vpm, vsl))
    assert out.shape == (batch, cfg["num_output_channels"], d, h, w), out.shape
    assert bool(jnp.all(jnp.isfinite(out)))
    print("KERNEL_OK")
</pallas_src>

<mosaic_0001>
module attributes {stable_mosaic.version = 11 : i64} {
  func.func @kernel(%arg0: i32, %arg1: i32, %arg2: i32, %arg3: memref<1x8x9x8xbf16, #tpu.memory_space<vmem>>, %arg4: memref<27x8x16xbf16, #tpu.memory_space<vmem>>, %arg5: memref<1x16xf32, #tpu.memory_space<vmem>>, %arg6: memref<1x6x7x16xf32, #tpu.memory_space<vmem>>, %arg7: memref<42x16xf32, #tpu.memory_space<vmem>>) attributes {dimension_semantics = [#tpu.dimension_semantics<parallel>, #tpu.dimension_semantics<parallel>, #tpu.dimension_semantics<arbitrary>], iteration_bounds = array<i64: 1, 5, 3>, scalar_prefetch = 0 : i64, scratch_operands = 1 : i64, tpu.core_type = #tpu.core_type<tc>, window_params = [{transform_indices = @transform_0, window_bounds = array<i64: 1, 8, 9, 8>}, {pipeline_mode = #tpu.pipeline_mode<synchronous>, transform_indices = @transform_1, window_bounds = array<i64: 27, 8, 16>}, {pipeline_mode = #tpu.pipeline_mode<synchronous>, transform_indices = @transform_2, window_bounds = array<i64: 1, 16>}, {transform_indices = @transform_3, window_bounds = array<i64: 1, 6, 7, 16>}]} {
    %c0_i32 = arith.constant 0 : i32
    %0 = arith.cmpi eq, %arg2, %c0_i32 : i32
    %1 = arith.extui %0 : i1 to i32
    %c0_i32_0 = arith.constant 0 : i32
    %2 = arith.cmpi ne, %1, %c0_i32_0 : i32
    scf.if %2 {
      %c0_99 = arith.constant 0 : index
      %c0_100 = arith.constant 0 : index
      %116 = vector.load %arg5[%c0_99, %c0_100] : memref<1x16xf32, #tpu.memory_space<vmem>>, vector<1x16xf32>
      %117 = vector.shape_cast %116 : vector<1x16xf32> to vector<1x16xf32>
      %118 = vector.broadcast %117 : vector<1x16xf32> to vector<42x16xf32>
      %c0_101 = arith.constant 0 : index
      %c0_102 = arith.constant 0 : index
      %119 = vector.load %arg7[%c0_101, %c0_102] : memref<42x16xf32, #tpu.memory_space<vmem>>, vector<42x16xf32>
      tpu.vector_store %arg7[%c0_101, %c0_102], %118 {strides = array<i32>} : memref<42x16xf32, #tpu.memory_space<vmem>>, vector<42x16xf32>,
    } else {
    }
    %c0 = arith.constant 0 : index
    %c0_1 = arith.constant 0 : index
    %3 = vector.load %arg7[%c0, %c0_1] : memref<42x16xf32, #tpu.memory_space<vmem>>, vector<42x16xf32>
    %c0_2 = arith.constant 0 : index
    %c0_3 = arith.constant 0 : index
    %c0_4 = arith.constant 0 : index
    %c0_5 = arith.constant 0 : index
    %4 = vector.load %arg3[%c0_2, %c0_3, %c0_4, %c0_5] : memref<1x8x9x8xbf16, #tpu.memory_space<vmem>>, vector<1x6x7x8xbf16>
    %5 = vector.shape_cast %4 : vector<1x6x7x8xbf16> to vector<6x7x8xbf16>
    %6 = vector.shape_cast %5 : vector<6x7x8xbf16> to vector<42x8xbf16>
    %c3_i32 = arith.constant 3 : i32
    %7 = arith.muli %arg2, %c3_i32 : i32
    %c0_i32_6 = arith.constant 0 : i32
    %8 = arith.addi %7, %c0_i32_6 : i32
    %c3_i32_7 = arith.constant 3 : i32
    %9 = arith.muli %8, %c3_i32_7 : i32
    %c0_i32_8 = arith.constant 0 : i32
    %10 = arith.addi %9, %c0_i32_8 : i32
    %11 = arith.index_cast %10 : i32 to index
    %c0_9 = arith.constant 0 : index
    %c0_10 = arith.constant 0 : index
    %12 = vector.load %arg4[%11, %c0_9, %c0_10] : memref<27x8x16xbf16, #tpu.memory_space<vmem>>, vector<1x8x16xbf16>
    %13 = vector.shape_cast %12 : vector<1x8x16xbf16> to vector<8x16xbf16>
    %cst = arith.constant dense<0.000000e+00> : vector<42x16xf32>
    %14 = tpu.matmul %6, %13, %cst {dimension_numbers = #tpu.dot_dimension_numbers<[1], [0], [0], [1], [0, 0, 1, 1], [], []>} : vector<42x8xbf16>, vector<8x16xbf16>, vector<42x16xf32> -> vector<42x16xf32>
    %15 = arith.addf %3, %14 : vector<42x16xf32>
    %c0_11 = arith.constant 0 : index
    %c0_12 = arith.constant 0 : index
    %c1 = arith.constant 1 : index
    %c0_13 = arith.constant 0 : index
    %16 = vector.load %arg3[%c0_11, %c0_12, %c1, %c0_13] : memref<1x8x9x8xbf16, #tpu.memory_space<vmem>>, vector<1x6x7x8xbf16>
    %17 = vector.shape_cast %16 : vector<1x6x7x8xbf16> to vector<6x7x8xbf16>
    %18 = vector.shape_cast %17 : vector<6x7x8xbf16> to vector<42x8xbf16>
    %c3_i32_14 = arith.constant 3 : i32
    %19 = arith.muli %arg2, %c3_i32_14 : i32
    %c0_i32_15 = arith.constant 0 : i32
    %20 = arith.addi %19, %c0_i32_15 : i32
    %c3_i32_16 = arith.constant 3 : i32
    %21 = arith.muli %20, %c3_i32_16 : i32
    %c1_i32 = arith.constant 1 : i32
    %22 = arith.addi %21, %c1_i32 : i32
    %23 = arith.index_cast %22 : i32 to index
    %c0_17 = arith.constant 0 : index
    %c0_18 = arith.constant 0 : index
    %24 = vector.load %arg4[%23, %c0_17, %c0_18] : memref<27x8x16xbf16, #tpu.memory_space<vmem>>, vector<1x8x16xbf16>
    %25 = vector.shape_cast %24 : vector<1x8x16xbf16> to vector<8x16xbf16>
    %cst_19 = arith.constant dense<0.000000e+00> : vector<42x16xf32>
    %26 = tpu.matmul %18, %25, %cst_19 {dimension_numbers = #tpu.dot_dimension_numbers<[1], [0], [0], [1], [0, 0, 1, 1], [], []>} : vector<42x8xbf16>, vector<8x16xbf16>, vector<42x16xf32> -> vector<42x16xf32>
    %27 = arith.addf %15, %26 : vector<42x16xf32>
    %c0_20 = arith.constant 0 : index
    %c0_21 = arith.constant 0 : index
    %c2 = arith.constant 2 : index
    %c0_22 = arith.constant 0 : index
    %28 = vector.load %arg3[%c0_20, %c0_21, %c2, %c0_22] : memref<1x8x9x8xbf16, #tpu.memory_space<vmem>>, vector<1x6x7x8xbf16>
    %29 = vector.shape_cast %28 : vector<1x6x7x8xbf16> to vector<6x7x8xbf16>
    %30 = vector.shape_cast %29 : vector<6x7x8xbf16> to vector<42x8xbf16>
    %c3_i32_23 = arith.constant 3 : i32
    %31 = arith.muli %arg2, %c3_i32_23 : i32
    %c0_i32_24 = arith.constant 0 : i32
    %32 = arith.addi %31, %c0_i32_24 : i32
    %c3_i32_25 = arith.constant 3 : i32
    %33 = arith.muli %32, %c3_i32_25 : i32
    %c2_i32 = arith.constant 2 : i32
    %34 = arith.addi %33, %c2_i32 : i32
    %35 = arith.index_cast %34 : i32 to index
    %c0_26 = arith.constant 0 : index
    %c0_27 = arith.constant 0 : index
    %36 = vector.load %arg4[%35, %c0_26, %c0_27] : memref<27x8x16xbf16, #tpu.memory_space<vmem>>, vector<1x8x16xbf16>
    %37 = vector.shape_cast %36 : vector<1x8x16xbf16> to vector<8x16xbf16>
    %cst_28 = arith.constant dense<0.000000e+00> : vector<42x16xf32>
    %38 = tpu.matmul %30, %37, %cst_28 {dimension_numbers = #tpu.dot_dimension_numbers<[1], [0], [0], [1], [0, 0, 1, 1], [], []>} : vector<42x8xbf16>, vector<8x16xbf16>, vector<42x16xf32> -> vector<42x16xf32>
    %39 = arith.addf %27, %38 : vector<42x16xf32>
    %c0_29 = arith.constant 0 : index
    %c1_30 = arith.constant 1 : index
    %c0_31 = arith.constant 0 : index
    %c0_32 = arith.constant 0 : index
    %40 = vector.load %arg3[%c0_29, %c1_30, %c0_31, %c0_32] : memref<1x8x9x8xbf16, #tpu.memory_space<vmem>>, vector<1x6x7x8xbf16>
    %41 = vector.shape_cast %40 : vector<1x6x7x8xbf16> to vector<6x7x8xbf16>
    %42 = vector.shape_cast %41 : vector<6x7x8xbf16> to vector<42x8xbf16>
    %c3_i32_33 = arith.constant 3 : i32
    %43 = arith.muli %arg2, %c3_i32_33 : i32
    %c1_i32_34 = arith.constant 1 : i32
    %44 = arith.addi %43, %c1_i32_34 : i32
    %c3_i32_35 = arith.constant 3 : i32
    %45 = arith.muli %44, %c3_i32_35 : i32
    %c0_i32_36 = arith.constant 0 : i32
    %46 = arith.addi %45, %c0_i32_36 : i32
    %47 = arith.index_cast %46 : i32 to index
    %c0_37 = arith.constant 0 : index
    %c0_38 = arith.constant 0 : index
    %48 = vector.load %arg4[%47, %c0_37, %c0_38] : memref<27x8x16xbf16, #tpu.memory_space<vmem>>, vector<1x8x16xbf16>
    %49 = vector.shape_cast %48 : vector<1x8x16xbf16> to vector<8x16xbf16>
    %cst_39 = arith.constant dense<0.000000e+00> : vector<42x16xf32>
    %50 = tpu.matmul %42, %49, %cst_39 {dimension_numbers = #tpu.dot_dimension_numbers<[1], [0], [0], [1], [0, 0, 1, 1], [], []>} : vector<42x8xbf16>, vector<8x16xbf16>, vector<42x16xf32> -> vector<42x16xf32>
    %51 = arith.addf %39, %50 : vector<42x16xf32>
    %c0_40 = arith.constant 0 : index
    %c1_41 = arith.constant 1 : index
    %c1_42 = arith.constant 1 : index
    %c0_43 = arith.constant 0 : index
    %52 = vector.load %arg3[%c0_40, %c1_41, %c1_42, %c0_43] : memref<1x8x9x8xbf16, #tpu.memory_space<vmem>>, vector<1x6x7x8xbf16>
    %53 = vector.shape_cast %52 : vector<1x6x7x8xbf16> to vector<6x7x8xbf16>
    %54 = vector.shape_cast %53 : vector<6x7x8xbf16> to vector<42x8xbf16>
    %c3_i32_44 = arith.constant 3 : i32
    %55 = arith.muli %arg2, %c3_i32_44 : i32
    %c1_i32_45 = arith.constant 1 : i32
    %56 = arith.addi %55, %c1_i32_45 : i32
    %c3_i32_46 = arith.constant 3 : i32
    %57 = arith.muli %56, %c3_i32_46 : i32
    %c1_i32_47 = arith.constant 1 : i32
    %58 = arith.addi %57, %c1_i32_47 : i32
    %59 = arith.index_cast %58 : i32 to index
    %c0_48 = arith.constant 0 : index
    %c0_49 = arith.constant 0 : index
    %60 = vector.load %arg4[%59, %c0_48, %c0_49] : memref<27x8x16xbf16, #tpu.memory_space<vmem>>, vector<1x8x16xbf16>
    %61 = vector.shape_cast %60 : vector<1x8x16xbf16> to vector<8x16xbf16>
    %cst_50 = arith.constant dense<0.000000e+00> : vector<42x16xf32>
    %62 = tpu.matmul %54, %61, %cst_50 {dimension_numbers = #tpu.dot_dimension_numbers<[1], [0], [0], [1], [0, 0, 1, 1], [], []>} : vector<42x8xbf16>, vector<8x16xbf16>, vector<42x16xf32> -> vector<42x16xf32>
    %63 = arith.addf %51, %62 : vector<42x16xf32>
    %c0_51 = arith.constant 0 : index
    %c1_52 = arith.constant 1 : index
    %c2_53 = arith.constant 2 : index
    %c0_54 = arith.constant 0 : index
    %64 = vector.load %arg3[%c0_51, %c1_52, %c2_53, %c0_54] : memref<1x8x9x8xbf16, #tpu.memory_space<vmem>>, vector<1x6x7x8xbf16>
    %65 = vector.shape_cast %64 : vector<1x6x7x8xbf16> to vector<6x7x8xbf16>
    %66 = vector.shape_cast %65 : vector<6x7x8xbf16> to vector<42x8xbf16>
    %c3_i32_55 = arith.constant 3 : i32
    %67 = arith.muli %arg2, %c3_i32_55 : i32
    %c1_i32_56 = arith.constant 1 : i32
    %68 = arith.addi %67, %c1_i32_56 : i32
    %c3_i32_57 = arith.constant 3 : i32
    %69 = arith.muli %68, %c3_i32_57 : i32
    %c2_i32_58 = arith.constant 2 : i32
    %70 = arith.addi %69, %c2_i32_58 : i32
    %71 = arith.index_cast %70 : i32 to index
    %c0_59 = arith.constant 0 : index
    %c0_60 = arith.constant 0 : index
    %72 = vector.load %arg4[%71, %c0_59, %c0_60] : memref<27x8x16xbf16, #tpu.memory_space<vmem>>, vector<1x8x16xbf16>
    %73 = vector.shape_cast %72 : vector<1x8x16xbf16> to vector<8x16xbf16>
    %cst_61 = arith.constant dense<0.000000e+00> : vector<42x16xf32>
    %74 = tpu.matmul %66, %73, %cst_61 {dimension_numbers = #tpu.dot_dimension_numbers<[1], [0], [0], [1], [0, 0, 1, 1], [], []>} : vector<42x8xbf16>, vector<8x16xbf16>, vector<42x16xf32> -> vector<42x16xf32>
    %75 = arith.addf %63, %74 : vector<42x16xf32>
    %c0_62 = arith.constant 0 : index
    %c2_63 = arith.constant 2 : index
    %c0_64 = arith.constant 0 : index
    %c0_65 = arith.constant 0 : index
    %76 = vector.load %arg3[%c0_62, %c2_63, %c0_64, %c0_65] : memref<1x8x9x8xbf16, #tpu.memory_space<vmem>>, vector<1x6x7x8xbf16>
    %77 = vector.shape_cast %76 : vector<1x6x7x8xbf16> to vector<6x7x8xbf16>
    %78 = vector.shape_cast %77 : vector<6x7x8xbf16> to vector<42x8xbf16>
    %c3_i32_66 = arith.constant 3 : i32
    %79 = arith.muli %arg2, %c3_i32_66 : i32
    %c2_i32_67 = arith.constant 2 : i32
    %80 = arith.addi %79, %c2_i32_67 : i32
    %c3_i32_68 = arith.constant 3 : i32
    %81 = arith.muli %80, %c3_i32_68 : i32
    %c0_i32_69 = arith.constant 0 : i32
    %82 = arith.addi %81, %c0_i32_69 : i32
    %83 = arith.index_cast %82 : i32 to index
    %c0_70 = arith.constant 0 : index
    %c0_71 = arith.constant 0 : index
    %84 = vector.load %arg4[%83, %c0_70, %c0_71] : memref<27x8x16xbf16, #tpu.memory_space<vmem>>, vector<1x8x16xbf16>
    %85 = vector.shape_cast %84 : vector<1x8x16xbf16> to vector<8x16xbf16>
    %cst_72 = arith.constant dense<0.000000e+00> : vector<42x16xf32>
    %86 = tpu.matmul %78, %85, %cst_72 {dimension_numbers = #tpu.dot_dimension_numbers<[1], [0], [0], [1], [0, 0, 1, 1], [], []>} : vector<42x8xbf16>, vector<8x16xbf16>, vector<42x16xf32> -> vector<42x16xf32>
    %87 = arith.addf %75, %86 : vector<42x16xf32>
    %c0_73 = arith.constant 0 : index
    %c2_74 = arith.constant 2 : index
    %c1_75 = arith.constant 1 : index
    %c0_76 = arith.constant 0 : index
    %88 = vector.load %arg3[%c0_73, %c2_74, %c1_75, %c0_76] : memref<1x8x9x8xbf16, #tpu.memory_space<vmem>>, vector<1x6x7x8xbf16>
    %89 = vector.shape_cast %88 : vector<1x6x7x8xbf16> to vector<6x7x8xbf16>
    %90 = vector.shape_cast %89 : vector<6x7x8xbf16> to vector<42x8xbf16>
    %c3_i32_77 = arith.constant 3 : i32
    %91 = arith.muli %arg2, %c3_i32_77 : i32
    %c2_i32_78 = arith.constant 2 : i32
    %92 = arith.addi %91, %c2_i32_78 : i32
    %c3_i32_79 = arith.constant 3 : i32
    %93 = arith.muli %92, %c3_i32_79 : i32
    %c1_i32_80 = arith.constant 1 : i32
    %94 = arith.addi %93, %c1_i32_80 : i32
    %95 = arith.index_cast %94 : i32 to index
    %c0_81 = arith.constant 0 : index
    %c0_82 = arith.constant 0 : index
    %96 = vector.load %arg4[%95, %c0_81, %c0_82] : memref<27x8x16xbf16, #tpu.memory_space<vmem>>, vector<1x8x16xbf16>
    %97 = vector.shape_cast %96 : vector<1x8x16xbf16> to vector<8x16xbf16>
    %cst_83 = arith.constant dense<0.000000e+00> : vector<42x16xf32>
    %98 = tpu.matmul %90, %97, %cst_83 {dimension_numbers = #tpu.dot_dimension_numbers<[1], [0], [0], [1], [0, 0, 1, 1], [], []>} : vector<42x8xbf16>, vector<8x16xbf16>, vector<42x16xf32> -> vector<42x16xf32>
    %99 = arith.addf %87, %98 : vector<42x16xf32>
    %c0_84 = arith.constant 0 : index
    %c2_85 = arith.constant 2 : index
    %c2_86 = arith.constant 2 : index
    %c0_87 = arith.constant 0 : index
    %100 = vector.load %arg3[%c0_84, %c2_85, %c2_86, %c0_87] : memref<1x8x9x8xbf16, #tpu.memory_space<vmem>>, vector<1x6x7x8xbf16>
    %101 = vector.shape_cast %100 : vector<1x6x7x8xbf16> to vector<6x7x8xbf16>
    %102 = vector.shape_cast %101 : vector<6x7x8xbf16> to vector<42x8xbf16>
    %c3_i32_88 = arith.constant 3 : i32
    %103 = arith.muli %arg2, %c3_i32_88 : i32
    %c2_i32_89 = arith.constant 2 : i32
    %104 = arith.addi %103, %c2_i32_89 : i32
    %c3_i32_90 = arith.constant 3 : i32
    %105 = arith.muli %104, %c3_i32_90 : i32
    %c2_i32_91 = arith.constant 2 : i32
    %106 = arith.addi %105, %c2_i32_91 : i32
    %107 = arith.index_cast %106 : i32 to index
    %c0_92 = arith.constant 0 : index
    %c0_93 = arith.constant 0 : index
    %108 = vector.load %arg4[%107, %c0_92, %c0_93] : memref<27x8x16xbf16, #tpu.memory_space<vmem>>, vector<1x8x16xbf16>
    %109 = vector.shape_cast %108 : vector<1x8x16xbf16> to vector<8x16xbf16>
    %cst_94 = arith.constant dense<0.000000e+00> : vector<42x16xf32>
    %110 = tpu.matmul %102, %109, %cst_94 {dimension_numbers = #tpu.dot_dimension_numbers<[1], [0], [0], [1], [0, 0, 1, 1], [], []>} : vector<42x8xbf16>, vector<8x16xbf16>, vector<42x16xf32> -> vector<42x16xf32>
    %111 = arith.addf %99, %110 : vector<42x16xf32>
    %c0_95 = arith.constant 0 : index
    %c0_96 = arith.constant 0 : index
    %112 = vector.load %arg7[%c0_95, %c0_96] : memref<42x16xf32, #tpu.memory_space<vmem>>, vector<42x16xf32>
    tpu.vector_store %arg7[%c0_95, %c0_96], %111 {strides = array<i32>} : memref<42x16xf32, #tpu.memory_space<vmem>>, vector<42x16xf32>,
    %c2_i32_97 = arith.constant 2 : i32
    %113 = arith.cmpi eq, %arg2, %c2_i32_97 : i32
    %114 = arith.extui %113 : i1 to i32
    %c0_i32_98 = arith.constant 0 : i32
    %115 = arith.cmpi ne, %114, %c0_i32_98 : i32
    scf.if %115 {
      %c0_99 = arith.constant 0 : index
      %c0_100 = arith.constant 0 : index
      %116 = vector.load %arg7[%c0_99, %c0_100] : memref<42x16xf32, #tpu.memory_space<vmem>>, vector<42x16xf32>
      %117 = vector.shape_cast %116 : vector<42x16xf32> to vector<1x6x7x16xf32>
      %c0_101 = arith.constant 0 : index
      %c0_102 = arith.constant 0 : index
      %c0_103 = arith.constant 0 : index
      %c0_104 = arith.constant 0 : index
      %118 = vector.load %arg6[%c0_101, %c0_102, %c0_103, %c0_104] : memref<1x6x7x16xf32, #tpu.memory_space<vmem>>, vector<1x6x7x16xf32>
      tpu.vector_store %arg6[%c0_101, %c0_102, %c0_103, %c0_104], %117 {strides = array<i32>} : memref<1x6x7x16xf32, #tpu.memory_space<vmem>>, vector<1x6x7x16xf32>,
    } else {
    }
    return
  }
  func.func @transform_0(%arg0: i32, %arg1: i32, %arg2: i32) -> (i32, i32, i32, i32) {
    %c7_i32 = arith.constant 7 : i32
    %0 = arith.muli %arg0, %c7_i32 : i32
    %1 = arith.addi %0, %arg1 : i32
    %2 = arith.addi %1, %arg2 : i32
    %c0_i32 = arith.constant 0 : i32
    %c0_i32_0 = arith.constant 0 : i32
    %c0_i32_1 = arith.constant 0 : i32
    %c0_i32_2 = arith.constant 0 : i32
    return %2, %c0_i32, %c0_i32_0, %c0_i32_1 : i32, i32, i32, i32
  }
  func.func @transform_1(%arg0: i32, %arg1: i32, %arg2: i32) -> (i32, i32, i32) {
    %c0_i32 = arith.constant 0 : i32
    %c0_i32_0 = arith.constant 0 : i32
    %c0_i32_1 = arith.constant 0 : i32
    %c0_i32_2 = arith.constant 0 : i32
    return %c0_i32, %c0_i32_0, %c0_i32_1 : i32, i32, i32
  }
  func.func @transform_2(%arg0: i32, %arg1: i32, %arg2: i32) -> (i32, i32) {
    %c0_i32 = arith.constant 0 : i32
    %c0_i32_0 = arith.constant 0 : i32
    %c0_i32_1 = arith.constant 0 : i32
    return %c0_i32, %c0_i32_0 : i32, i32
  }
  func.func @transform_3(%arg0: i32, %arg1: i32, %arg2: i32) -> (i32, i32, i32, i32) {
    %c5_i32 = arith.constant 5 : i32
    %0 = arith.muli %arg0, %c5_i32 : i32
    %1 = arith.addi %0, %arg1 : i32
    %c0_i32 = arith.constant 0 : i32
    %c0_i32_0 = arith.constant 0 : i32
    %c0_i32_1 = arith.constant 0 : i32
    %c0_i32_2 = arith.constant 0 : i32
    return %1, %c0_i32, %c0_i32_0, %c0_i32_1 : i32, i32, i32, i32
  }
}

</mosaic_0001>

<llo_original>
// kernel: tpu_custom_call.1
$region0: #{tpu_custom_call.1}
  #allocation0 [shape = 'u32[]', space=smem, size = 0x4, offset = 0x4, fixed_abs, tag = 'smem constant byte address 0x4 - core index']
  #allocation1 [shape = 'u32[144,128]{1,0:T(1,128)}', space=vmem, size = 0x12000, scoped, tag = 'internal scratch']
  #allocation2 [shape = 'f32[42,16]{1,0:T(8,128)}', space=vmem, size = 0x6000, scoped, tag = 'scratch operand']
  %s0 = inlined_call_operand.vmem [shape: bf16[7,8,9,8], index: 0, kind: input, shape index: {}]
  %s1 = inlined_call_operand.vmem [shape: bf16[27,8,16], index: 1, kind: input, shape index: {}]
  %s2 = inlined_call_operand.vmem [shape: f32[1,16], index: 2, kind: input, shape index: {}]
  %s3 = inlined_call_operand.hbm [shape: f32[5,6,7,16], index: 3, kind: output, shape index: {}]
  %s4 = sld [smem:[#allocation0]]
  $region53: #{tpu_custom_call.1} parent=0
    _
  %s6 = ssub.s32 1, %s4
  %s7 = scalar_select 0, %s6, %s4
  $region1: #{tpu_custom_call.1} parent=0
    #allocation3 [shape = 'u8[49152]{0}', space=vmem, size = 0xc000, scoped, tag = 'output window, operand 0']
    #allocation4 [shape = 's32[2]{0}', space=sflag, size = 0x8, scoped, tag = 'scoped memory for tpu_custom_call.1']
    %8 = vsyncpa [#allocation4], 0
    %s9 = scalar_lea.sflag [#allocation4], 1
    %10 = vsyncpa %s9, 0
    loop: start=0, step=1, limit=17
    $region2: #{tpu_custom_call.1} parent=1 // loop_pre_header
      _
    $region3: #{tpu_custom_call.1} parent=1 // loop_header
      %s12 = sphi 0, %s16
      %p13 = scmp.ge.s32.totalorder %s12, 17
      %s19 = sphi 0, %s38
      %s20 = sphi 0, %s34
      %s21 = sphi 0, %s30
      %s22 = sphi 0, %s19
      %s23 = sphi 0, %s20
      %s24 = sphi 0, %s21
      %s25 = sphi 0, %s22
      %s26 = sphi 0, %s23
      %s27 = sphi 0, %s24
      %s47 = sphi 0, %s49
      %s50 = sphi 0, %s47
      %s51 = sphi 0, %s50
      %s67 = sphi 0, %s51
      %s71 = sphi 0, %s71
      %s73 = sphi 0, %s71
      %s74 = sphi 0, %s73
      %s88 = sphi 0, %s74
      %s92 = sphi 0, %s92
      %s94 = sphi 0, %s92
      %s95 = sphi 0, %s94
      %s109 = sphi 0, %s95
      %s119 = sphi 0, %s121
      %s122 = sphi 0, %s119
      %s123 = sphi 0, %s122
      %s139 = sphi 0, %s123
    $region4: #{tpu_custom_call.1} parent=1 // loop_header_branch
      %15 = sbr.rel (%p13) target = $region8
    $region5: #{tpu_custom_call.1} parent=1 // loop_body
      %s17 = ssub.s32 %s12, 1
      %s18 = ssub.s32 %s12, 2
      %s28 = sadd.s32 1, %s21
      %p29 = scmp.ge.s32.totalorder %s28, 3
      %s30 = scalar_select %p29, 0, %s28
      %s31 = sadd.s32 1, %s20
      %s32 = scalar_select %p29, %s31, %s20
      %p33 = scmp.ge.s32.totalorder %s32, 5
      %s34 = scalar_select %p33, 0, %s32
      %s35 = sadd.s32 1, %s19
      %s36 = scalar_select %p33, %s35, %s19
      %p37 = scmp.ge.s32.totalorder %s36, 1
      %s38 = scalar_select %p37, 0, %s36
      %s39 = smul.u32 %s19, 7
      %s40 = sadd.s32 %s39, %s20
      %s41 = sadd.s32 %s40, %s21
      %s42 = smul.u32 %s38, 7
      %s43 = sadd.s32 %s42, %s34
      %s44 = sadd.s32 %s43, %s30
      %s45 = ssub.s32 %s41, %s44
      %p46 = scmp.eq.s32.totalorder %s45, 0
      %s48 = sadd.s32 %s47, 1
      %s49 = scalar_select %p46, %s47, %s48
      %p52 = pneg %p46
      %p53 = scmp.eq.s32.totalorder %s12, 14
      %p54 = por %p52, %p53
      %p55 = scmp.ne.s32.totalorder %s47, %s50
      %p56 = scmp.eq.s32.totalorder %s12, 0
      %p57 = por %p55, %p56
      %p58 = scmp.ne.s32.totalorder %s47, %s50
      %p59 = scmp.eq.s32.totalorder %s17, 14
      %p60 = por %p58, %p59
      %p61 = scmp.ne.s32.totalorder %s50, %s51
      %p62 = scmp.eq.s32.totalorder %s17, 0
      %p63 = por %p61, %p62
      %p64 = scmp.ne.s32.totalorder %s50, %s51
      %p65 = scmp.eq.s32.totalorder %s18, 14
      %p66 = por %p64, %p65
      %p68 = scmp.ne.s32.totalorder %s51, %s67
      %p69 = scmp.eq.s32.totalorder %s18, 0
      %p70 = por %p68, %p69
      %s72 = sadd.s32 %s71, 1
      %p75 = scmp.eq.s32.totalorder %s12, 14
      %p76 = scmp.ne.s32.totalorder %s71, %s73
      %p77 = scmp.eq.s32.totalorder %s12, 0
      %p78 = por %p76, %p77
      %p79 = scmp.ne.s32.totalorder %s71, %s73
      %p80 = scmp.eq.s32.totalorder %s17, 14
      %p81 = por %p79, %p80
      %p82 = scmp.ne.s32.totalorder %s73, %s74
      %p83 = scmp.eq.s32.totalorder %s17, 0
      %p84 = por %p82, %p83
      %p85 = scmp.ne.s32.totalorder %s73, %s74
      %p86 = scmp.eq.s32.totalorder %s18, 14
      %p87 = por %p85, %p86
      %p89 = scmp.ne.s32.totalorder %s74, %s88
      %p90 = scmp.eq.s32.totalorder %s18, 0
      %p91 = por %p89, %p90
      %s93 = sadd.s32 %s92, 1
      %p96 = scmp.eq.s32.totalorder %s12, 14
      %p97 = scmp.ne.s32.totalorder %s92, %s94
      %p98 = scmp.eq.s32.totalorder %s12, 0
      %p99 = por %p97, %p98
      %p100 = scmp.ne.s32.totalorder %s92, %s94
      %p101 = scmp.eq.s32.totalorder %s17, 14
      %p102 = por %p100, %p101
      %p103 = scmp.ne.s32.totalorder %s94, %s95
      %p104 = scmp.eq.s32.totalorder %s17, 0
      %p105 = por %p103, %p104
      %p106 = scmp.ne.s32.totalorder %s94, %s95
      %p107 = scmp.eq.s32.totalorder %s18, 14
      %p108 = por %p106, %p107
      %p110 = scmp.ne.s32.totalorder %s95, %s109
      %p111 = scmp.eq.s32.totalorder %s18, 0
      %p112 = por %p110, %p111
      %s113 = smul.u32 %s19, 5
      %s114 = sadd.s32 %s113, %s20
      %s115 = smul.u32 %s38, 5
      %s116 = sadd.s32 %s115, %s34
      %s117 = ssub.s32 %s114, %s116
      %p118 = scmp.eq.s32.totalorder %s117, 0
      %s120 = sadd.s32 %s119, 1
      %s121 = scalar_select %p118, %s119, %s120
      %p124 = pneg %p118
      %p125 = scmp.eq.s32.totalorder %s12, 14
      %p126 = por %p124, %p125
      %p127 = scmp.ne.s32.totalorder %s119, %s122
      %p128 = scmp.eq.s32.totalorder %s12, 0
      %p129 = por %p127, %p128
      %p130 = scmp.ne.s32.totalorder %s119, %s122
      %p131 = scmp.eq.s32.totalorder %s17, 14
      %p132 = por %p130, %p131
      %p133 = scmp.ne.s32.totalorder %s122, %s123
      %p134 = scmp.eq.s32.totalorder %s17, 0
      %p135 = por %p133, %p134
      %p136 = scmp.ne.s32.totalorder %s122, %s123
      %p137 = scmp.eq.s32.totalorder %s18, 14
      %p138 = por %p136, %p137
      %p140 = scmp.ne.s32.totalorder %s123, %s139
      %p141 = scmp.eq.s32.totalorder %s18, 0
      %p142 = por %p140, %p141
      %p143 = scmp.le.s32.totalorder 1, %s12
      %p144 = scmp.lt.s32.totalorder %s12, 16
      %p145 = pnand %p143, %p144
      %p146 = pneg %p145
      // Predicated region
      $region9: #{tpu_custom_call.1} parent=5 // pred_check
        _
      $region10: #{tpu_custom_call.1} parent=5 // pred_check_branch
        %148 = sbr.rel (%p145) target = $region12
      $region11: #{tpu_custom_call.1} parent=5 // pred_region
        %s149 = ssub.s32 %s12, 1
        // Predicated region
        $region13: #{tpu_custom_call.1} parent=11 // pred_check
          %p150 = pneg %p84
        $region14: #{tpu_custom_call.1} parent=11 // pred_check_branch
          %152 = sbr.rel (%p150) target = $region16
        $region15: #{tpu_custom_call.1} parent=11 // pred_region
          _
        $region16: #{tpu_custom_call.1} parent=11 // pred_fallthru
          _
        // Predicated region
        $region17: #{tpu_custom_call.1} parent=11 // pred_check
          %p153 = pneg %p105
        $region18: #{tpu_custom_call.1} parent=11 // pred_check_branch
          %155 = sbr.rel (%p153) target = $region20
        $region19: #{tpu_custom_call.1} parent=11 // pred_region
          _
        $region20: #{tpu_custom_call.1} parent=11 // pred_fallthru
          _
      $region12: #{tpu_custom_call.1} parent=5 // pred_fallthru
        _
      %p156 = scmp.lt.s32.totalorder %s12, 15
      // Predicated region
      $region21: #{tpu_custom_call.1} parent=5 // pred_check
        %p157 = pneg %p156
      $region22: #{tpu_custom_call.1} parent=5 // pred_check_branch
        %159 = sbr.rel (%p157) target = $region24
      $region23: #{tpu_custom_call.1} parent=5 // pred_region
        // Predicated region
        $region25: #{tpu_custom_call.1} parent=23 // pred_check
          %p160 = pneg %p57
        $region26: #{tpu_custom_call.1} parent=23 // pred_check_branch
          %162 = sbr.rel (%p160) target = $region28
        $region27: #{tpu_custom_call.1} parent=23 // pred_region
          %s163 = smul.u32 %s19, 7
          %s164 = sadd.s32 %s163, %s20
          %s165 = sadd.s32 %s164, %s21
          %p166 = scmp.lt.s32.totalorder %s165, 6
          %s167 = scalar_select %p166, %s165, 6
          %s168 = smul.addr %s167, 16
          %s169 = smul.addr %s168, 4
          %s170 = scalar_lea.vmem %s0, %s169
          %s171 = smul.u32 %s19, 7
          %s172 = sadd.s32 %s171, %s20
          %s173 = sadd.s32 %s172, %s21
        $region28: #{tpu_custom_call.1} parent=23 // pred_fallthru
          _
      $region24: #{tpu_custom_call.1} parent=5 // pred_fallthru
        _
      %p174 = scmp.le.s32.totalorder 1, %s12
      %p175 = scmp.lt.s32.totalorder %s12, 16
      %p176 = pnand %p174, %p175
      %p177 = pneg %p176
      // Predicated region
      $region29: #{tpu_custom_call.1} parent=5 // pred_check
        _
      $region30: #{tpu_custom_call.1} parent=5 // pred_check_branch
        %179 = sbr.rel (%p176) target = $region32
      $region31: #{tpu_custom_call.1} parent=5 // pred_region
        %s180 = ssub.s32 %s12, 1
        %s181 = smul.u32 %s22, 7
        %s182 = sadd.s32 %s181, %s23
        %s183 = sadd.s32 %s182, %s24
        %p184 = scmp.lt.s32.totalorder %s183, 6
        %s185 = scalar_select %p184, %s183, 6
        %s186 = smul.addr %s185, 16
        %s187 = smul.addr %s186, 4
        %s188 = scalar_lea.vmem %s0, %s187
        %p189 = pneg %p63
        %p190 = pneg %p60
        %p191 = pneg %p84
        %p192 = pneg %p81
        %p193 = pneg %p105
        %p194 = pneg %p102
        %p195 = pneg %p135
        %p196 = pneg %p132
        %s197 = sand.u32 %s122, 1
        %s198 = scalar_lea.sflag [#allocation4], %s197
        %s199 = sand.u32 %s122, 1
        %s200 = smul.addr %s199, 48
        %s201 = scalar_lea.vmem [#allocation3], %s200
        %s202 = smul.u32 %s22, 7
        %s203 = sadd.s32 %s202, %s23
        %s204 = sadd.s32 %s203, %s24
        %p205 = scmp.lt.s32.totalorder %s204, 6
        %s206 = scalar_select %p205, %s204, 6
        %s207 = smul.addr %s206, 16
        %s208 = smul.addr %s207, 4
        %s209 = scalar_lea.vmem %s0, %s208
        %s210 = smul.u32 %s22, 7
        %s211 = sadd.s32 %s210, %s23
        %s212 = sadd.s32 %s211, %s24
        %s213 = smul.u32 %s22, 5
        %s214 = sadd.s32 %s213, %s23
        %p216 = scmp.eq.s32.totalorder %s24, 0
        // Predicated region
        $region33: #{tpu_custom_call.1} parent=31 // pred_check
          %p217 = pneg %p216
        $region34: #{tpu_custom_call.1} parent=31 // pred_check_branch
          %219 = sbr.rel (%p217) target = $region36
        $region35: #{tpu_custom_call.1} parent=31 // pred_region
          %v220 = vld [vmem:[%s2] sm:$0x1]
          %v222 = vlaneseq
          %v223 = vshrl.u32 %v222, 7
          %v224 = vsub.s32 0, %v223
          %v225 = vrot.slane %v220, %v224
          %vm227 = vcmask 130048
          %228 = vst.msk [vmem:[#allocation2] sm:$0xff] %vm227, %v225
          %229 = vst.msk [vmem:[#allocation2 + $0x8] sm:$0xff] %vm227, %v225
          %230 = vst.msk [vmem:[#allocation2 + $0x10] sm:$0xff] %vm227, %v225
          %231 = vst.msk [vmem:[#allocation2 + $0x18] sm:$0xff] %vm227, %v225
          %232 = vst.msk [vmem:[#allocation2 + $0x20] sm:$0xff] %vm227, %v225
          %vm233 = vcmask 123904
          %234 = vst.msk [vmem:[#allocation2 + $0x28] sm:$0x3] %vm233, %v225
        $region36: #{tpu_custom_call.1} parent=31 // pred_fallthru
          _
        %v235 = vld [vmem:[#allocation2] sm:$0xff]
        %v236 = vld [vmem:[#allocation2 + $0x8] sm:$0xff]
        %v237 = vld [vmem:[#allocation2 + $0x10] sm:$0xff]
        %v238 = vld [vmem:[#allocation2 + $0x18] sm:$0xff]
        %v239 = vld [vmem:[#allocation2 + $0x20] sm:$0xff]
        %v240 = vld [vmem:[#allocation2 + $0x28] sm:$0x3]
        %v241 = vld [vmem:[%s209] sm:$0xf]
        %v242 = vld [vmem:[%s209 + $0x8] sm:$0xf]
        %v243 = vld [vmem:[%s209 + $0x10] sm:$0xf]
        %v244 = vld [vmem:[%s209 + $0x18] sm:$0xf]
        %v245 = vld [vmem:[%s209 + $0x20] sm:$0xf]
        %v246 = vld [vmem:[%s209 + $0x28] sm:$0xf]
        %v254 = vunpack.c.l.s4 1966171168
        %v255 = vunpack.c.0.s8 %v254
        %v256 = vlaneseq
        %v257 = vshrl.u32 %v256, 7
        %v258 = vsub.s32 %v255, %v257
        %v259 = vrot.slane %v241, %v258
        %v260 = vcombine.high %v259, %v259
        %v262 = vunpack.c.l.s4 1966171168
        %v263 = vunpack.c.0.s8 %v262
        %v264 = vlaneseq
        %v265 = vshrl.u32 %v264, 7
        %v266 = vsub.s32 %v263, %v265
        %v267 = vrot.slane %v259, %v266
        %v269 = vunpack.c.l.s4 1966171168
        %v270 = vunpack.c.0.s8 %v269
        %v271 = vlaneseq
        %v272 = vshrl.u32 %v271, 7
        %v273 = vsub.s32 %v270, %v272
        %v274 = vrot.slane %v260, %v273
        %v275 = vcombine.high %v267, %v267
        %v276 = vcombine.high %v274, %v274
        %v278 = vunpack.c.l.s4 1966171168
        %v279 = vunpack.c.0.s8 %v278
        %v280 = vlaneseq
        %v281 = vshrl.u32 %v280, 7
        %v282 = vsub.s32 %v279, %v281
        %v283 = vrot.slane %v242, %v282
        %v284 = vcombine.high %v283, %v283
        %v286 = vunpack.c.l.s4 1966171168
        %v287 = vunpack.c.0.s8 %v286
        %v288 = vlaneseq
        %v289 = vshrl.u32 %v288, 7
        %v290 = vsub.s32 %v287, %v289
        %v291 = vrot.slane %v283, %v290
        %v293 = vunpack.c.l.s4 1966171168
        %v294 = vunpack.c.0.s8 %v293
        %v295 = vlaneseq
        %v296 = vshrl.u32 %v295, 7
        %v297 = vsub.s32 %v294, %v296
        %v298 = vrot.slane %v284, %v297
        %v299 = vcombine.high %v291, %v291
        %v300 = vcombine.high %v298, %v298
        %v302 = vunpack.c.l.s4 1966171168
        %v303 = vunpack.c.0.s8 %v302
        %v304 = vlaneseq
        %v305 = vshrl.u32 %v304, 7
        %v306 = vsub.s32 %v303, %v305
        %v307 = vrot.slane %v243, %v306
        %v308 = vcombine.high %v307, %v307
        %v310 = vunpack.c.l.s4 1966171168
        %v311 = vunpack.c.0.s8 %v310
        %v312 = vlaneseq
        %v313 = vshrl.u32 %v312, 7
        %v314 = vsub.s32 %v311, %v313
        %v315 = vrot.slane %v307, %v314
        %v317 = vunpack.c.l.s4 1966171168
        %v318 = vunpack.c.0.s8 %v317
        %v319 = vlaneseq
        %v320 = vshrl.u32 %v319, 7
        %v321 = vsub.s32 %v318, %v320
        %v322 = vrot.slane %v308, %v321
        %v323 = vcombine.high %v315, %v315
        %v324 = vcombine.high %v322, %v322
        %v326 = vunpack.c.l.s4 1966171168
        %v327 = vunpack.c.0.s8 %v326
        %v328 = vlaneseq
        %v329 = vshrl.u32 %v328, 7
        %v330 = vsub.s32 %v327, %v329
        %v331 = vrot.slane %v244, %v330
        %v332 = vcombine.high %v331, %v331
        %v334 = vunpack.c.l.s4 1966171168
        %v335 = vunpack.c.0.s8 %v334
        %v336 = vlaneseq
        %v337 = vshrl.u32 %v336, 7
        %v338 = vsub.s32 %v335, %v337
        %v339 = vrot.slane %v331, %v338
        %v341 = vunpack.c.l.s4 1966171168
        %v342 = vunpack.c.0.s8 %v341
        %v343 = vlaneseq
        %v344 = vshrl.u32 %v343, 7
        %v345 = vsub.s32 %v342, %v344
        %v346 = vrot.slane %v332, %v345
        %v347 = vcombine.high %v339, %v339
        %v348 = vcombine.high %v346, %v346
        %v350 = vunpack.c.l.s4 1966171168
        %v351 = vunpack.c.0.s8 %v350
        %v352 = vlaneseq
        %v353 = vshrl.u32 %v352, 7
        %v354 = vsub.s32 %v351, %v353
        %v355 = vrot.slane %v245, %v354
        %v356 = vcombine.high %v355, %v355
        %v358 = vunpack.c.l.s4 1966171168
        %v359 = vunpack.c.0.s8 %v358
        %v360 = vlaneseq
        %v361 = vshrl.u32 %v360, 7
        %v362 = vsub.s32 %v359, %v361
        %v363 = vrot.slane %v355, %v362
        %v365 = vunpack.c.l.s4 1966171168
        %v366 = vunpack.c.0.s8 %v365
        %v367 = vlaneseq
        %v368 = vshrl.u32 %v367, 7
        %v369 = vsub.s32 %v366, %v368
        %v370 = vrot.slane %v356, %v369
        %v371 = vcombine.high %v363, %v363
        %v372 = vcombine.high %v370, %v370
        %v374 = vunpack.c.l.s4 1966171168
        %v375 = vunpack.c.0.s8 %v374
        %v376 = vlaneseq
        %v377 = vshrl.u32 %v376, 7
        %v378 = vsub.s32 %v375, %v377
        %v379 = vrot.slane %v246, %v378
        %v380 = vcombine.high %v379, %v379
        %v382 = vunpack.c.l.s4 1966171168
        %v383 = vunpack.c.0.s8 %v382
        %v384 = vlaneseq
        %v385 = vshrl.u32 %v384, 7
        %v386 = vsub.s32 %v383, %v385
        %v387 = vrot.slane %v379, %v386
        %v389 = vunpack.c.l.s4 1966171168
        %v390 = vunpack.c.0.s8 %v389
        %v391 = vlaneseq
        %v392 = vshrl.u32 %v391, 7
        %v393 = vsub.s32 %v390, %v392
        %v394 = vrot.slane %v380, %v393
        %v395 = vcombine.high %v387, %v387
        %v396 = vcombine.high %v394, %v394
        %v397 = vunpack.i.l.s16 %v267
        %v398 = vunpack.i.h.s16 %v267
        %v399 = vunpack.i.l.s16 %v274
        %v400 = vunpack.i.h.s16 %v274
        %v401 = vunpack.i.l.s16 %v275
        %v402 = vunpack.i.h.s16 %v275
        %v403 = vunpack.i.l.s16 %v276
        %v404 = vunpack.i.l.s16 %v291
        %v405 = vunpack.i.h.s16 %v291
        %v406 = vunpack.i.l.s16 %v298
        %v407 = vunpack.i.h.s16 %v298
        %v408 = vunpack.i.l.s16 %v299
        %v409 = vunpack.i.h.s16 %v299
        %v410 = vunpack.i.l.s16 %v300
        %v411 = vunpack.i.l.s16 %v315
        %v412 = vunpack.i.h.s16 %v315
        %v413 = vunpack.i.l.s16 %v322
        %v414 = vunpack.i.h.s16 %v322
        %v415 = vunpack.i.l.s16 %v323
        %v416 = vunpack.i.h.s16 %v323
        %v417 = vunpack.i.l.s16 %v324
        %v418 = vunpack.i.l.s16 %v339
        %v419 = vunpack.i.h.s16 %v339
        %v420 = vunpack.i.l.s16 %v346
        %v421 = vunpack.i.h.s16 %v346
        %v422 = vunpack.i.l.s16 %v347
        %v423 = vunpack.i.h.s16 %v347
        %v424 = vunpack.i.l.s16 %v348
        %v425 = vunpack.i.l.s16 %v363
        %v426 = vunpack.i.h.s16 %v363
        %v427 = vunpack.i.l.s16 %v370
        %v428 = vunpack.i.h.s16 %v370
        %v429 = vunpack.i.l.s16 %v371
        %v430 = vunpack.i.h.s16 %v371
        %v431 = vunpack.i.l.s16 %v372
        %v432 = vunpack.i.l.s16 %v387
        %v433 = vunpack.i.h.s16 %v387
        %v434 = vunpack.i.l.s16 %v394
        %v435 = vunpack.i.h.s16 %v394
        %v436 = vunpack.i.l.s16 %v395
        %v437 = vunpack.i.h.s16 %v395
        %v438 = vunpack.i.l.s16 %v396
        %s439 = smul.u32 %s24, 9
        %s440 = smul.addr %s439, 4
        %s441 = scalar_lea.vmem %s1, %s440
        %v442 = vld [vmem:[%s441] sm:$0xf]
        %v443 = vpack.i.b16 %v398, %v397
        %v444 = vpack.i.b16 %v400, %v399
        %v445 = vpack.i.b16 %v402, %v401
        %v446 = vpack.i.b16 %v404, %v403
        %v447 = vpack.i.b16 %v406, %v405
        %v448 = vpack.i.b16 %v408, %v407
        %v449 = vpack.i.b16 %v410, %v409
        %v450 = vpack.i.b16 %v412, %v411
        %v451 = vpack.i.b16 %v414, %v413
        %v452 = vpack.i.b16 %v416, %v415
        %v453 = vpack.i.b16 %v418, %v417
        %v454 = vpack.i.b16 %v420, %v419
        %v455 = vpack.i.b16 %v422, %v421
        %v456 = vpack.i.b16 %v424, %v423
        %v457 = vpack.i.b16 %v426, %v425
        %v458 = vpack.i.b16 %v428, %v427
        %v459 = vpack.i.b16 %v430, %v429
        %v460 = vpack.i.b16 %v432, %v431
        %v461 = vpack.i.b16 %v434, %v433
        %v462 = vpack.i.b16 %v436, %v435
        %v463 = vpack.i.b16 %v438, %v437
        %v464 = vcombine.low %v443, %v444
        %v465 = vcombine.low %v445, %v446
        %v466 = vcombine.low %v447, %v448
        %v467 = vcombine.low %v449, %v450
        %v469 = vunpack.c.l.s4 1966171168
        %v470 = vunpack.c.0.s8 %v469
        %v471 = vlaneseq
        %v472 = vshrl.u32 %v471, 7
        %v473 = vsub.s32 %v470, %v472
        %v474 = vrot.slane %v464, %v473
        %v476 = vunpack.c.l.s4 1966171168
        %v477 = vunpack.c.0.s8 %v476
        %v478 = vlaneseq
        %v479 = vshrl.u32 %v478, 7
        %v480 = vsub.s32 %v477, %v479
        %v481 = vrot.slane %v465, %v480
        %v483 = vunpack.c.l.s4 1966171168
        %v484 = vunpack.c.0.s8 %v483
        %v485 = vlaneseq
        %v486 = vshrl.u32 %v485, 7
        %v487 = vsub.s32 %v484, %v486
        %v488 = vrot.slane %v466, %v487
        %v490 = vunpack.c.l.s4 1966171168
        %v491 = vunpack.c.0.s8 %v490
        %v492 = vlaneseq
        %v493 = vshrl.u32 %v492, 7
        %v494 = vsub.s32 %v491, %v493
        %v495 = vrot.slane %v467, %v494
        %v496 = vcombine.low %v474, %v481
        %v497 = vcombine.low %v488, %v495
        %v499 = vunpack.c.l.s4 1966171168
        %v500 = vunpack.c.0.s8 %v499
        %v501 = vlaneseq
        %v502 = vshrl.u32 %v501, 7
        %v503 = vsub.s32 %v500, %v502
        %v504 = vrot.slane %v496, %v503
        %v506 = vunpack.c.l.s4 1966171168
        %v507 = vunpack.c.0.s8 %v506
        %v508 = vlaneseq
        %v509 = vshrl.u32 %v508, 7
        %v510 = vsub.s32 %v507, %v509
        %v511 = vrot.slane %v497, %v510
        %v512 = vcombine.low %v504, %v511
        %v513 = vcombine.low %v451, %v452
        %v514 = vcombine.low %v453, %v454
        %v515 = vcombine.low %v455, %v456
        %v516 = vcombine.low %v457, %v458
        %v518 = vunpack.c.l.s4 1966171168
        %v519 = vunpack.c.0.s8 %v518
        %v520 = vlaneseq
        %v521 = vshrl.u32 %v520, 7
        %v522 = vsub.s32 %v519, %v521
        %v523 = vrot.slane %v513, %v522
        %v525 = vunpack.c.l.s4 1966171168
        %v526 = vunpack.c.0.s8 %v525
        %v527 = vlaneseq
        %v528 = vshrl.u32 %v527, 7
        %v529 = vsub.s32 %v526, %v528
        %v530 = vrot.slane %v514, %v529
        %v532 = vunpack.c.l.s4 1966171168
        %v533 = vunpack.c.0.s8 %v532
        %v534 = vlaneseq
        %v535 = vshrl.u32 %v534, 7
        %v536 = vsub.s32 %v533, %v535
        %v537 = vrot.slane %v515, %v536
        %v539 = vunpack.c.l.s4 1966171168
        %v540 = vunpack.c.0.s8 %v539
        %v541 = vlaneseq
        %v542 = vshrl.u32 %v541, 7
        %v543 = vsub.s32 %v540, %v542
        %v544 = vrot.slane %v516, %v543
        %v545 = vcombine.low %v523, %v530
        %v546 = vcombine.low %v537, %v544
        %v548 = vunpack.c.l.s4 1966171168
        %v549 = vunpack.c.0.s8 %v548
        %v550 = vlaneseq
        %v551 = vshrl.u32 %v550, 7
        %v552 = vsub.s32 %v549, %v551
        %v553 = vrot.slane %v545, %v552
        %v555 = vunpack.c.l.s4 1966171168
        %v556 = vunpack.c.0.s8 %v555
        %v557 = vlaneseq
        %v558 = vshrl.u32 %v557, 7
        %v559 = vsub.s32 %v556, %v558
        %v560 = vrot.slane %v546, %v559
        %v561 = vcombine.low %v553, %v560
        %v562 = vcombine.low %v459, %v460
        %v563 = vcombine.low %v461, %v462
        %v565 = vunpack.c.l.s4 1966171168
        %v566 = vunpack.c.0.s8 %v565
        %v567 = vlaneseq
        %v568 = vshrl.u32 %v567, 7
        %v569 = vsub.s32 %v566, %v568
        %v570 = vrot.slane %v562, %v569
        %v572 = vunpack.c.l.s4 1966171168
        %v573 = vunpack.c.0.s8 %v572
        %v574 = vlaneseq
        %v575 = vshrl.u32 %v574, 7
        %v576 = vsub.s32 %v573, %v575
        %v577 = vrot.slane %v563, %v576
        %v579 = vunpack.c.l.s4 1966171168
        %v580 = vunpack.c.0.s8 %v579
        %v581 = vlaneseq
        %v582 = vshrl.u32 %v581, 7
        %v583 = vsub.s32 %v580, %v582
        %v584 = vrot.slane %v463, %v583
        %v585 = vcombine.low %v570, %v577
        %v587 = vunpack.c.l.s4 1966171168
        %v588 = vunpack.c.0.s8 %v587
        %v589 = vlaneseq
        %v590 = vshrl.u32 %v589, 7
        %v591 = vsub.s32 %v588, %v590
        %v592 = vrot.slane %v585, %v591
        %v594 = vunpack.c.l.s4 1966171168
        %v595 = vunpack.c.0.s8 %v594
        %v596 = vlaneseq
        %v597 = vshrl.u32 %v596, 7
        %v598 = vsub.s32 %v595, %v597
        %v599 = vrot.slane %v584, %v598
        %v600 = vcombine.low %v592, %v599
        %vm601 = vcmask 64512
        %v603 = vsel %vm601, %v512, 0
        %v606 = vsel %vm601, %v561, 0
        %v609 = vsel %vm601, %v600, 0
        %vm611 = vcmask 1043456
        %v613 = vsel %vm611, %v442, 0
        %615 = vmatprep.subr.bf16.mxu0 0
        %616 = vmatpush1.bf16.msra.mxu0 0
        %617 = vmatprep.subr.bf16.mxu0 0
        %618 = vmatpush1.bf16.msra.mxu0 0
        %619 = vmatprep.subr.bf16.mxu0 0
        %620 = vmatpush1.bf16.msra.mxu0 0
        %621 = vmatprep.subr.bf16.mxu0 0
        %622 = vmatpush1.bf16.msra.mxu0 0
        %623 = vmatprep.subr.bf16.mxu0 0
        %624 = vmatpush1.bf16.msra.mxu0 0
        %625 = vmatprep.subr.bf16.mxu0 0
        %626 = vmatpush1.bf16.msra.mxu0 0
        %627 = vmatprep.subr.bf16.mxu0 0
        %628 = vmatpush1.bf16.msra.mxu0 0
        %629 = vmatprep.subr.bf16.mxu0 0
        %630 = vmatpush1.bf16.msra.mxu0 %v613
        %631 = vmatprep.subr.bf16.mxu0 0
        %632 = vmatpush2.bf16.msra.mxu0 0
        %633 = vmatprep.subr.bf16.mxu0 0
        %634 = vmatpush2.bf16.msra.mxu0 0
        %635 = vmatprep.subr.bf16.mxu0 0
        %636 = vmatpush2.bf16.msra.mxu0 0
        %637 = vmatprep.subr.bf16.mxu0 0
        %638 = vmatpush2.bf16.msra.mxu0 0
        %639 = vmatprep.subr.bf16.mxu0 0
        %640 = vmatpush2.bf16.msra.mxu0 0
        %641 = vmatprep.subr.bf16.mxu0 0
        %642 = vmatpush2.bf16.msra.mxu0 0
        %643 = vmatprep.subr.bf16.mxu0 0
        %644 = vmatpush2.bf16.msra.mxu0 0
        %645 = vmatprep.subr.bf16.mxu0 0
        %646 = vmatpush2.bf16.msra.mxu0 0
        %647 = vmatprep.mubr.bf16.mxu0 0
        %648 = vmatmul.mubr.bf16.gmra.mxu0 %v603
        %v649 = vpop.f32.mrf.mxu0
        %v650 = vadd.f32 0.0, %v649
        %v651 = vpop.f32.mrf.mxu0
        %v652 = vpop.f32.mrf.mxu0
        %v653 = vadd.f32 0.0, %v652
        %v654 = vpop.f32.mrf.mxu0
        %655 = vmatprep.mubr.bf16.mxu0 0
        %656 = vmatmul.mubr.bf16.gmra.mxu0 %v606
        %v657 = vpop.f32.mrf.mxu0
        %v658 = vadd.f32 0.0, %v657
        %v659 = vpop.f32.mrf.mxu0
        %v660 = vpop.f32.mrf.mxu0
        %v661 = vadd.f32 0.0, %v660
        %v662 = vpop.f32.mrf.mxu0
        %663 = vmatprep.mubr.bf16.mxu0 0
        %664 = vmatmul.mubr.bf16.gmra.mxu0 %v609
        %v665 = vpop.f32.mrf.mxu0
        %v666 = vadd.f32 0.0, %v665
        %v667 = vpop.f32.mrf.mxu0
        %v668 = vpop.f32.mrf.mxu0
        %v669 = vadd.f32 0.0, %v668
        %v670 = vpop.f32.mrf.mxu0
        %671 = vdwg.mxu0
        %v672 = vadd.f32 %v235, %v650
        %v673 = vadd.f32 %v236, %v653
        %v674 = vadd.f32 %v237, %v658
        %v675 = vadd.f32 %v238, %v661
        %v676 = vadd.f32 %v239, %v666
        %v677 = vadd.f32 %v240, %v669
        %v678 = vld [vmem:[%s209] sm:$0xf]
        %v679 = vld [vmem:[%s209 + $0x8] sm:$0xf]
        %v680 = vld [vmem:[%s209 + $0x10] sm:$0xf]
        %v681 = vld [vmem:[%s209 + $0x18] sm:$0xf]
        %v682 = vld [vmem:[%s209 + $0x20] sm:$0xf]
        %v683 = vld [vmem:[%s209 + $0x28] sm:$0xf]
        %v691 = vunpack.c.l.s4 1966171168
        %v692 = vunpack.c.0.s8 %v691
        %v693 = vlaneseq
        %v694 = vshrl.u32 %v693, 7
        %v695 = vsub.s32 %v692, %v694
        %v696 = vrot.slane %v678, %v695
        %v697 = vcombine.high %v696, %v696
        %v699 = vunpack.c.l.s4 1966171168
        %v700 = vunpack.c.0.s8 %v699
        %v701 = vlaneseq
        %v702 = vshrl.u32 %v701, 7
        %v703 = vsub.s32 %v700, %v702
        %v704 = vrot.slane %v696, %v703
        %v706 = vunpack.c.l.s4 1966171168
        %v707 = vunpack.c.0.s8 %v706
        %v708 = vlaneseq
        %v709 = vshrl.u32 %v708, 7
        %v710 = vsub.s32 %v707, %v709
        %v711 = vrot.slane %v697, %v710
        %v712 = vcombine.high %v704, %v704
        %v713 = vcombine.high %v711, %v711
        %v715 = vunpack.c.l.s4 1966171168
        %v716 = vunpack.c.0.s8 %v715
        %v717 = vlaneseq
        %v718 = vshrl.u32 %v717, 7
        %v719 = vsub.s32 %v716, %v718
        %v720 = vrot.slane %v679, %v719
        %v721 = vcombine.high %v720, %v720
        %v723 = vunpack.c.l.s4 1966171168
        %v724 = vunpack.c.0.s8 %v723
        %v725 = vlaneseq
        %v726 = vshrl.u32 %v725, 7
        %v727 = vsub.s32 %v724, %v726
        %v728 = vrot.slane %v720, %v727
        %v730 = vunpack.c.l.s4 1966171168
        %v731 = vunpack.c.0.s8 %v730
        %v732 = vlaneseq
        %v733 = vshrl.u32 %v732, 7
        %v734 = vsub.s32 %v731, %v733
        %v735 = vrot.slane %v721, %v734
        %v736 = vcombine.high %v728, %v728
        %v737 = vcombine.high %v735, %v735
        %v739 = vunpack.c.l.s4 1966171168
        %v740 = vunpack.c.0.s8 %v739
        %v741 = vlaneseq
        %v742 = vshrl.u32 %v741, 7
        %v743 = vsub.s32 %v740, %v742
        %v744 = vrot.slane %v680, %v743
        %v745 = vcombine.high %v744, %v744
        %v747 = vunpack.c.l.s4 1966171168
        %v748 = vunpack.c.0.s8 %v747
        %v749 = vlaneseq
        %v750 = vshrl.u32 %v749, 7
        %v751 = vsub.s32 %v748, %v750
        %v752 = vrot.slane %v744, %v751
        %v754 = vunpack.c.l.s4 1966171168
        %v755 = vunpack.c.0.s8 %v754
        %v756 = vlaneseq
        %v757 = vshrl.u32 %v756, 7
        %v758 = vsub.s32 %v755, %v757
        %v759 = vrot.slane %v745, %v758
        %v760 = vcombine.high %v752, %v752
        %v761 = vcombine.high %v759, %v759
        %v763 = vunpack.c.l.s4 1966171168
        %v764 = vunpack.c.0.s8 %v763
        %v765 = vlaneseq
        %v766 = vshrl.u32 %v765, 7
        %v767 = vsub.s32 %v764, %v766
        %v768 = vrot.slane %v681, %v767
        %v769 = vcombine.high %v768, %v768
        %v771 = vunpack.c.l.s4 1966171168
        %v772 = vunpack.c.0.s8 %v771
        %v773 = vlaneseq
        %v774 = vshrl.u32 %v773, 7
        %v775 = vsub.s32 %v772, %v774
        %v776 = vrot.slane %v768, %v775
        %v778 = vunpack.c.l.s4 1966171168
        %v779 = vunpack.c.0.s8 %v778
        %v780 = vlaneseq
        %v781 = vshrl.u32 %v780, 7
        %v782 = vsub.s32 %v779, %v781
        %v783 = vrot.slane %v769, %v782
        %v784 = vcombine.high %v776, %v776
        %v785 = vcombine.high %v783, %v783
        %v787 = vunpack.c.l.s4 1966171168
        %v788 = vunpack.c.0.s8 %v787
        %v789 = vlaneseq
        %v790 = vshrl.u32 %v789, 7
        %v791 = vsub.s32 %v788, %v790
        %v792 = vrot.slane %v682, %v791
        %v793 = vcombine.high %v792, %v792
        %v795 = vunpack.c.l.s4 1966171168
        %v796 = vunpack.c.0.s8 %v795
        %v797 = vlaneseq
        %v798 = vshrl.u32 %v797, 7
        %v799 = vsub.s32 %v796, %v798
        %v800 = vrot.slane %v792, %v799
        %v802 = vunpack.c.l.s4 1966171168
        %v803 = vunpack.c.0.s8 %v802
        %v804 = vlaneseq
        %v805 = vshrl.u32 %v804, 7
        %v806 = vsub.s32 %v803, %v805
        %v807 = vrot.slane %v793, %v806
        %v808 = vcombine.high %v800, %v800
        %v809 = vcombine.high %v807, %v807
        %v811 = vunpack.c.l.s4 1966171168
        %v812 = vunpack.c.0.s8 %v811
        %v813 = vlaneseq
        %v814 = vshrl.u32 %v813, 7
        %v815 = vsub.s32 %v812, %v814
        %v816 = vrot.slane %v683, %v815
        %v817 = vcombine.high %v816, %v816
        %v819 = vunpack.c.l.s4 1966171168
        %v820 = vunpack.c.0.s8 %v819
        %v821 = vlaneseq
        %v822 = vshrl.u32 %v821, 7
        %v823 = vsub.s32 %v820, %v822
        %v824 = vrot.slane %v816, %v823
        %v826 = vunpack.c.l.s4 1966171168
        %v827 = vunpack.c.0.s8 %v826
        %v828 = vlaneseq
        %v829 = vshrl.u32 %v828, 7
        %v830 = vsub.s32 %v827, %v829
        %v831 = vrot.slane %v817, %v830
        %v832 = vcombine.high %v824, %v824
        %v833 = vcombine.high %v831, %v831
        %v834 = vunpack.i.h.s16 %v704
        %v835 = vunpack.i.l.s16 %v711
        %v836 = vunpack.i.h.s16 %v711
        %v837 = vunpack.i.l.s16 %v712
        %v838 = vunpack.i.h.s16 %v712
        %v839 = vunpack.i.l.s16 %v713
        %v840 = vunpack.i.h.s16 %v713
        %v841 = vunpack.i.h.s16 %v728
        %v842 = vunpack.i.l.s16 %v735
        %v843 = vunpack.i.h.s16 %v735
        %v844 = vunpack.i.l.s16 %v736
        %v845 = vunpack.i.h.s16 %v736
        %v846 = vunpack.i.l.s16 %v737
        %v847 = vunpack.i.h.s16 %v737
        %v848 = vunpack.i.h.s16 %v752
        %v849 = vunpack.i.l.s16 %v759
        %v850 = vunpack.i.h.s16 %v759
        %v851 = vunpack.i.l.s16 %v760
        %v852 = vunpack.i.h.s16 %v760
        %v853 = vunpack.i.l.s16 %v761
        %v854 = vunpack.i.h.s16 %v761
        %v855 = vunpack.i.h.s16 %v776
        %v856 = vunpack.i.l.s16 %v783
        %v857 = vunpack.i.h.s16 %v783
        %v858 = vunpack.i.l.s16 %v784
        %v859 = vunpack.i.h.s16 %v784
        %v860 = vunpack.i.l.s16 %v785
        %v861 = vunpack.i.h.s16 %v785
        %v862 = vunpack.i.h.s16 %v800
        %v863 = vunpack.i.l.s16 %v807
        %v864 = vunpack.i.h.s16 %v807
        %v865 = vunpack.i.l.s16 %v808
        %v866 = vunpack.i.h.s16 %v808
        %v867 = vunpack.i.l.s16 %v809
        %v868 = vunpack.i.h.s16 %v809
        %v869 = vunpack.i.h.s16 %v824
        %v870 = vunpack.i.l.s16 %v831
        %v871 = vunpack.i.h.s16 %v831
        %v872 = vunpack.i.l.s16 %v832
        %v873 = vunpack.i.h.s16 %v832
        %v874 = vunpack.i.l.s16 %v833
        %v875 = vunpack.i.h.s16 %v833
        %s876 = sadd.s32 %s439, 1
        %s877 = smul.addr %s876, 4
        %s878 = scalar_lea.vmem %s1, %s877
        %v879 = vld [vmem:[%s878] sm:$0xf]
        %v880 = vpack.i.b16 %v835, %v834
        %v881 = vpack.i.b16 %v837, %v836
        %v882 = vpack.i.b16 %v839, %v838
        %v883 = vpack.i.b16 %v841, %v840
        %v884 = vpack.i.b16 %v843, %v842
        %v885 = vpack.i.b16 %v845, %v844
        %v886 = vpack.i.b16 %v847, %v846
        %v887 = vpack.i.b16 %v849, %v848
        %v888 = vpack.i.b16 %v851, %v850
        %v889 = vpack.i.b16 %v853, %v852
        %v890 = vpack.i.b16 %v855, %v854
        %v891 = vpack.i.b16 %v857, %v856
        %v892 = vpack.i.b16 %v859, %v858
        %v893 = vpack.i.b16 %v861, %v860
        %v894 = vpack.i.b16 %v863, %v862
        %v895 = vpack.i.b16 %v865, %v864
        %v896 = vpack.i.b16 %v867, %v866
        %v897 = vpack.i.b16 %v869, %v868
        %v898 = vpack.i.b16 %v871, %v870
        %v899 = vpack.i.b16 %v873, %v872
        %v900 = vpack.i.b16 %v875, %v874
        %v901 = vcombine.low %v880, %v881
        %v902 = vcombine.low %v882, %v883
        %v903 = vcombine.low %v884, %v885
        %v904 = vcombine.low %v886, %v887
        %v906 = vunpack.c.l.s4 1966171168
        %v907 = vunpack.c.0.s8 %v906
        %v908 = vlaneseq
        %v909 = vshrl.u32 %v908, 7
        %v910 = vsub.s32 %v907, %v909
        %v911 = vrot.slane %v901, %v910
        %v913 = vunpack.c.l.s4 1966171168
        %v914 = vunpack.c.0.s8 %v913
        %v915 = vlaneseq
        %v916 = vshrl.u32 %v915, 7
        %v917 = vsub.s32 %v914, %v916
        %v918 = vrot.slane %v902, %v917
        %v920 = vunpack.c.l.s4 1966171168
        %v921 = vunpack.c.0.s8 %v920
        %v922 = vlaneseq
        %v923 = vshrl.u32 %v922, 7
        %v924 = vsub.s32 %v921, %v923
        %v925 = vrot.slane %v903, %v924
        %v927 = vunpack.c.l.s4 1966171168
        %v928 = vunpack.c.0.s8 %v927
        %v929 = vlaneseq
        %v930 = vshrl.u32 %v929, 7
        %v931 = vsub.s32 %v928, %v930
        %v932 = vrot.slane %v904, %v931
        %v933 = vcombine.low %v911, %v918
        %v934 = vcombine.low %v925, %v932
        %v936 = vunpack.c.l.s4 1966171168
        %v937 = vunpack.c.0.s8 %v936
        %v938 = vlaneseq
        %v939 = vshrl.u32 %v938, 7
        %v940 = vsub.s32 %v937, %v939
        %v941 = vrot.slane %v933, %v940
        %v943 = vunpack.c.l.s4 1966171168
        %v944 = vunpack.c.0.s8 %v943
        %v945 = vlaneseq
        %v946 = vshrl.u32 %v945, 7
        %v947 = vsub.s32 %v944, %v946
        %v948 = vrot.slane %v934, %v947
        %v949 = vcombine.low %v941, %v948
        %v950 = vcombine.low %v888, %v889
        %v951 = vcombine.low %v890, %v891
        %v952 = vcombine.low %v892, %v893
        %v953 = vcombine.low %v894, %v895
        %v955 = vunpack.c.l.s4 1966171168
        %v956 = vunpack.c.0.s8 %v955
        %v957 = vlaneseq
        %v958 = vshrl.u32 %v957, 7
        %v959 = vsub.s32 %v956, %v958
        %v960 = vrot.slane %v950, %v959
        %v962 = vunpack.c.l.s4 1966171168
        %v963 = vunpack.c.0.s8 %v962
        %v964 = vlaneseq
        %v965 = vshrl.u32 %v964, 7
        %v966 = vsub.s32 %v963, %v965
        %v967 = vrot.slane %v951, %v966
        %v969 = vunpack.c.l.s4 1966171168
        %v970 = vunpack.c.0.s8 %v969
        %v971 = vlaneseq
        %v972 = vshrl.u32 %v971, 7
        %v973 = vsub.s32 %v970, %v972
        %v974 = vrot.slane %v952, %v973
        %v976 = vunpack.c.l.s4 1966171168
        %v977 = vunpack.c.0.s8 %v976
        %v978 = vlaneseq
        %v979 = vshrl.u32 %v978, 7
        %v980 = vsub.s32 %v977, %v979
        %v981 = vrot.slane %v953, %v980
        %v982 = vcombine.low %v960, %v967
        %v983 = vcombine.low %v974, %v981
        %v985 = vunpack.c.l.s4 1966171168
        %v986 = vunpack.c.0.s8 %v985
        %v987 = vlaneseq
        %v988 = vshrl.u32 %v987, 7
        %v989 = vsub.s32 %v986, %v988
        %v990 = vrot.slane %v982, %v989
        %v992 = vunpack.c.l.s4 1966171168
        %v993 = vunpack.c.0.s8 %v992
        %v994 = vlaneseq
        %v995 = vshrl.u32 %v994, 7
        %v996 = vsub.s32 %v993, %v995
        %v997 = vrot.slane %v983, %v996
        %v998 = vcombine.low %v990, %v997
        %v999 = vcombine.low %v896, %v897
        %v1000 = vcombine.low %v898, %v899
        %v1002 = vunpack.c.l.s4 1966171168
        %v1003 = vunpack.c.0.s8 %v1002
        %v1004 = vlaneseq
        %v1005 = vshrl.u32 %v1004, 7
        %v1006 = vsub.s32 %v1003, %v1005
        %v1007 = vrot.slane %v999, %v1006
        %v1009 = vunpack.c.l.s4 1966171168
        %v1010 = vunpack.c.0.s8 %v1009
        %v1011 = vlaneseq
        %v1012 = vshrl.u32 %v1011, 7
        %v1013 = vsub.s32 %v1010, %v1012
        %v1014 = vrot.slane %v1000, %v1013
        %v1016 = vunpack.c.l.s4 1966171168
        %v1017 = vunpack.c.0.s8 %v1016
        %v1018 = vlaneseq
        %v1019 = vshrl.u32 %v1018, 7
        %v1020 = vsub.s32 %v1017, %v1019
        %v1021 = vrot.slane %v900, %v1020
        %v1022 = vcombine.low %v1007, %v1014
        %v1024 = vunpack.c.l.s4 1966171168
        %v1025 = vunpack.c.0.s8 %v1024
        %v1026 = vlaneseq
        %v1027 = vshrl.u32 %v1026, 7
        %v1028 = vsub.s32 %v1025, %v1027
        %v1029 = vrot.slane %v1022, %v1028
        %v1031 = vunpack.c.l.s4 1966171168
        %v1032 = vunpack.c.0.s8 %v1031
        %v1033 = vlaneseq
        %v1034 = vshrl.u32 %v1033, 7
        %v1035 = vsub.s32 %v1032, %v1034
        %v1036 = vrot.slane %v1021, %v1035
        %v1037 = vcombine.low %v1029, %v1036
        %v1039 = vsel %vm601, %v949, 0
        %v1042 = vsel %vm601, %v998, 0
        %v1045 = vsel %vm601, %v1037, 0
        %v1048 = vsel %vm611, %v879, 0
        %1050 = vmatprep.subr.bf16.mxu0 0
        %1051 = vmatpush1.bf16.msra.mxu0 0
        %1052 = vmatprep.subr.bf16.mxu0 0
        %1053 = vmatpush1.bf16.msra.mxu0 0
        %1054 = vmatprep.subr.bf16.mxu0 0
        %1055 = vmatpush1.bf16.msra.mxu0 0
        %1056 = vmatprep.subr.bf16.mxu0 0
        %1057 = vmatpush1.bf16.msra.mxu0 0
        %1058 = vmatprep.subr.bf16.mxu0 0
        %1059 = vmatpush1.bf16.msra.mxu0 0
        %1060 = vmatprep.subr.bf16.mxu0 0
        %1061 = vmatpush1.bf16.msra.mxu0 0
        %1062 = vmatprep.subr.bf16.mxu0 0
        %1063 = vmatpush1.bf16.msra.mxu0 0
        %1064 = vmatprep.subr.bf16.mxu0 0
        %1065 = vmatpush1.bf16.msra.mxu0 %v1048
        %1066 = vmatprep.subr.bf16.mxu0 0
        %1067 = vmatpush2.bf16.msra.mxu0 0
        %1068 = vmatprep.subr.bf16.mxu0 0
        %1069 = vmatpush2.bf16.msra.mxu0 0
        %1070 = vmatprep.subr.bf16.mxu0 0
        %1071 = vmatpush2.bf16.msra.mxu0 0
        %1072 = vmatprep.subr.bf16.mxu0 0
        %1073 = vmatpush2.bf16.msra.mxu0 0
        %1074 = vmatprep.subr.bf16.mxu0 0
        %1075 = vmatpush2.bf16.msra.mxu0 0
        %1076 = vmatprep.subr.bf16.mxu0 0
        %1077 = vmatpush2.bf16.msra.mxu0 0
        %1078 = vmatprep.subr.bf16.mxu0 0
        %1079 = vmatpush2.bf16.msra.mxu0 0
        %1080 = vmatprep.subr.bf16.mxu0 0
        %1081 = vmatpush2.bf16.msra.mxu0 0
        %1082 = vmatprep.mubr.bf16.mxu0 0
        %1083 = vmatmul.mubr.bf16.gmra.mxu0 %v1039
        %v1084 = vpop.f32.mrf.mxu0
        %v1085 = vadd.f32 0.0, %v1084
        %v1086 = vpop.f32.mrf.mxu0
        %v1087 = vpop.f32.mrf.mxu0
        %v1088 = vadd.f32 0.0, %v1087
        %v1089 = vpop.f32.mrf.mxu0
        %1090 = vmatprep.mubr.bf16.mxu0 0
        %1091 = vmatmul.mubr.bf16.gmra.mxu0 %v1042
        %v1092 = vpop.f32.mrf.mxu0
        %v1093 = vadd.f32 0.0, %v1092
        %v1094 = vpop.f32.mrf.mxu0
        %v1095 = vpop.f32.mrf.mxu0
        %v1096 = vadd.f32 0.0, %v1095
        %v1097 = vpop.f32.mrf.mxu0
        %1098 = vmatprep.mubr.bf16.mxu0 0
        %1099 = vmatmul.mubr.bf16.gmra.mxu0 %v1045
        %v1100 = vpop.f32.mrf.mxu0
        %v1101 = vadd.f32 0.0, %v1100
        %v1102 = vpop.f32.mrf.mxu0
        %v1103 = vpop.f32.mrf.mxu0
        %v1104 = vadd.f32 0.0, %v1103
        %v1105 = vpop.f32.mrf.mxu0
        %1106 = vdwg.mxu0
        %v1107 = vadd.f32 %v672, %v1085
        %v1108 = vadd.f32 %v673, %v1088
        %v1109 = vadd.f32 %v674, %v1093
        %v1110 = vadd.f32 %v675, %v1096
        %v1111 = vadd.f32 %v676, %v1101
        %v1112 = vadd.f32 %v677, %v1104
        %v1113 = vld [vmem:[%s209] sm:$0xe]
        %v1114 = vld [vmem:[%s209 + $0x4] sm:$0x1]
        %v1115 = vld [vmem:[%s209 + $0x8] sm:$0xe]
        %v1116 = vld [vmem:[%s209 + $0xc] sm:$0x1]
        %v1117 = vld [vmem:[%s209 + $0x10] sm:$0xe]
        %v1118 = vld [vmem:[%s209 + $0x14] sm:$0x1]
        %v1119 = vld [vmem:[%s209 + $0x18] sm:$0xe]
        %v1120 = vld [vmem:[%s209 + $0x1c] sm:$0x1]
        %v1121 = vld [vmem:[%s209 + $0x20] sm:$0xe]
        %v1122 = vld [vmem:[%s209 + $0x24] sm:$0x1]
        %v1123 = vld [vmem:[%s209 + $0x28] sm:$0xe]
        %v1124 = vld [vmem:[%s209 + $0x2c] sm:$0x1]
        %v1138 = vunpack.c.l.s4 1966171168
        %v1139 = vunpack.c.0.s8 %v1138
        %v1140 = vlaneseq
        %v1141 = vshrl.u32 %v1140, 7
        %v1142 = vsub.s32 %v1139, %v1141
        %v1143 = vrot.slane %v1113, %v1142
        %v1144 = vcombine.high %v1143, %v1143
        %v1146 = vunpack.c.l.s4 1966171168
        %v1147 = vunpack.c.0.s8 %v1146
        %v1148 = vlaneseq
        %v1149 = vshrl.u32 %v1148, 7
        %v1150 = vsub.s32 %v1147, %v1149
        %v1151 = vrot.slane %v1143, %v1150
        %v1153 = vunpack.c.l.s4 1966171168
        %v1154 = vunpack.c.0.s8 %v1153
        %v1155 = vlaneseq
        %v1156 = vshrl.u32 %v1155, 7
        %v1157 = vsub.s32 %v1154, %v1156
        %v1158 = vrot.slane %v1144, %v1157
        %v1159 = vcombine.high %v1151, %v1151
        %v1160 = vcombine.high %v1158, %v1158
        %v1162 = vunpack.c.l.s4 1966171168
        %v1163 = vunpack.c.0.s8 %v1162
        %v1164 = vlaneseq
        %v1165 = vshrl.u32 %v1164, 7
        %v1166 = vsub.s32 %v1163, %v1165
        %v1167 = vrot.slane %v1114, %v1166
        %v1169 = vunpack.c.l.s4 1966171168
        %v1170 = vunpack.c.0.s8 %v1169
        %v1171 = vlaneseq
        %v1172 = vshrl.u32 %v1171, 7
        %v1173 = vsub.s32 %v1170, %v1172
        %v1174 = vrot.slane %v1167, %v1173
        %v1176 = vunpack.c.l.s4 1966171168
        %v1177 = vunpack.c.0.s8 %v1176
        %v1178 = vlaneseq
        %v1179 = vshrl.u32 %v1178, 7
        %v1180 = vsub.s32 %v1177, %v1179
        %v1181 = vrot.slane %v1115, %v1180
        %v1182 = vcombine.high %v1181, %v1181
        %v1184 = vunpack.c.l.s4 1966171168
        %v1185 = vunpack.c.0.s8 %v1184
        %v1186 = vlaneseq
        %v1187 = vshrl.u32 %v1186, 7
        %v1188 = vsub.s32 %v1185, %v1187
        %v1189 = vrot.slane %v1181, %v1188
        %v1191 = vunpack.c.l.s4 1966171168
        %v1192 = vunpack.c.0.s8 %v1191
        %v1193 = vlaneseq
        %v1194 = vshrl.u32 %v1193, 7
        %v1195 = vsub.s32 %v1192, %v1194
        %v1196 = vrot.slane %v1182, %v1195
        %v1197 = vcombine.high %v1189, %v1189
        %v1198 = vcombine.high %v1196, %v1196
        %v1200 = vunpack.c.l.s4 1966171168
        %v1201 = vunpack.c.0.s8 %v1200
        %v1202 = vlaneseq
        %v1203 = vshrl.u32 %v1202, 7
        %v1204 = vsub.s32 %v1201, %v1203
        %v1205 = vrot.slane %v1116, %v1204
        %v1207 = vunpack.c.l.s4 1966171168
        %v1208 = vunpack.c.0.s8 %v1207
        %v1209 = vlaneseq
        %v1210 = vshrl.u32 %v1209, 7
        %v1211 = vsub.s32 %v1208, %v1210
        %v1212 = vrot.slane %v1205, %v1211
        %v1214 = vunpack.c.l.s4 1966171168
        %v1215 = vunpack.c.0.s8 %v1214
        %v1216 = vlaneseq
        %v1217 = vshrl.u32 %v1216, 7
        %v1218 = vsub.s32 %v1215, %v1217
        %v1219 = vrot.slane %v1117, %v1218
        %v1220 = vcombine.high %v1219, %v1219
        %v1222 = vunpack.c.l.s4 1966171168
        %v1223 = vunpack.c.0.s8 %v1222
        %v1224 = vlaneseq
        %v1225 = vshrl.u32 %v1224, 7
        %v1226 = vsub.s32 %v1223, %v1225
        %v1227 = vrot.slane %v1219, %v1226
        %v1229 = vunpack.c.l.s4 1966171168
        %v1230 = vunpack.c.0.s8 %v1229
        %v1231 = vlaneseq
        %v1232 = vshrl.u32 %v1231, 7
        %v1233 = vsub.s32 %v1230, %v1232
        %v1234 = vrot.slane %v1220, %v1233
        %v1235 = vcombine.high %v1227, %v1227
        %v1236 = vcombine.high %v1234, %v1234
        %v1238 = vunpack.c.l.s4 1966171168
        %v1239 = vunpack.c.0.s8 %v1238
        %v1240 = vlaneseq
        %v1241 = vshrl.u32 %v1240, 7
        %v1242 = vsub.s32 %v1239, %v1241
        %v1243 = vrot.slane %v1118, %v1242
        %v1245 = vunpack.c.l.s4 1966171168
        %v1246 = vunpack.c.0.s8 %v1245
        %v1247 = vlaneseq
        %v1248 = vshrl.u32 %v1247, 7
        %v1249 = vsub.s32 %v1246, %v1248
        %v1250 = vrot.slane %v1243, %v1249
        %v1252 = vunpack.c.l.s4 1966171168
        %v1253 = vunpack.c.0.s8 %v1252
        %v1254 = vlaneseq
        %v1255 = vshrl.u32 %v1254, 7
        %v1256 = vsub.s32 %v1253, %v1255
        %v1257 = vrot.slane %v1119, %v1256
        %v1258 = vcombine.high %v1257, %v1257
        %v1260 = vunpack.c.l.s4 1966171168
        %v1261 = vunpack.c.0.s8 %v1260
        %v1262 = vlaneseq
        %v1263 = vshrl.u32 %v1262, 7
        %v1264 = vsub.s32 %v1261, %v1263
        %v1265 = vrot.slane %v1257, %v1264
        %v1267 = vunpack.c.l.s4 1966171168
        %v1268 = vunpack.c.0.s8 %v1267
        %v1269 = vlaneseq
        %v1270 = vshrl.u32 %v1269, 7
        %v1271 = vsub.s32 %v1268, %v1270
        %v1272 = vrot.slane %v1258, %v1271
        %v1273 = vcombine.high %v1265, %v1265
        %v1274 = vcombine.high %v1272, %v1272
        %v1276 = vunpack.c.l.s4 1966171168
        %v1277 = vunpack.c.0.s8 %v1276
        %v1278 = vlaneseq
        %v1279 = vshrl.u32 %v1278, 7
        %v1280 = vsub.s32 %v1277, %v1279
        %v1281 = vrot.slane %v1120, %v1280
        %v1283 = vunpack.c.l.s4 1966171168
        %v1284 = vunpack.c.0.s8 %v1283
        %v1285 = vlaneseq
        %v1286 = vshrl.u32 %v1285, 7
        %v1287 = vsub.s32 %v1284, %v1286
        %v1288 = vrot.slane %v1281, %v1287
        %v1290 = vunpack.c.l.s4 1966171168
        %v1291 = vunpack.c.0.s8 %v1290
        %v1292 = vlaneseq
        %v1293 = vshrl.u32 %v1292, 7
        %v1294 = vsub.s32 %v1291, %v1293
        %v1295 = vrot.slane %v1121, %v1294
        %v1296 = vcombine.high %v1295, %v1295
        %v1298 = vunpack.c.l.s4 1966171168
        %v1299 = vunpack.c.0.s8 %v1298
        %v1300 = vlaneseq
        %v1301 = vshrl.u32 %v1300, 7
        %v1302 = vsub.s32 %v1299, %v1301
        %v1303 = vrot.slane %v1295, %v1302
        %v1305 = vunpack.c.l.s4 1966171168
        %v1306 = vunpack.c.0.s8 %v1305
        %v1307 = vlaneseq
        %v1308 = vshrl.u32 %v1307, 7
        %v1309 = vsub.s32 %v1306, %v1308
        %v1310 = vrot.slane %v1296, %v1309
        %v1311 = vcombine.high %v1303, %v1303
        %v1312 = vcombine.high %v1310, %v1310
        %v1314 = vunpack.c.l.s4 1966171168
        %v1315 = vunpack.c.0.s8 %v1314
        %v1316 = vlaneseq
        %v1317 = vshrl.u32 %v1316, 7
        %v1318 = vsub.s32 %v1315, %v1317
        %v1319 = vrot.slane %v1122, %v1318
        %v1321 = vunpack.c.l.s4 1966171168
        %v1322 = vunpack.c.0.s8 %v1321
        %v1323 = vlaneseq
        %v1324 = vshrl.u32 %v1323, 7
        %v1325 = vsub.s32 %v1322, %v1324
        %v1326 = vrot.slane %v1319, %v1325
        %v1328 = vunpack.c.l.s4 1966171168
        %v1329 = vunpack.c.0.s8 %v1328
        %v1330 = vlaneseq
        %v1331 = vshrl.u32 %v1330, 7
        %v1332 = vsub.s32 %v1329, %v1331
        %v1333 = vrot.slane %v1123, %v1332
        %v1334 = vcombine.high %v1333, %v1333
        %v1336 = vunpack.c.l.s4 1966171168
        %v1337 = vunpack.c.0.s8 %v1336
        %v1338 = vlaneseq
        %v1339 = vshrl.u32 %v1338, 7
        %v1340 = vsub.s32 %v1337, %v1339
        %v1341 = vrot.slane %v1333, %v1340
        %v1343 = vunpack.c.l.s4 1966171168
        %v1344 = vunpack.c.0.s8 %v1343
        %v1345 = vlaneseq
        %v1346 = vshrl.u32 %v1345, 7
        %v1347 = vsub.s32 %v1344, %v1346
        %v1348 = vrot.slane %v1334, %v1347
        %v1349 = vcombine.high %v1341, %v1341
        %v1350 = vcombine.high %v1348, %v1348
        %v1352 = vunpack.c.l.s4 1966171168
        %v1353 = vunpack.c.0.s8 %v1352
        %v1354 = vlaneseq
        %v1355 = vshrl.u32 %v1354, 7
        %v1356 = vsub.s32 %v1353, %v1355
        %v1357 = vrot.slane %v1124, %v1356
        %v1359 = vunpack.c.l.s4 1966171168
        %v1360 = vunpack.c.0.s8 %v1359
        %v1361 = vlaneseq
        %v1362 = vshrl.u32 %v1361, 7
        %v1363 = vsub.s32 %v1360, %v1362
        %v1364 = vrot.slane %v1357, %v1363
        %v1365 = vunpack.i.l.s16 %v1158
        %v1366 = vunpack.i.h.s16 %v1158
        %v1367 = vunpack.i.l.s16 %v1159
        %v1368 = vunpack.i.h.s16 %v1159
        %v1369 = vunpack.i.l.s16 %v1160
        %v1370 = vunpack.i.h.s16 %v1160
        %v1371 = vunpack.i.l.s16 %v1174
        %v1372 = vunpack.i.l.s16 %v1196
        %v1373 = vunpack.i.h.s16 %v1196
        %v1374 = vunpack.i.l.s16 %v1197
        %v1375 = vunpack.i.h.s16 %v1197
        %v1376 = vunpack.i.l.s16 %v1198
        %v1377 = vunpack.i.h.s16 %v1198
        %v1378 = vunpack.i.l.s16 %v1212
        %v1379 = vunpack.i.l.s16 %v1234
        %v1380 = vunpack.i.h.s16 %v1234
        %v1381 = vunpack.i.l.s16 %v1235
        %v1382 = vunpack.i.h.s16 %v1235
        %v1383 = vunpack.i.l.s16 %v1236
        %v1384 = vunpack.i.h.s16 %v1236
        %v1385 = vunpack.i.l.s16 %v1250
        %v1386 = vunpack.i.l.s16 %v1272
        %v1387 = vunpack.i.h.s16 %v1272
        %v1388 = vunpack.i.l.s16 %v1273
        %v1389 = vunpack.i.h.s16 %v1273
        %v1390 = vunpack.i.l.s16 %v1274
        %v1391 = vunpack.i.h.s16 %v1274
        %v1392 = vunpack.i.l.s16 %v1288
        %v1393 = vunpack.i.l.s16 %v1310
        %v1394 = vunpack.i.h.s16 %v1310
        %v1395 = vunpack.i.l.s16 %v1311
        %v1396 = vunpack.i.h.s16 %v1311
        %v1397 = vunpack.i.l.s16 %v1312
        %v1398 = vunpack.i.h.s16 %v1312
        %v1399 = vunpack.i.l.s16 %v1326
        %v1400 = vunpack.i.l.s16 %v1348
        %v1401 = vunpack.i.h.s16 %v1348
        %v1402 = vunpack.i.l.s16 %v1349
        %v1403 = vunpack.i.h.s16 %v1349
        %v1404 = vunpack.i.l.s16 %v1350
        %v1405 = vunpack.i.h.s16 %v1350
        %v1406 = vunpack.i.l.s16 %v1364
        %s1407 = sadd.s32 %s439, 2
        %s1408 = smul.addr %s1407, 4
        %s1409 = scalar_lea.vmem %s1, %s1408
        %v1410 = vld [vmem:[%s1409] sm:$0xf]
        %v1411 = vpack.i.b16 %v1366, %v1365
        %v1412 = vpack.i.b16 %v1368, %v1367
        %v1413 = vpack.i.b16 %v1370, %v1369
        %v1414 = vpack.i.b16 %v1372, %v1371
        %v1415 = vpack.i.b16 %v1374, %v1373
        %v1416 = vpack.i.b16 %v1376, %v1375
        %v1417 = vpack.i.b16 %v1378, %v1377
        %v1418 = vpack.i.b16 %v1380, %v1379
        %v1419 = vpack.i.b16 %v1382, %v1381
        %v1420 = vpack.i.b16 %v1384, %v1383
        %v1421 = vpack.i.b16 %v1386, %v1385
        %v1422 = vpack.i.b16 %v1388, %v1387
        %v1423 = vpack.i.b16 %v1390, %v1389
        %v1424 = vpack.i.b16 %v1392, %v1391
        %v1425 = vpack.i.b16 %v1394, %v1393
        %v1426 = vpack.i.b16 %v1396, %v1395
        %v1427 = vpack.i.b16 %v1398, %v1397
        %v1428 = vpack.i.b16 %v1400, %v1399
        %v1429 = vpack.i.b16 %v1402, %v1401
        %v1430 = vpack.i.b16 %v1404, %v1403
        %v1431 = vpack.i.b16 %v1406, %v1405
        %v1432 = vcombine.low %v1411, %v1412
        %v1433 = vcombine.low %v1413, %v1414
        %v1434 = vcombine.low %v1415, %v1416
        %v1435 = vcombine.low %v1417, %v1418
        %v1437 = vunpack.c.l.s4 1966171168
        %v1438 = vunpack.c.0.s8 %v1437
        %v1439 = vlaneseq
        %v1440 = vshrl.u32 %v1439, 7
        %v1441 = vsub.s32 %v1438, %v1440
        %v1442 = vrot.slane %v1432, %v1441
        %v1444 = vunpack.c.l.s4 1966171168
        %v1445 = vunpack.c.0.s8 %v1444
        %v1446 = vlaneseq
        %v1447 = vshrl.u32 %v1446, 7
        %v1448 = vsub.s32 %v1445, %v1447
        %v1449 = vrot.slane %v1433, %v1448
        %v1451 = vunpack.c.l.s4 1966171168
        %v1452 = vunpack.c.0.s8 %v1451
        %v1453 = vlaneseq
        %v1454 = vshrl.u32 %v1453, 7
        %v1455 = vsub.s32 %v1452, %v1454
        %v1456 = vrot.slane %v1434, %v1455
        %v1458 = vunpack.c.l.s4 1966171168
        %v1459 = vunpack.c.0.s8 %v1458
        %v1460 = vlaneseq
        %v1461 = vshrl.u32 %v1460, 7
        %v1462 = vsub.s32 %v1459, %v1461
        %v1463 = vrot.slane %v1435, %v1462
        %v1464 = vcombine.low %v1442, %v1449
        %v1465 = vcombine.low %v1456, %v1463
        %v1467 = vunpack.c.l.s4 1966171168
        %v1468 = vunpack.c.0.s8 %v1467
        %v1469 = vlaneseq
        %v1470 = vshrl.u32 %v1469, 7
        %v1471 = vsub.s32 %v1468, %v1470
        %v1472 = vrot.slane %v1464, %v1471
        %v1474 = vunpack.c.l.s4 1966171168
        %v1475 = vunpack.c.0.s8 %v1474
        %v1476 = vlaneseq
        %v1477 = vshrl.u32 %v1476, 7
        %v1478 = vsub.s32 %v1475, %v1477
        %v1479 = vrot.slane %v1465, %v1478
        %v1480 = vcombine.low %v1472, %v1479
        %v1481 = vcombine.low %v1419, %v1420
        %v1482 = vcombine.low %v1421, %v1422
        %v1483 = vcombine.low %v1423, %v1424
        %v1484 = vcombine.low %v1425, %v1426
        %v1486 = vunpack.c.l.s4 1966171168
        %v1487 = vunpack.c.0.s8 %v1486
        %v1488 = vlaneseq
        %v1489 = vshrl.u32 %v1488, 7
        %v1490 = vsub.s32 %v1487, %v1489
        %v1491 = vrot.slane %v1481, %v1490
        %v1493 = vunpack.c.l.s4 1966171168
        %v1494 = vunpack.c.0.s8 %v1493
        %v1495 = vlaneseq
        %v1496 = vshrl.u32 %v1495, 7
        %v1497 = vsub.s32 %v1494, %v1496
        %v1498 = vrot.slane %v1482, %v1497
        %v1500 = vunpack.c.l.s4 1966171168
        %v1501 = vunpack.c.0.s8 %v1500
        %v1502 = vlaneseq
        %v1503 = vshrl.u32 %v1502, 7
        %v1504 = vsub.s32 %v1501, %v1503
        %v1505 = vrot.slane %v1483, %v1504
        %v1507 = vunpack.c.l.s4 1966171168
        %v1508 = vunpack.c.0.s8 %v1507
        %v1509 = vlaneseq
        %v1510 = vshrl.u32 %v1509, 7
        %v1511 = vsub.s32 %v1508, %v1510
        %v1512 = vrot.slane %v1484, %v1511
        %v1513 = vcombine.low %v1491, %v1498
        %v1514 = vcombine.low %v1505, %v1512
        %v1516 = vunpack.c.l.s4 1966171168
        %v1517 = vunpack.c.0.s8 %v1516
        %v1518 = vlaneseq
        %v1519 = vshrl.u32 %v1518, 7
        %v1520 = vsub.s32 %v1517, %v1519
        %v1521 = vrot.slane %v1513, %v1520
        %v1523 = vunpack.c.l.s4 1966171168
        %v1524 = vunpack.c.0.s8 %v1523
        %v1525 = vlaneseq
        %v1526 = vshrl.u32 %v1525, 7
        %v1527 = vsub.s32 %v1524, %v1526
        %v1528 = vrot.slane %v1514, %v1527
        %v1529 = vcombine.low %v1521, %v1528
        %v1530 = vcombine.low %v1427, %v1428
        %v1531 = vcombine.low %v1429, %v1430
        %v1533 = vunpack.c.l.s4 1966171168
        %v1534 = vunpack.c.0.s8 %v1533
        %v1535 = vlaneseq
        %v1536 = vshrl.u32 %v1535, 7
        %v1537 = vsub.s32 %v1534, %v1536
        %v1538 = vrot.slane %v1530, %v1537
        %v1540 = vunpack.c.l.s4 1966171168
        %v1541 = vunpack.c.0.s8 %v1540
        %v1542 = vlaneseq
        %v1543 = vshrl.u32 %v1542, 7
        %v1544 = vsub.s32 %v1541, %v1543
        %v1545 = vrot.slane %v1531, %v1544
        %v1547 = vunpack.c.l.s4 1966171168
        %v1548 = vunpack.c.0.s8 %v1547
        %v1549 = vlaneseq
        %v1550 = vshrl.u32 %v1549, 7
        %v1551 = vsub.s32 %v1548, %v1550
        %v1552 = vrot.slane %v1431, %v1551
        %v1553 = vcombine.low %v1538, %v1545
        %v1555 = vunpack.c.l.s4 1966171168
        %v1556 = vunpack.c.0.s8 %v1555
        %v1557 = vlaneseq
        %v1558 = vshrl.u32 %v1557, 7
        %v1559 = vsub.s32 %v1556, %v1558
        %v1560 = vrot.slane %v1553, %v1559
        %v1562 = vunpack.c.l.s4 1966171168
        %v1563 = vunpack.c.0.s8 %v1562
        %v1564 = vlaneseq
        %v1565 = vshrl.u32 %v1564, 7
        %v1566 = vsub.s32 %v1563, %v1565
        %v1567 = vrot.slane %v1552, %v1566
        %v1568 = vcombine.low %v1560, %v1567
        %v1570 = vsel %vm601, %v1480, 0
        %v1573 = vsel %vm601, %v1529, 0
        %v1576 = vsel %vm601, %v1568, 0
        %v1579 = vsel %vm611, %v1410, 0
        %1581 = vmatprep.subr.bf16.mxu0 0
        %1582 = vmatpush1.bf16.msra.mxu0 0
        %1583 = vmatprep.subr.bf16.mxu0 0
        %1584 = vmatpush1.bf16.msra.mxu0 0
        %1585 = vmatprep.subr.bf16.mxu0 0
        %1586 = vmatpush1.bf16.msra.mxu0 0
        %1587 = vmatprep.subr.bf16.mxu0 0
        %1588 = vmatpush1.bf16.msra.mxu0 0
        %1589 = vmatprep.subr.bf16.mxu0 0
        %1590 = vmatpush1.bf16.msra.mxu0 0
        %1591 = vmatprep.subr.bf16.mxu0 0
        %1592 = vmatpush1.bf16.msra.mxu0 0
        %1593 = vmatprep.subr.bf16.mxu0 0
        %1594 = vmatpush1.bf16.msra.mxu0 0
        %1595 = vmatprep.subr.bf16.mxu0 0
        %1596 = vmatpush1.bf16.msra.mxu0 %v1579
        %1597 = vmatprep.subr.bf16.mxu0 0
        %1598 = vmatpush2.bf16.msra.mxu0 0
        %1599 = vmatprep.subr.bf16.mxu0 0
        %1600 = vmatpush2.bf16.msra.mxu0 0
        %1601 = vmatprep.subr.bf16.mxu0 0
        %1602 = vmatpush2.bf16.msra.mxu0 0
        %1603 = vmatprep.subr.bf16.mxu0 0
        %1604 = vmatpush2.bf16.msra.mxu0 0
        %1605 = vmatprep.subr.bf16.mxu0 0
        %1606 = vmatpush2.bf16.msra.mxu0 0
        %1607 = vmatprep.subr.bf16.mxu0 0
        %1608 = vmatpush2.bf16.msra.mxu0 0
        %1609 = vmatprep.subr.bf16.mxu0 0
        %1610 = vmatpush2.bf16.msra.mxu0 0
        %1611 = vmatprep.subr.bf16.mxu0 0
        %1612 = vmatpush2.bf16.msra.mxu0 0
        %1613 = vmatprep.mubr.bf16.mxu0 0
        %1614 = vmatmul.mubr.bf16.gmra.mxu0 %v1570
        %v1615 = vpop.f32.mrf.mxu0
        %v1616 = vadd.f32 0.0, %v1615
        %v1617 = vpop.f32.mrf.mxu0
        %v1618 = vpop.f32.mrf.mxu0
        %v1619 = vadd.f32 0.0, %v1618
        %v1620 = vpop.f32.mrf.mxu0
        %1621 = vmatprep.mubr.bf16.mxu0 0
        %1622 = vmatmul.mubr.bf16.gmra.mxu0 %v1573
        %v1623 = vpop.f32.mrf.mxu0
        %v1624 = vadd.f32 0.0, %v1623
        %v1625 = vpop.f32.mrf.mxu0
        %v1626 = vpop.f32.mrf.mxu0
        %v1627 = vadd.f32 0.0, %v1626
        %v1628 = vpop.f32.mrf.mxu0
        %1629 = vmatprep.mubr.bf16.mxu0 0
        %1630 = vmatmul.mubr.bf16.gmra.mxu0 %v1576
        %v1631 = vpop.f32.mrf.mxu0
        %v1632 = vadd.f32 0.0, %v1631
        %v1633 = vpop.f32.mrf.mxu0
        %v1634 = vpop.f32.mrf.mxu0
        %v1635 = vadd.f32 0.0, %v1634
        %v1636 = vpop.f32.mrf.mxu0
        %1637 = vdwg.mxu0
        %v1638 = vadd.f32 %v1107, %v1616
        %v1639 = vadd.f32 %v1108, %v1619
        %v1640 = vadd.f32 %v1109, %v1624
        %v1641 = vadd.f32 %v1110, %v1627
        %v1642 = vadd.f32 %v1111, %v1632
        %v1643 = vadd.f32 %v1112, %v1635
        %s1644 = scalar_lea.vmem %s209, 8
        %v1645 = vld [vmem:[%s1644] sm:$0xf]
        %v1646 = vld [vmem:[%s1644 + $0x8] sm:$0xf]
        %v1647 = vld [vmem:[%s1644 + $0x10] sm:$0xf]
        %v1648 = vld [vmem:[%s1644 + $0x18] sm:$0xf]
        %v1649 = vld [vmem:[%s1644 + $0x20] sm:$0xf]
        %v1650 = vld [vmem:[%s1644 + $0x28] sm:$0xf]
        %v1658 = vunpack.c.l.s4 1966171168
        %v1659 = vunpack.c.0.s8 %v1658
        %v1660 = vlaneseq
        %v1661 = vshrl.u32 %v1660, 7
        %v1662 = vsub.s32 %v1659, %v1661
        %v1663 = vrot.slane %v1645, %v1662
        %v1664 = vcombine.high %v1663, %v1663
        %v1666 = vunpack.c.l.s4 1966171168
        %v1667 = vunpack.c.0.s8 %v1666
        %v1668 = vlaneseq
        %v1669 = vshrl.u32 %v1668, 7
        %v1670 = vsub.s32 %v1667, %v1669
        %v1671 = vrot.slane %v1663, %v1670
        %v1673 = vunpack.c.l.s4 1966171168
        %v1674 = vunpack.c.0.s8 %v1673
        %v1675 = vlaneseq
        %v1676 = vshrl.u32 %v1675, 7
        %v1677 = vsub.s32 %v1674, %v1676
        %v1678 = vrot.slane %v1664, %v1677
        %v1679 = vcombine.high %v1671, %v1671
        %v1680 = vcombine.high %v1678, %v1678
        %v1682 = vunpack.c.l.s4 1966171168
        %v1683 = vunpack.c.0.s8 %v1682
        %v1684 = vlaneseq
        %v1685 = vshrl.u32 %v1684, 7
        %v1686 = vsub.s32 %v1683, %v1685
        %v1687 = vrot.slane %v1646, %v1686
        %v1688 = vcombine.high %v1687, %v1687
        %v1690 = vunpack.c.l.s4 1966171168
        %v1691 = vunpack.c.0.s8 %v1690
        %v1692 = vlaneseq
        %v1693 = vshrl.u32 %v1692, 7
        %v1694 = vsub.s32 %v1691, %v1693
        %v1695 = vrot.slane %v1687, %v1694
        %v1697 = vunpack.c.l.s4 1966171168
        %v1698 = vunpack.c.0.s8 %v1697
        %v1699 = vlaneseq
        %v1700 = vshrl.u32 %v1699, 7
        %v1701 = vsub.s32 %v1698, %v1700
        %v1702 = vrot.slane %v1688, %v1701
        %v1703 = vcombine.high %v1695, %v1695
        %v1704 = vcombine.high %v1702, %v1702
        %v1706 = vunpack.c.l.s4 1966171168
        %v1707 = vunpack.c.0.s8 %v1706
        %v1708 = vlaneseq
        %v1709 = vshrl.u32 %v1708, 7
        %v1710 = vsub.s32 %v1707, %v1709
        %v1711 = vrot.slane %v1647, %v1710
        %v1712 = vcombine.high %v1711, %v1711
        %v1714 = vunpack.c.l.s4 1966171168
        %v1715 = vunpack.c.0.s8 %v1714
        %v1716 = vlaneseq
        %v1717 = vshrl.u32 %v1716, 7
        %v1718 = vsub.s32 %v1715, %v1717
        %v1719 = vrot.slane %v1711, %v1718
        %v1721 = vunpack.c.l.s4 1966171168
        %v1722 = vunpack.c.0.s8 %v1721
        %v1723 = vlaneseq
        %v1724 = vshrl.u32 %v1723, 7
        %v1725 = vsub.s32 %v1722, %v1724
        %v1726 = vrot.slane %v1712, %v1725
        %v1727 = vcombine.high %v1719, %v1719
        %v1728 = vcombine.high %v1726, %v1726
        %v1730 = vunpack.c.l.s4 1966171168
        %v1731 = vunpack.c.0.s8 %v1730
        %v1732 = vlaneseq
        %v1733 = vshrl.u32 %v1732, 7
        %v1734 = vsub.s32 %v1731, %v1733
        %v1735 = vrot.slane %v1648, %v1734
        %v1736 = vcombine.high %v1735, %v1735
        %v1738 = vunpack.c.l.s4 1966171168
        %v1739 = vunpack.c.0.s8 %v1738
        %v1740 = vlaneseq
        %v1741 = vshrl.u32 %v1740, 7
        %v1742 = vsub.s32 %v1739, %v1741
        %v1743 = vrot.slane %v1735, %v1742
        %v1745 = vunpack.c.l.s4 1966171168
        %v1746 = vunpack.c.0.s8 %v1745
        %v1747 = vlaneseq
        %v1748 = vshrl.u32 %v1747, 7
        %v1749 = vsub.s32 %v1746, %v1748
        %v1750 = vrot.slane %v1736, %v1749
        %v1751 = vcombine.high %v1743, %v1743
        %v1752 = vcombine.high %v1750, %v1750
        %v1754 = vunpack.c.l.s4 1966171168
        %v1755 = vunpack.c.0.s8 %v1754
        %v1756 = vlaneseq
        %v1757 = vshrl.u32 %v1756, 7
        %v1758 = vsub.s32 %v1755, %v1757
        %v1759 = vrot.slane %v1649, %v1758
        %v1760 = vcombine.high %v1759, %v1759
        %v1762 = vunpack.c.l.s4 1966171168
        %v1763 = vunpack.c.0.s8 %v1762
        %v1764 = vlaneseq
        %v1765 = vshrl.u32 %v1764, 7
        %v1766 = vsub.s32 %v1763, %v1765
        %v1767 = vrot.slane %v1759, %v1766
        %v1769 = vunpack.c.l.s4 1966171168
        %v1770 = vunpack.c.0.s8 %v1769
        %v1771 = vlaneseq
        %v1772 = vshrl.u32 %v1771, 7
        %v1773 = vsub.s32 %v1770, %v1772
        %v1774 = vrot.slane %v1760, %v1773
        %v1775 = vcombine.high %v1767, %v1767
        %v1776 = vcombine.high %v1774, %v1774
        %v1778 = vunpack.c.l.s4 1966171168
        %v1779 = vunpack.c.0.s8 %v1778
        %v1780 = vlaneseq
        %v1781 = vshrl.u32 %v1780, 7
        %v1782 = vsub.s32 %v1779, %v1781
        %v1783 = vrot.slane %v1650, %v1782
        %v1784 = vcombine.high %v1783, %v1783
        %v1786 = vunpack.c.l.s4 1966171168
        %v1787 = vunpack.c.0.s8 %v1786
        %v1788 = vlaneseq
        %v1789 = vshrl.u32 %v1788, 7
        %v1790 = vsub.s32 %v1787, %v1789
        %v1791 = vrot.slane %v1783, %v1790
        %v1793 = vunpack.c.l.s4 1966171168
        %v1794 = vunpack.c.0.s8 %v1793
        %v1795 = vlaneseq
        %v1796 = vshrl.u32 %v1795, 7
        %v1797 = vsub.s32 %v1794, %v1796
        %v1798 = vrot.slane %v1784, %v1797
        %v1799 = vcombine.high %v1791, %v1791
        %v1800 = vcombine.high %v1798, %v1798
        %v1801 = vunpack.i.l.s16 %v1671
        %v1802 = vunpack.i.h.s16 %v1671
        %v1803 = vunpack.i.l.s16 %v1678
        %v1804 = vunpack.i.h.s16 %v1678
        %v1805 = vunpack.i.l.s16 %v1679
        %v1806 = vunpack.i.h.s16 %v1679
        %v1807 = vunpack.i.l.s16 %v1680
        %v1808 = vunpack.i.l.s16 %v1695
        %v1809 = vunpack.i.h.s16 %v1695
        %v1810 = vunpack.i.l.s16 %v1702
        %v1811 = vunpack.i.h.s16 %v1702
        %v1812 = vunpack.i.l.s16 %v1703
        %v1813 = vunpack.i.h.s16 %v1703
        %v1814 = vunpack.i.l.s16 %v1704
        %v1815 = vunpack.i.l.s16 %v1719
        %v1816 = vunpack.i.h.s16 %v1719
        %v1817 = vunpack.i.l.s16 %v1726
        %v1818 = vunpack.i.h.s16 %v1726
        %v1819 = vunpack.i.l.s16 %v1727
        %v1820 = vunpack.i.h.s16 %v1727
        %v1821 = vunpack.i.l.s16 %v1728
        %v1822 = vunpack.i.l.s16 %v1743
        %v1823 = vunpack.i.h.s16 %v1743
        %v1824 = vunpack.i.l.s16 %v1750
        %v1825 = vunpack.i.h.s16 %v1750
        %v1826 = vunpack.i.l.s16 %v1751
        %v1827 = vunpack.i.h.s16 %v1751
        %v1828 = vunpack.i.l.s16 %v1752
        %v1829 = vunpack.i.l.s16 %v1767
        %v1830 = vunpack.i.h.s16 %v1767
        %v1831 = vunpack.i.l.s16 %v1774
        %v1832 = vunpack.i.h.s16 %v1774
        %v1833 = vunpack.i.l.s16 %v1775
        %v1834 = vunpack.i.h.s16 %v1775
        %v1835 = vunpack.i.l.s16 %v1776
        %v1836 = vunpack.i.l.s16 %v1791
        %v1837 = vunpack.i.h.s16 %v1791
        %v1838 = vunpack.i.l.s16 %v1798
        %v1839 = vunpack.i.h.s16 %v1798
        %v1840 = vunpack.i.l.s16 %v1799
        %v1841 = vunpack.i.h.s16 %v1799
        %v1842 = vunpack.i.l.s16 %v1800
        %s1843 = smul.u32 %s24, 3
        %s1844 = sadd.s32 %s1843, 1
        %s1845 = smul.u32 %s1844, 3
        %s1846 = smul.addr %s1845, 4
        %s1847 = scalar_lea.vmem %s1, %s1846
        %v1848 = vld [vmem:[%s1847] sm:$0xf]
        %v1849 = vpack.i.b16 %v1802, %v1801
        %v1850 = vpack.i.b16 %v1804, %v1803
        %v1851 = vpack.i.b16 %v1806, %v1805
        %v1852 = vpack.i.b16 %v1808, %v1807
        %v1853 = vpack.i.b16 %v1810, %v1809
        %v1854 = vpack.i.b16 %v1812, %v1811
        %v1855 = vpack.i.b16 %v1814, %v1813
        %v1856 = vpack.i.b16 %v1816, %v1815
        %v1857 = vpack.i.b16 %v1818, %v1817
        %v1858 = vpack.i.b16 %v1820, %v1819
        %v1859 = vpack.i.b16 %v1822, %v1821
        %v1860 = vpack.i.b16 %v1824, %v1823
        %v1861 = vpack.i.b16 %v1826, %v1825
        %v1862 = vpack.i.b16 %v1828, %v1827
        %v1863 = vpack.i.b16 %v1830, %v1829
        %v1864 = vpack.i.b16 %v1832, %v1831
        %v1865 = vpack.i.b16 %v1834, %v1833
        %v1866 = vpack.i.b16 %v1836, %v1835
        %v1867 = vpack.i.b16 %v1838, %v1837
        %v1868 = vpack.i.b16 %v1840, %v1839
        %v1869 = vpack.i.b16 %v1842, %v1841
        %v1870 = vcombine.low %v1849, %v1850
        %v1871 = vcombine.low %v1851, %v1852
        %v1872 = vcombine.low %v1853, %v1854
        %v1873 = vcombine.low %v1855, %v1856
        %v1875 = vunpack.c.l.s4 1966171168
        %v1876 = vunpack.c.0.s8 %v1875
        %v1877 = vlaneseq
        %v1878 = vshrl.u32 %v1877, 7
        %v1879 = vsub.s32 %v1876, %v1878
        %v1880 = vrot.slane %v1870, %v1879
        %v1882 = vunpack.c.l.s4 1966171168
        %v1883 = vunpack.c.0.s8 %v1882
        %v1884 = vlaneseq
        %v1885 = vshrl.u32 %v1884, 7
        %v1886 = vsub.s32 %v1883, %v1885
        %v1887 = vrot.slane %v1871, %v1886
        %v1889 = vunpack.c.l.s4 1966171168
        %v1890 = vunpack.c.0.s8 %v1889
        %v1891 = vlaneseq
        %v1892 = vshrl.u32 %v1891, 7
        %v1893 = vsub.s32 %v1890, %v1892
        %v1894 = vrot.slane %v1872, %v1893
        %v1896 = vunpack.c.l.s4 1966171168
        %v1897 = vunpack.c.0.s8 %v1896
        %v1898 = vlaneseq
        %v1899 = vshrl.u32 %v1898, 7
        %v1900 = vsub.s32 %v1897, %v1899
        %v1901 = vrot.slane %v1873, %v1900
        %v1902 = vcombine.low %v1880, %v1887
        %v1903 = vcombine.low %v1894, %v1901
        %v1905 = vunpack.c.l.s4 1966171168
        %v1906 = vunpack.c.0.s8 %v1905
        %v1907 = vlaneseq
        %v1908 = vshrl.u32 %v1907, 7
        %v1909 = vsub.s32 %v1906, %v1908
        %v1910 = vrot.slane %v1902, %v1909
        %v1912 = vunpack.c.l.s4 1966171168
        %v1913 = vunpack.c.0.s8 %v1912
        %v1914 = vlaneseq
        %v1915 = vshrl.u32 %v1914, 7
        %v1916 = vsub.s32 %v1913, %v1915
        %v1917 = vrot.slane %v1903, %v1916
        %v1918 = vcombine.low %v1910, %v1917
        %v1919 = vcombine.low %v1857, %v1858
        %v1920 = vcombine.low %v1859, %v1860
        %v1921 = vcombine.low %v1861, %v1862
        %v1922 = vcombine.low %v1863, %v1864
        %v1924 = vunpack.c.l.s4 1966171168
        %v1925 = vunpack.c.0.s8 %v1924
        %v1926 = vlaneseq
        %v1927 = vshrl.u32 %v1926, 7
        %v1928 = vsub.s32 %v1925, %v1927
        %v1929 = vrot.slane %v1919, %v1928
        %v1931 = vunpack.c.l.s4 1966171168
        %v1932 = vunpack.c.0.s8 %v1931
        %v1933 = vlaneseq
        %v1934 = vshrl.u32 %v1933, 7
        %v1935 = vsub.s32 %v1932, %v1934
        %v1936 = vrot.slane %v1920, %v1935
        %v1938 = vunpack.c.l.s4 1966171168
        %v1939 = vunpack.c.0.s8 %v1938
        %v1940 = vlaneseq
        %v1941 = vshrl.u32 %v1940, 7
        %v1942 = vsub.s32 %v1939, %v1941
        %v1943 = vrot.slane %v1921, %v1942
        %v1945 = vunpack.c.l.s4 1966171168
        %v1946 = vunpack.c.0.s8 %v1945
        %v1947 = vlaneseq
        %v1948 = vshrl.u32 %v1947, 7
        %v1949 = vsub.s32 %v1946, %v1948
        %v1950 = vrot.slane %v1922, %v1949
        %v1951 = vcombine.low %v1929, %v1936
        %v1952 = vcombine.low %v1943, %v1950
        %v1954 = vunpack.c.l.s4 1966171168
        %v1955 = vunpack.c.0.s8 %v1954
        %v1956 = vlaneseq
        %v1957 = vshrl.u32 %v1956, 7
        %v1958 = vsub.s32 %v1955, %v1957
        %v1959 = vrot.slane %v1951, %v1958
        %v1961 = vunpack.c.l.s4 1966171168
        %v1962 = vunpack.c.0.s8 %v1961
        %v1963 = vlaneseq
        %v1964 = vshrl.u32 %v1963, 7
        %v1965 = vsub.s32 %v1962, %v1964
        %v1966 = vrot.slane %v1952, %v1965
        %v1967 = vcombine.low %v1959, %v1966
        %v1968 = vcombine.low %v1865, %v1866
        %v1969 = vcombine.low %v1867, %v1868
        %v1971 = vunpack.c.l.s4 1966171168
        %v1972 = vunpack.c.0.s8 %v1971
        %v1973 = vlaneseq
        %v1974 = vshrl.u32 %v1973, 7
        %v1975 = vsub.s32 %v1972, %v1974
        %v1976 = vrot.slane %v1968, %v1975
        %v1978 = vunpack.c.l.s4 1966171168
        %v1979 = vunpack.c.0.s8 %v1978
        %v1980 = vlaneseq
        %v1981 = vshrl.u32 %v1980, 7
        %v1982 = vsub.s32 %v1979, %v1981
        %v1983 = vrot.slane %v1969, %v1982
        %v1985 = vunpack.c.l.s4 1966171168
        %v1986 = vunpack.c.0.s8 %v1985
        %v1987 = vlaneseq
        %v1988 = vshrl.u32 %v1987, 7
        %v1989 = vsub.s32 %v1986, %v1988
        %v1990 = vrot.slane %v1869, %v1989
        %v1991 = vcombine.low %v1976, %v1983
        %v1993 = vunpack.c.l.s4 1966171168
        %v1994 = vunpack.c.0.s8 %v1993
        %v1995 = vlaneseq
        %v1996 = vshrl.u32 %v1995, 7
        %v1997 = vsub.s32 %v1994, %v1996
        %v1998 = vrot.slane %v1991, %v1997
        %v2000 = vunpack.c.l.s4 1966171168
        %v2001 = vunpack.c.0.s8 %v2000
        %v2002 = vlaneseq
        %v2003 = vshrl.u32 %v2002, 7
        %v2004 = vsub.s32 %v2001, %v2003
        %v2005 = vrot.slane %v1990, %v2004
        %v2006 = vcombine.low %v1998, %v2005
        %v2008 = vsel %vm601, %v1918, 0
        %v2011 = vsel %vm601, %v1967, 0
        %v2014 = vsel %vm601, %v2006, 0
        %v2017 = vsel %vm611, %v1848, 0
        %2019 = vmatprep.subr.bf16.mxu0 0
        %2020 = vmatpush1.bf16.msra.mxu0 0
        %2021 = vmatprep.subr.bf16.mxu0 0
        %2022 = vmatpush1.bf16.msra.mxu0 0
        %2023 = vmatprep.subr.bf16.mxu0 0
        %2024 = vmatpush1.bf16.msra.mxu0 0
        %2025 = vmatprep.subr.bf16.mxu0 0
        %2026 = vmatpush1.bf16.msra.mxu0 0
        %2027 = vmatprep.subr.bf16.mxu0 0
        %2028 = vmatpush1.bf16.msra.mxu0 0
        %2029 = vmatprep.subr.bf16.mxu0 0
        %2030 = vmatpush1.bf16.msra.mxu0 0
        %2031 = vmatprep.subr.bf16.mxu0 0
        %2032 = vmatpush1.bf16.msra.mxu0 0
        %2033 = vmatprep.subr.bf16.mxu0 0
        %2034 = vmatpush1.bf16.msra.mxu0 %v2017
        %2035 = vmatprep.subr.bf16.mxu0 0
        %2036 = vmatpush2.bf16.msra.mxu0 0
        %2037 = vmatprep.subr.bf16.mxu0 0
        %2038 = vmatpush2.bf16.msra.mxu0 0
        %2039 = vmatprep.subr.bf16.mxu0 0
        %2040 = vmatpush2.bf16.msra.mxu0 0
        %2041 = vmatprep.subr.bf16.mxu0 0
        %2042 = vmatpush2.bf16.msra.mxu0 0
        %2043 = vmatprep.subr.bf16.mxu0 0
        %2044 = vmatpush2.bf16.msra.mxu0 0
        %2045 = vmatprep.subr.bf16.mxu0 0
        %2046 = vmatpush2.bf16.msra.mxu0 0
        %2047 = vmatprep.subr.bf16.mxu0 0
        %2048 = vmatpush2.bf16.msra.mxu0 0
        %2049 = vmatprep.subr.bf16.mxu0 0
        %2050 = vmatpush2.bf16.msra.mxu0 0
        %2051 = vmatprep.mubr.bf16.mxu0 0
        %2052 = vmatmul.mubr.bf16.gmra.mxu0 %v2008
        %v2053 = vpop.f32.mrf.mxu0
        %v2054 = vadd.f32 0.0, %v2053
        %v2055 = vpop.f32.mrf.mxu0
        %v2056 = vpop.f32.mrf.mxu0
        %v2057 = vadd.f32 0.0, %v2056
        %v2058 = vpop.f32.mrf.mxu0
        %2059 = vmatprep.mubr.bf16.mxu0 0
        %2060 = vmatmul.mubr.bf16.gmra.mxu0 %v2011
        %v2061 = vpop.f32.mrf.mxu0
        %v2062 = vadd.f32 0.0, %v2061
        %v2063 = vpop.f32.mrf.mxu0
        %v2064 = vpop.f32.mrf.mxu0
        %v2065 = vadd.f32 0.0, %v2064
        %v2066 = vpop.f32.mrf.mxu0
        %2067 = vmatprep.mubr.bf16.mxu0 0
        %2068 = vmatmul.mubr.bf16.gmra.mxu0 %v2014
        %v2069 = vpop.f32.mrf.mxu0
        %v2070 = vadd.f32 0.0, %v2069
        %v2071 = vpop.f32.mrf.mxu0
        %v2072 = vpop.f32.mrf.mxu0
        %v2073 = vadd.f32 0.0, %v2072
        %v2074 = vpop.f32.mrf.mxu0
        %2075 = vdwg.mxu0
        %v2076 = vadd.f32 %v1638, %v2054
        %v2077 = vadd.f32 %v1639, %v2057
        %v2078 = vadd.f32 %v1640, %v2062
        %v2079 = vadd.f32 %v1641, %v2065
        %v2080 = vadd.f32 %v1642, %v2070
        %v2081 = vadd.f32 %v1643, %v2073
        %v2082 = vld [vmem:[%s1644] sm:$0xf]
        %v2083 = vld [vmem:[%s1644 + $0x8] sm:$0xf]
        %v2084 = vld [vmem:[%s1644 + $0x10] sm:$0xf]
        %v2085 = vld [vmem:[%s1644 + $0x18] sm:$0xf]
        %v2086 = vld [vmem:[%s1644 + $0x20] sm:$0xf]
        %v2087 = vld [vmem:[%s1644 + $0x28] sm:$0xf]
        %v2095 = vunpack.c.l.s4 1966171168
        %v2096 = vunpack.c.0.s8 %v2095
        %v2097 = vlaneseq
        %v2098 = vshrl.u32 %v2097, 7
        %v2099 = vsub.s32 %v2096, %v2098
        %v2100 = vrot.slane %v2082, %v2099
        %v2101 = vcombine.high %v2100, %v2100
        %v2103 = vunpack.c.l.s4 1966171168
        %v2104 = vunpack.c.0.s8 %v2103
        %v2105 = vlaneseq
        %v2106 = vshrl.u32 %v2105, 7
        %v2107 = vsub.s32 %v2104, %v2106
        %v2108 = vrot.slane %v2100, %v2107
        %v2110 = vunpack.c.l.s4 1966171168
        %v2111 = vunpack.c.0.s8 %v2110
        %v2112 = vlaneseq
        %v2113 = vshrl.u32 %v2112, 7
        %v2114 = vsub.s32 %v2111, %v2113
        %v2115 = vrot.slane %v2101, %v2114
        %v2116 = vcombine.high %v2108, %v2108
        %v2117 = vcombine.high %v2115, %v2115
        %v2119 = vunpack.c.l.s4 1966171168
        %v2120 = vunpack.c.0.s8 %v2119
        %v2121 = vlaneseq
        %v2122 = vshrl.u32 %v2121, 7
        %v2123 = vsub.s32 %v2120, %v2122
        %v2124 = vrot.slane %v2083, %v2123
        %v2125 = vcombine.high %v2124, %v2124
        %v2127 = vunpack.c.l.s4 1966171168
        %v2128 = vunpack.c.0.s8 %v2127
        %v2129 = vlaneseq
        %v2130 = vshrl.u32 %v2129, 7
        %v2131 = vsub.s32 %v2128, %v2130
        %v2132 = vrot.slane %v2124, %v2131
        %v2134 = vunpack.c.l.s4 1966171168
        %v2135 = vunpack.c.0.s8 %v2134
        %v2136 = vlaneseq
        %v2137 = vshrl.u32 %v2136, 7
        %v2138 = vsub.s32 %v2135, %v2137
        %v2139 = vrot.slane %v2125, %v2138
        %v2140 = vcombine.high %v2132, %v2132
        %v2141 = vcombine.high %v2139, %v2139
        %v2143 = vunpack.c.l.s4 1966171168
        %v2144 = vunpack.c.0.s8 %v2143
        %v2145 = vlaneseq
        %v2146 = vshrl.u32 %v2145, 7
        %v2147 = vsub.s32 %v2144, %v2146
        %v2148 = vrot.slane %v2084, %v2147
        %v2149 = vcombine.high %v2148, %v2148
        %v2151 = vunpack.c.l.s4 1966171168
        %v2152 = vunpack.c.0.s8 %v2151
        %v2153 = vlaneseq
        %v2154 = vshrl.u32 %v2153, 7
        %v2155 = vsub.s32 %v2152, %v2154
        %v2156 = vrot.slane %v2148, %v2155
        %v2158 = vunpack.c.l.s4 1966171168
        %v2159 = vunpack.c.0.s8 %v2158
        %v2160 = vlaneseq
        %v2161 = vshrl.u32 %v2160, 7
        %v2162 = vsub.s32 %v2159, %v2161
        %v2163 = vrot.slane %v2149, %v2162
        %v2164 = vcombine.high %v2156, %v2156
        %v2165 = vcombine.high %v2163, %v2163
        %v2167 = vunpack.c.l.s4 1966171168
        %v2168 = vunpack.c.0.s8 %v2167
        %v2169 = vlaneseq
        %v2170 = vshrl.u32 %v2169, 7
        %v2171 = vsub.s32 %v2168, %v2170
        %v2172 = vrot.slane %v2085, %v2171
        %v2173 = vcombine.high %v2172, %v2172
        %v2175 = vunpack.c.l.s4 1966171168
        %v2176 = vunpack.c.0.s8 %v2175
        %v2177 = vlaneseq
        %v2178 = vshrl.u32 %v2177, 7
        %v2179 = vsub.s32 %v2176, %v2178
        %v2180 = vrot.slane %v2172, %v2179
        %v2182 = vunpack.c.l.s4 1966171168
        %v2183 = vunpack.c.0.s8 %v2182
        %v2184 = vlaneseq
        %v2185 = vshrl.u32 %v2184, 7
        %v2186 = vsub.s32 %v2183, %v2185
        %v2187 = vrot.slane %v2173, %v2186
        %v2188 = vcombine.high %v2180, %v2180
        %v2189 = vcombine.high %v2187, %v2187
        %v2191 = vunpack.c.l.s4 1966171168
        %v2192 = vunpack.c.0.s8 %v2191
        %v2193 = vlaneseq
        %v2194 = vshrl.u32 %v2193, 7
        %v2195 = vsub.s32 %v2192, %v2194
        %v2196 = vrot.slane %v2086, %v2195
        %v2197 = vcombine.high %v2196, %v2196
        %v2199 = vunpack.c.l.s4 1966171168
        %v2200 = vunpack.c.0.s8 %v2199
        %v2201 = vlaneseq
        %v2202 = vshrl.u32 %v2201, 7
        %v2203 = vsub.s32 %v2200, %v2202
        %v2204 = vrot.slane %v2196, %v2203
        %v2206 = vunpack.c.l.s4 1966171168
        %v2207 = vunpack.c.0.s8 %v2206
        %v2208 = vlaneseq
        %v2209 = vshrl.u32 %v2208, 7
        %v2210 = vsub.s32 %v2207, %v2209
        %v2211 = vrot.slane %v2197, %v2210
        %v2212 = vcombine.high %v2204, %v2204
        %v2213 = vcombine.high %v2211, %v2211
        %v2215 = vunpack.c.l.s4 1966171168
        %v2216 = vunpack.c.0.s8 %v2215
        %v2217 = vlaneseq
        %v2218 = vshrl.u32 %v2217, 7
        %v2219 = vsub.s32 %v2216, %v2218
        %v2220 = vrot.slane %v2087, %v2219
        %v2221 = vcombine.high %v2220, %v2220
        %v2223 = vunpack.c.l.s4 1966171168
        %v2224 = vunpack.c.0.s8 %v2223
        %v2225 = vlaneseq
        %v2226 = vshrl.u32 %v2225, 7
        %v2227 = vsub.s32 %v2224, %v2226
        %v2228 = vrot.slane %v2220, %v2227
        %v2230 = vunpack.c.l.s4 1966171168
        %v2231 = vunpack.c.0.s8 %v2230
        %v2232 = vlaneseq
        %v2233 = vshrl.u32 %v2232, 7
        %v2234 = vsub.s32 %v2231, %v2233
        %v2235 = vrot.slane %v2221, %v2234
        %v2236 = vcombine.high %v2228, %v2228
        %v2237 = vcombine.high %v2235, %v2235
        %v2238 = vunpack.i.h.s16 %v2108
        %v2239 = vunpack.i.l.s16 %v2115
        %v2240 = vunpack.i.h.s16 %v2115
        %v2241 = vunpack.i.l.s16 %v2116
        %v2242 = vunpack.i.h.s16 %v2116
        %v2243 = vunpack.i.l.s16 %v2117
        %v2244 = vunpack.i.h.s16 %v2117
        %v2245 = vunpack.i.h.s16 %v2132
        %v2246 = vunpack.i.l.s16 %v2139
        %v2247 = vunpack.i.h.s16 %v2139
        %v2248 = vunpack.i.l.s16 %v2140
        %v2249 = vunpack.i.h.s16 %v2140
        %v2250 = vunpack.i.l.s16 %v2141
        %v2251 = vunpack.i.h.s16 %v2141
        %v2252 = vunpack.i.h.s16 %v2156
        %v2253 = vunpack.i.l.s16 %v2163
        %v2254 = vunpack.i.h.s16 %v2163
        %v2255 = vunpack.i.l.s16 %v2164
        %v2256 = vunpack.i.h.s16 %v2164
        %v2257 = vunpack.i.l.s16 %v2165
        %v2258 = vunpack.i.h.s16 %v2165
        %v2259 = vunpack.i.h.s16 %v2180
        %v2260 = vunpack.i.l.s16 %v2187
        %v2261 = vunpack.i.h.s16 %v2187
        %v2262 = vunpack.i.l.s16 %v2188
        %v2263 = vunpack.i.h.s16 %v2188
        %v2264 = vunpack.i.l.s16 %v2189
        %v2265 = vunpack.i.h.s16 %v2189
        %v2266 = vunpack.i.h.s16 %v2204
        %v2267 = vunpack.i.l.s16 %v2211
        %v2268 = vunpack.i.h.s16 %v2211
        %v2269 = vunpack.i.l.s16 %v2212
        %v2270 = vunpack.i.h.s16 %v2212
        %v2271 = vunpack.i.l.s16 %v2213
        %v2272 = vunpack.i.h.s16 %v2213
        %v2273 = vunpack.i.h.s16 %v2228
        %v2274 = vunpack.i.l.s16 %v2235
        %v2275 = vunpack.i.h.s16 %v2235
        %v2276 = vunpack.i.l.s16 %v2236
        %v2277 = vunpack.i.h.s16 %v2236
        %v2278 = vunpack.i.l.s16 %v2237
        %v2279 = vunpack.i.h.s16 %v2237
        %s2280 = sadd.s32 %s1845, 1
        %s2281 = smul.addr %s2280, 4
        %s2282 = scalar_lea.vmem %s1, %s2281
        %v2283 = vld [vmem:[%s2282] sm:$0xf]
        %v2284 = vpack.i.b16 %v2239, %v2238
        %v2285 = vpack.i.b16 %v2241, %v2240
        %v2286 = vpack.i.b16 %v2243, %v2242
        %v2287 = vpack.i.b16 %v2245, %v2244
        %v2288 = vpack.i.b16 %v2247, %v2246
        %v2289 = vpack.i.b16 %v2249, %v2248
        %v2290 = vpack.i.b16 %v2251, %v2250
        %v2291 = vpack.i.b16 %v2253, %v2252
        %v2292 = vpack.i.b16 %v2255, %v2254
        %v2293 = vpack.i.b16 %v2257, %v2256
        %v2294 = vpack.i.b16 %v2259, %v2258
        %v2295 = vpack.i.b16 %v2261, %v2260
        %v2296 = vpack.i.b16 %v2263, %v2262
        %v2297 = vpack.i.b16 %v2265, %v2264
        %v2298 = vpack.i.b16 %v2267, %v2266
        %v2299 = vpack.i.b16 %v2269, %v2268
        %v2300 = vpack.i.b16 %v2271, %v2270
        %v2301 = vpack.i.b16 %v2273, %v2272
        %v2302 = vpack.i.b16 %v2275, %v2274
        %v2303 = vpack.i.b16 %v2277, %v2276
        %v2304 = vpack.i.b16 %v2279, %v2278
        %v2305 = vcombine.low %v2284, %v2285
        %v2306 = vcombine.low %v2286, %v2287
        %v2307 = vcombine.low %v2288, %v2289
        %v2308 = vcombine.low %v2290, %v2291
        %v2310 = vunpack.c.l.s4 1966171168
        %v2311 = vunpack.c.0.s8 %v2310
        %v2312 = vlaneseq
        %v2313 = vshrl.u32 %v2312, 7
        %v2314 = vsub.s32 %v2311, %v2313
        %v2315 = vrot.slane %v2305, %v2314
        %v2317 = vunpack.c.l.s4 1966171168
        %v2318 = vunpack.c.0.s8 %v2317
        %v2319 = vlaneseq
        %v2320 = vshrl.u32 %v2319, 7
        %v2321 = vsub.s32 %v2318, %v2320
        %v2322 = vrot.slane %v2306, %v2321
        %v2324 = vunpack.c.l.s4 1966171168
        %v2325 = vunpack.c.0.s8 %v2324
        %v2326 = vlaneseq
        %v2327 = vshrl.u32 %v2326, 7
        %v2328 = vsub.s32 %v2325, %v2327
        %v2329 = vrot.slane %v2307, %v2328
        %v2331 = vunpack.c.l.s4 1966171168
        %v2332 = vunpack.c.0.s8 %v2331
        %v2333 = vlaneseq
        %v2334 = vshrl.u32 %v2333, 7
        %v2335 = vsub.s32 %v2332, %v2334
        %v2336 = vrot.slane %v2308, %v2335
        %v2337 = vcombine.low %v2315, %v2322
        %v2338 = vcombine.low %v2329, %v2336
        %v2340 = vunpack.c.l.s4 1966171168
        %v2341 = vunpack.c.0.s8 %v2340
        %v2342 = vlaneseq
        %v2343 = vshrl.u32 %v2342, 7
        %v2344 = vsub.s32 %v2341, %v2343
        %v2345 = vrot.slane %v2337, %v2344
        %v2347 = vunpack.c.l.s4 1966171168
        %v2348 = vunpack.c.0.s8 %v2347
        %v2349 = vlaneseq
        %v2350 = vshrl.u32 %v2349, 7
        %v2351 = vsub.s32 %v2348, %v2350
        %v2352 = vrot.slane %v2338, %v2351
        %v2353 = vcombine.low %v2345, %v2352
        %v2354 = vcombine.low %v2292, %v2293
        %v2355 = vcombine.low %v2294, %v2295
        %v2356 = vcombine.low %v2296, %v2297
        %v2357 = vcombine.low %v2298, %v2299
        %v2359 = vunpack.c.l.s4 1966171168
        %v2360 = vunpack.c.0.s8 %v2359
        %v2361 = vlaneseq
        %v2362 = vshrl.u32 %v2361, 7
        %v2363 = vsub.s32 %v2360, %v2362
        %v2364 = vrot.slane %v2354, %v2363
        %v2366 = vunpack.c.l.s4 1966171168
        %v2367 = vunpack.c.0.s8 %v2366
        %v2368 = vlaneseq
        %v2369 = vshrl.u32 %v2368, 7
        %v2370 = vsub.s32 %v2367, %v2369
        %v2371 = vrot.slane %v2355, %v2370
        %v2373 = vunpack.c.l.s4 1966171168
        %v2374 = vunpack.c.0.s8 %v2373
        %v2375 = vlaneseq
        %v2376 = vshrl.u32 %v2375, 7
        %v2377 = vsub.s32 %v2374, %v2376
        %v2378 = vrot.slane %v2356, %v2377
        %v2380 = vunpack.c.l.s4 1966171168
        %v2381 = vunpack.c.0.s8 %v2380
        %v2382 = vlaneseq
        %v2383 = vshrl.u32 %v2382, 7
        %v2384 = vsub.s32 %v2381, %v2383
        %v2385 = vrot.slane %v2357, %v2384
        %v2386 = vcombine.low %v2364, %v2371
        %v2387 = vcombine.low %v2378, %v2385
        %v2389 = vunpack.c.l.s4 1966171168
        %v2390 = vunpack.c.0.s8 %v2389
        %v2391 = vlaneseq
        %v2392 = vshrl.u32 %v2391, 7
        %v2393 = vsub.s32 %v2390, %v2392
        %v2394 = vrot.slane %v2386, %v2393
        %v2396 = vunpack.c.l.s4 1966171168
        %v2397 = vunpack.c.0.s8 %v2396
        %v2398 = vlaneseq
        %v2399 = vshrl.u32 %v2398, 7
        %v2400 = vsub.s32 %v2397, %v2399
        %v2401 = vrot.slane %v2387, %v2400
        %v2402 = vcombine.low %v2394, %v2401
        %v2403 = vcombine.low %v2300, %v2301
        %v2404 = vcombine.low %v2302, %v2303
        %v2406 = vunpack.c.l.s4 1966171168
        %v2407 = vunpack.c.0.s8 %v2406
        %v2408 = vlaneseq
        %v2409 = vshrl.u32 %v2408, 7
        %v2410 = vsub.s32 %v2407, %v2409
        %v2411 = vrot.slane %v2403, %v2410
        %v2413 = vunpack.c.l.s4 1966171168
        %v2414 = vunpack.c.0.s8 %v2413
        %v2415 = vlaneseq
        %v2416 = vshrl.u32 %v2415, 7
        %v2417 = vsub.s32 %v2414, %v2416
        %v2418 = vrot.slane %v2404, %v2417
        %v2420 = vunpack.c.l.s4 1966171168
        %v2421 = vunpack.c.0.s8 %v2420
        %v2422 = vlaneseq
        %v2423 = vshrl.u32 %v2422, 7
        %v2424 = vsub.s32 %v2421, %v2423
        %v2425 = vrot.slane %v2304, %v2424
        %v2426 = vcombine.low %v2411, %v2418
        %v2428 = vunpack.c.l.s4 1966171168
        %v2429 = vunpack.c.0.s8 %v2428
        %v2430 = vlaneseq
        %v2431 = vshrl.u32 %v2430, 7
        %v2432 = vsub.s32 %v2429, %v2431
        %v2433 = vrot.slane %v2426, %v2432
        %v2435 = vunpack.c.l.s4 1966171168
        %v2436 = vunpack.c.0.s8 %v2435
        %v2437 = vlaneseq
        %v2438 = vshrl.u32 %v2437, 7
        %v2439 = vsub.s32 %v2436, %v2438
        %v2440 = vrot.slane %v2425, %v2439
        %v2441 = vcombine.low %v2433, %v2440
        %v2443 = vsel %vm601, %v2353, 0
        %v2446 = vsel %vm601, %v2402, 0
        %v2449 = vsel %vm601, %v2441, 0
        %v2452 = vsel %vm611, %v2283, 0
        %2454 = vmatprep.subr.bf16.mxu0 0
        %2455 = vmatpush1.bf16.msra.mxu0 0
        %2456 = vmatprep.subr.bf16.mxu0 0
        %2457 = vmatpush1.bf16.msra.mxu0 0
        %2458 = vmatprep.subr.bf16.mxu0 0
        %2459 = vmatpush1.bf16.msra.mxu0 0
        %2460 = vmatprep.subr.bf16.mxu0 0
        %2461 = vmatpush1.bf16.msra.mxu0 0
        %2462 = vmatprep.subr.bf16.mxu0 0
        %2463 = vmatpush1.bf16.msra.mxu0 0
        %2464 = vmatprep.subr.bf16.mxu0 0
        %2465 = vmatpush1.bf16.msra.mxu0 0
        %2466 = vmatprep.subr.bf16.mxu0 0
        %2467 = vmatpush1.bf16.msra.mxu0 0
        %2468 = vmatprep.subr.bf16.mxu0 0
        %2469 = vmatpush1.bf16.msra.mxu0 %v2452
        %2470 = vmatprep.subr.bf16.mxu0 0
        %2471 = vmatpush2.bf16.msra.mxu0 0
        %2472 = vmatprep.subr.bf16.mxu0 0
        %2473 = vmatpush2.bf16.msra.mxu0 0
        %2474 = vmatprep.subr.bf16.mxu0 0
        %2475 = vmatpush2.bf16.msra.mxu0 0
        %2476 = vmatprep.subr.bf16.mxu0 0
        %2477 = vmatpush2.bf16.msra.mxu0 0
        %2478 = vmatprep.subr.bf16.mxu0 0
        %2479 = vmatpush2.bf16.msra.mxu0 0
        %2480 = vmatprep.subr.bf16.mxu0 0
        %2481 = vmatpush2.bf16.msra.mxu0 0
        %2482 = vmatprep.subr.bf16.mxu0 0
        %2483 = vmatpush2.bf16.msra.mxu0 0
        %2484 = vmatprep.subr.bf16.mxu0 0
        %2485 = vmatpush2.bf16.msra.mxu0 0
        %2486 = vmatprep.mubr.bf16.mxu0 0
        %2487 = vmatmul.mubr.bf16.gmra.mxu0 %v2443
        %v2488 = vpop.f32.mrf.mxu0
        %v2489 = vadd.f32 0.0, %v2488
        %v2490 = vpop.f32.mrf.mxu0
        %v2491 = vpop.f32.mrf.mxu0
        %v2492 = vadd.f32 0.0, %v2491
        %v2493 = vpop.f32.mrf.mxu0
        %2494 = vmatprep.mubr.bf16.mxu0 0
        %2495 = vmatmul.mubr.bf16.gmra.mxu0 %v2446
        %v2496 = vpop.f32.mrf.mxu0
        %v2497 = vadd.f32 0.0, %v2496
        %v2498 = vpop.f32.mrf.mxu0
        %v2499 = vpop.f32.mrf.mxu0
        %v2500 = vadd.f32 0.0, %v2499
        %v2501 = vpop.f32.mrf.mxu0
        %2502 = vmatprep.mubr.bf16.mxu0 0
        %2503 = vmatmul.mubr.bf16.gmra.mxu0 %v2449
        %v2504 = vpop.f32.mrf.mxu0
        %v2505 = vadd.f32 0.0, %v2504
        %v2506 = vpop.f32.mrf.mxu0
        %v2507 = vpop.f32.mrf.mxu0
        %v2508 = vadd.f32 0.0, %v2507
        %v2509 = vpop.f32.mrf.mxu0
        %2510 = vdwg.mxu0
        %v2511 = vadd.f32 %v2076, %v2489
        %v2512 = vadd.f32 %v2077, %v2492
        %v2513 = vadd.f32 %v2078, %v2497
        %v2514 = vadd.f32 %v2079, %v2500
        %v2515 = vadd.f32 %v2080, %v2505
        %v2516 = vadd.f32 %v2081, %v2508
        %v2517 = vld [vmem:[%s1644] sm:$0xe]
        %v2518 = vld [vmem:[%s1644 + $0x4] sm:$0x1]
        %v2519 = vld [vmem:[%s1644 + $0x8] sm:$0xe]
        %v2520 = vld [vmem:[%s1644 + $0xc] sm:$0x1]
        %v2521 = vld [vmem:[%s1644 + $0x10] sm:$0xe]
        %v2522 = vld [vmem:[%s1644 + $0x14] sm:$0x1]
        %v2523 = vld [vmem:[%s1644 + $0x18] sm:$0xe]
        %v2524 = vld [vmem:[%s1644 + $0x1c] sm:$0x1]
        %v2525 = vld [vmem:[%s1644 + $0x20] sm:$0xe]
        %v2526 = vld [vmem:[%s1644 + $0x24] sm:$0x1]
        %v2527 = vld [vmem:[%s1644 + $0x28] sm:$0xe]
        %v2528 = vld [vmem:[%s1644 + $0x2c] sm:$0x1]
        %v2542 = vunpack.c.l.s4 1966171168
        %v2543 = vunpack.c.0.s8 %v2542
        %v2544 = vlaneseq
        %v2545 = vshrl.u32 %v2544, 7
        %v2546 = vsub.s32 %v2543, %v2545
        %v2547 = vrot.slane %v2517, %v2546
        %v2548 = vcombine.high %v2547, %v2547
        %v2550 = vunpack.c.l.s4 1966171168
        %v2551 = vunpack.c.0.s8 %v2550
        %v2552 = vlaneseq
        %v2553 = vshrl.u32 %v2552, 7
        %v2554 = vsub.s32 %v2551, %v2553
        %v2555 = vrot.slane %v2547, %v2554
        %v2557 = vunpack.c.l.s4 1966171168
        %v2558 = vunpack.c.0.s8 %v2557
        %v2559 = vlaneseq
        %v2560 = vshrl.u32 %v2559, 7
        %v2561 = vsub.s32 %v2558, %v2560
        %v2562 = vrot.slane %v2548, %v2561
        %v2563 = vcombine.high %v2555, %v2555
        %v2564 = vcombine.high %v2562, %v2562
        %v2566 = vunpack.c.l.s4 1966171168
        %v2567 = vunpack.c.0.s8 %v2566
        %v2568 = vlaneseq
        %v2569 = vshrl.u32 %v2568, 7
        %v2570 = vsub.s32 %v2567, %v2569
        %v2571 = vrot.slane %v2518, %v2570
        %v2573 = vunpack.c.l.s4 1966171168
        %v2574 = vunpack.c.0.s8 %v2573
        %v2575 = vlaneseq
        %v2576 = vshrl.u32 %v2575, 7
        %v2577 = vsub.s32 %v2574, %v2576
        %v2578 = vrot.slane %v2571, %v2577
        %v2580 = vunpack.c.l.s4 1966171168
        %v2581 = vunpack.c.0.s8 %v2580
        %v2582 = vlaneseq
        %v2583 = vshrl.u32 %v2582, 7
        %v2584 = vsub.s32 %v2581, %v2583
        %v2585 = vrot.slane %v2519, %v2584
        %v2586 = vcombine.high %v2585, %v2585
        %v2588 = vunpack.c.l.s4 1966171168
        %v2589 = vunpack.c.0.s8 %v2588
        %v2590 = vlaneseq
        %v2591 = vshrl.u32 %v2590, 7
        %v2592 = vsub.s32 %v2589, %v2591
        %v2593 = vrot.slane %v2585, %v2592
        %v2595 = vunpack.c.l.s4 1966171168
        %v2596 = vunpack.c.0.s8 %v2595
        %v2597 = vlaneseq
        %v2598 = vshrl.u32 %v2597, 7
        %v2599 = vsub.s32 %v2596, %v2598
        %v2600 = vrot.slane %v2586, %v2599
        %v2601 = vcombine.high %v2593, %v2593
        %v2602 = vcombine.high %v2600, %v2600
        %v2604 = vunpack.c.l.s4 1966171168
        %v2605 = vunpack.c.0.s8 %v2604
        %v2606 = vlaneseq
        %v2607 = vshrl.u32 %v2606, 7
        %v2608 = vsub.s32 %v2605, %v2607
        %v2609 = vrot.slane %v2520, %v2608
        %v2611 = vunpack.c.l.s4 1966171168
        %v2612 = vunpack.c.0.s8 %v2611
        %v2613 = vlaneseq
        %v2614 = vshrl.u32 %v2613, 7
        %v2615 = vsub.s32 %v2612, %v2614
        %v2616 = vrot.slane %v2609, %v2615
        %v2618 = vunpack.c.l.s4 1966171168
        %v2619 = vunpack.c.0.s8 %v2618
        %v2620 = vlaneseq
        %v2621 = vshrl.u32 %v2620, 7
        %v2622 = vsub.s32 %v2619, %v2621
        %v2623 = vrot.slane %v2521, %v2622
        %v2624 = vcombine.high %v2623, %v2623
        %v2626 = vunpack.c.l.s4 1966171168
        %v2627 = vunpack.c.0.s8 %v2626
        %v2628 = vlaneseq
        %v2629 = vshrl.u32 %v2628, 7
        %v2630 = vsub.s32 %v2627, %v2629
        %v2631 = vrot.slane %v2623, %v2630
        %v2633 = vunpack.c.l.s4 1966171168
        %v2634 = vunpack.c.0.s8 %v2633
        %v2635 = vlaneseq
        %v2636 = vshrl.u32 %v2635, 7
        %v2637 = vsub.s32 %v2634, %v2636
        %v2638 = vrot.slane %v2624, %v2637
        %v2639 = vcombine.high %v2631, %v2631
        %v2640 = vcombine.high %v2638, %v2638
        %v2642 = vunpack.c.l.s4 1966171168
        %v2643 = vunpack.c.0.s8 %v2642
        %v2644 = vlaneseq
        %v2645 = vshrl.u32 %v2644, 7
        %v2646 = vsub.s32 %v2643, %v2645
        %v2647 = vrot.slane %v2522, %v2646
        %v2649 = vunpack.c.l.s4 1966171168
        %v2650 = vunpack.c.0.s8 %v2649
        %v2651 = vlaneseq
        %v2652 = vshrl.u32 %v2651, 7
        %v2653 = vsub.s32 %v2650, %v2652
        %v2654 = vrot.slane %v2647, %v2653
        %v2656 = vunpack.c.l.s4 1966171168
        %v2657 = vunpack.c.0.s8 %v2656
        %v2658 = vlaneseq
        %v2659 = vshrl.u32 %v2658, 7
        %v2660 = vsub.s32 %v2657, %v2659
        %v2661 = vrot.slane %v2523, %v2660
        %v2662 = vcombine.high %v2661, %v2661
        %v2664 = vunpack.c.l.s4 1966171168
        %v2665 = vunpack.c.0.s8 %v2664
        %v2666 = vlaneseq
        %v2667 = vshrl.u32 %v2666, 7
        %v2668 = vsub.s32 %v2665, %v2667
        %v2669 = vrot.slane %v2661, %v2668
        %v2671 = vunpack.c.l.s4 1966171168
        %v2672 = vunpack.c.0.s8 %v2671
        %v2673 = vlaneseq
        %v2674 = vshrl.u32 %v2673, 7
        %v2675 = vsub.s32 %v2672, %v2674
        %v2676 = vrot.slane %v2662, %v2675
        %v2677 = vcombine.high %v2669, %v2669
        %v2678 = vcombine.high %v2676, %v2676
        %v2680 = vunpack.c.l.s4 1966171168
        %v2681 = vunpack.c.0.s8 %v2680
        %v2682 = vlaneseq
        %v2683 = vshrl.u32 %v2682, 7
        %v2684 = vsub.s32 %v2681, %v2683
        %v2685 = vrot.slane %v2524, %v2684
        %v2687 = vunpack.c.l.s4 1966171168
        %v2688 = vunpack.c.0.s8 %v2687
        %v2689 = vlaneseq
        %v2690 = vshrl.u32 %v2689, 7
        %v2691 = vsub.s32 %v2688, %v2690
        %v2692 = vrot.slane %v2685, %v2691
        %v2694 = vunpack.c.l.s4 1966171168
        %v2695 = vunpack.c.0.s8 %v2694
        %v2696 = vlaneseq
        %v2697 = vshrl.u32 %v2696, 7
        %v2698 = vsub.s32 %v2695, %v2697
        %v2699 = vrot.slane %v2525, %v2698
        %v2700 = vcombine.high %v2699, %v2699
        %v2702 = vunpack.c.l.s4 1966171168
        %v2703 = vunpack.c.0.s8 %v2702
        %v2704 = vlaneseq
        %v2705 = vshrl.u32 %v2704, 7
        %v2706 = vsub.s32 %v2703, %v2705
        %v2707 = vrot.slane %v2699, %v2706
        %v2709 = vunpack.c.l.s4 1966171168
        %v2710 = vunpack.c.0.s8 %v2709
        %v2711 = vlaneseq
        %v2712 = vshrl.u32 %v2711, 7
        %v2713 = vsub.s32 %v2710, %v2712
        %v2714 = vrot.slane %v2700, %v2713
        %v2715 = vcombine.high %v2707, %v2707
        %v2716 = vcombine.high %v2714, %v2714
        %v2718 = vunpack.c.l.s4 1966171168
        %v2719 = vunpack.c.0.s8 %v2718
        %v2720 = vlaneseq
        %v2721 = vshrl.u32 %v2720, 7
        %v2722 = vsub.s32 %v2719, %v2721
        %v2723 = vrot.slane %v2526, %v2722
        %v2725 = vunpack.c.l.s4 1966171168
        %v2726 = vunpack.c.0.s8 %v2725
        %v2727 = vlaneseq
        %v2728 = vshrl.u32 %v2727, 7
        %v2729 = vsub.s32 %v2726, %v2728
        %v2730 = vrot.slane %v2723, %v2729
        %v2732 = vunpack.c.l.s4 1966171168
        %v2733 = vunpack.c.0.s8 %v2732
        %v2734 = vlaneseq
        %v2735 = vshrl.u32 %v2734, 7
        %v2736 = vsub.s32 %v2733, %v2735
        %v2737 = vrot.slane %v2527, %v2736
        %v2738 = vcombine.high %v2737, %v2737
        %v2740 = vunpack.c.l.s4 1966171168
        %v2741 = vunpack.c.0.s8 %v2740
        %v2742 = vlaneseq
        %v2743 = vshrl.u32 %v2742, 7
        %v2744 = vsub.s32 %v2741, %v2743
        %v2745 = vrot.slane %v2737, %v2744
        %v2747 = vunpack.c.l.s4 1966171168
        %v2748 = vunpack.c.0.s8 %v2747
        %v2749 = vlaneseq
        %v2750 = vshrl.u32 %v2749, 7
        %v2751 = vsub.s32 %v2748, %v2750
        %v2752 = vrot.slane %v2738, %v2751
        %v2753 = vcombine.high %v2745, %v2745
        %v2754 = vcombine.high %v2752, %v2752
        %v2756 = vunpack.c.l.s4 1966171168
        %v2757 = vunpack.c.0.s8 %v2756
        %v2758 = vlaneseq
        %v2759 = vshrl.u32 %v2758, 7
        %v2760 = vsub.s32 %v2757, %v2759
        %v2761 = vrot.slane %v2528, %v2760
        %v2763 = vunpack.c.l.s4 1966171168
        %v2764 = vunpack.c.0.s8 %v2763
        %v2765 = vlaneseq
        %v2766 = vshrl.u32 %v2765, 7
        %v2767 = vsub.s32 %v2764, %v2766
        %v2768 = vrot.slane %v2761, %v2767
        %v2769 = vunpack.i.l.s16 %v2562
        %v2770 = vunpack.i.h.s16 %v2562
        %v2771 = vunpack.i.l.s16 %v2563
        %v2772 = vunpack.i.h.s16 %v2563
        %v2773 = vunpack.i.l.s16 %v2564
        %v2774 = vunpack.i.h.s16 %v2564
        %v2775 = vunpack.i.l.s16 %v2578
        %v2776 = vunpack.i.l.s16 %v2600
        %v2777 = vunpack.i.h.s16 %v2600
        %v2778 = vunpack.i.l.s16 %v2601
        %v2779 = vunpack.i.h.s16 %v2601
        %v2780 = vunpack.i.l.s16 %v2602
        %v2781 = vunpack.i.h.s16 %v2602
        %v2782 = vunpack.i.l.s16 %v2616
        %v2783 = vunpack.i.l.s16 %v2638
        %v2784 = vunpack.i.h.s16 %v2638
        %v2785 = vunpack.i.l.s16 %v2639
        %v2786 = vunpack.i.h.s16 %v2639
        %v2787 = vunpack.i.l.s16 %v2640
        %v2788 = vunpack.i.h.s16 %v2640
        %v2789 = vunpack.i.l.s16 %v2654
        %v2790 = vunpack.i.l.s16 %v2676
        %v2791 = vunpack.i.h.s16 %v2676
        %v2792 = vunpack.i.l.s16 %v2677
        %v2793 = vunpack.i.h.s16 %v2677
        %v2794 = vunpack.i.l.s16 %v2678
        %v2795 = vunpack.i.h.s16 %v2678
        %v2796 = vunpack.i.l.s16 %v2692
        %v2797 = vunpack.i.l.s16 %v2714
        %v2798 = vunpack.i.h.s16 %v2714
        %v2799 = vunpack.i.l.s16 %v2715
        %v2800 = vunpack.i.h.s16 %v2715
        %v2801 = vunpack.i.l.s16 %v2716
        %v2802 = vunpack.i.h.s16 %v2716
        %v2803 = vunpack.i.l.s16 %v2730
        %v2804 = vunpack.i.l.s16 %v2752
        %v2805 = vunpack.i.h.s16 %v2752
        %v2806 = vunpack.i.l.s16 %v2753
        %v2807 = vunpack.i.h.s16 %v2753
        %v2808 = vunpack.i.l.s16 %v2754
        %v2809 = vunpack.i.h.s16 %v2754
        %v2810 = vunpack.i.l.s16 %v2768
        %s2811 = sadd.s32 %s1845, 2
        %s2812 = smul.addr %s2811, 4
        %s2813 = scalar_lea.vmem %s1, %s2812
        %v2814 = vld [vmem:[%s2813] sm:$0xf]
        %v2815 = vpack.i.b16 %v2770, %v2769
        %v2816 = vpack.i.b16 %v2772, %v2771
        %v2817 = vpack.i.b16 %v2774, %v2773
        %v2818 = vpack.i.b16 %v2776, %v2775
        %v2819 = vpack.i.b16 %v2778, %v2777
        %v2820 = vpack.i.b16 %v2780, %v2779
        %v2821 = vpack.i.b16 %v2782, %v2781
        %v2822 = vpack.i.b16 %v2784, %v2783
        %v2823 = vpack.i.b16 %v2786, %v2785
        %v2824 = vpack.i.b16 %v2788, %v2787
        %v2825 = vpack.i.b16 %v2790, %v2789
        %v2826 = vpack.i.b16 %v2792, %v2791
        %v2827 = vpack.i.b16 %v2794, %v2793
        %v2828 = vpack.i.b16 %v2796, %v2795
        %v2829 = vpack.i.b16 %v2798, %v2797
        %v2830 = vpack.i.b16 %v2800, %v2799
        %v2831 = vpack.i.b16 %v2802, %v2801
        %v2832 = vpack.i.b16 %v2804, %v2803
        %v2833 = vpack.i.b16 %v2806, %v2805
        %v2834 = vpack.i.b16 %v2808, %v2807
        %v2835 = vpack.i.b16 %v2810, %v2809
        %v2836 = vcombine.low %v2815, %v2816
        %v2837 = vcombine.low %v2817, %v2818
        %v2838 = vcombine.low %v2819, %v2820
        %v2839 = vcombine.low %v2821, %v2822
        %v2841 = vunpack.c.l.s4 1966171168
        %v2842 = vunpack.c.0.s8 %v2841
        %v2843 = vlaneseq
        %v2844 = vshrl.u32 %v2843, 7
        %v2845 = vsub.s32 %v2842, %v2844
        %v2846 = vrot.slane %v2836, %v2845
        %v2848 = vunpack.c.l.s4 1966171168
        %v2849 = vunpack.c.0.s8 %v2848
        %v2850 = vlaneseq
        %v2851 = vshrl.u32 %v2850, 7
        %v2852 = vsub.s32 %v2849, %v2851
        %v2853 = vrot.slane %v2837, %v2852
        %v2855 = vunpack.c.l.s4 1966171168
        %v2856 = vunpack.c.0.s8 %v2855
        %v2857 = vlaneseq
        %v2858 = vshrl.u32 %v2857, 7
        %v2859 = vsub.s32 %v2856, %v2858
        %v2860 = vrot.slane %v2838, %v2859
        %v2862 = vunpack.c.l.s4 1966171168
        %v2863 = vunpack.c.0.s8 %v2862
        %v2864 = vlaneseq
        %v2865 = vshrl.u32 %v2864, 7
        %v2866 = vsub.s32 %v2863, %v2865
        %v2867 = vrot.slane %v2839, %v2866
        %v2868 = vcombine.low %v2846, %v2853
        %v2869 = vcombine.low %v2860, %v2867
        %v2871 = vunpack.c.l.s4 1966171168
        %v2872 = vunpack.c.0.s8 %v2871
        %v2873 = vlaneseq
        %v2874 = vshrl.u32 %v2873, 7
        %v2875 = vsub.s32 %v2872, %v2874
        %v2876 = vrot.slane %v2868, %v2875
        %v2878 = vunpack.c.l.s4 1966171168
        %v2879 = vunpack.c.0.s8 %v2878
        %v2880 = vlaneseq
        %v2881 = vshrl.u32 %v2880, 7
        %v2882 = vsub.s32 %v2879, %v2881
        %v2883 = vrot.slane %v2869, %v2882
        %v2884 = vcombine.low %v2876, %v2883
        %v2885 = vcombine.low %v2823, %v2824
        %v2886 = vcombine.low %v2825, %v2826
        %v2887 = vcombine.low %v2827, %v2828
        %v2888 = vcombine.low %v2829, %v2830
        %v2890 = vunpack.c.l.s4 1966171168
        %v2891 = vunpack.c.0.s8 %v2890
        %v2892 = vlaneseq
        %v2893 = vshrl.u32 %v2892, 7
        %v2894 = vsub.s32 %v2891, %v2893
        %v2895 = vrot.slane %v2885, %v2894
        %v2897 = vunpack.c.l.s4 1966171168
        %v2898 = vunpack.c.0.s8 %v2897
        %v2899 = vlaneseq
        %v2900 = vshrl.u32 %v2899, 7
        %v2901 = vsub.s32 %v2898, %v2900
        %v2902 = vrot.slane %v2886, %v2901
        %v2904 = vunpack.c.l.s4 1966171168
        %v2905 = vunpack.c.0.s8 %v2904
        %v2906 = vlaneseq
        %v2907 = vshrl.u32 %v2906, 7
        %v2908 = vsub.s32 %v2905, %v2907
        %v2909 = vrot.slane %v2887, %v2908
        %v2911 = vunpack.c.l.s4 1966171168
        %v2912 = vunpack.c.0.s8 %v2911
        %v2913 = vlaneseq
        %v2914 = vshrl.u32 %v2913, 7
        %v2915 = vsub.s32 %v2912, %v2914
        %v2916 = vrot.slane %v2888, %v2915
        %v2917 = vcombine.low %v2895, %v2902
        %v2918 = vcombine.low %v2909, %v2916
        %v2920 = vunpack.c.l.s4 1966171168
        %v2921 = vunpack.c.0.s8 %v2920
        %v2922 = vlaneseq
        %v2923 = vshrl.u32 %v2922, 7
        %v2924 = vsub.s32 %v2921, %v2923
        %v2925 = vrot.slane %v2917, %v2924
        %v2927 = vunpack.c.l.s4 1966171168
        %v2928 = vunpack.c.0.s8 %v2927
        %v2929 = vlaneseq
        %v2930 = vshrl.u32 %v2929, 7
        %v2931 = vsub.s32 %v2928, %v2930
        %v2932 = vrot.slane %v2918, %v2931
        %v2933 = vcombine.low %v2925, %v2932
        %v2934 = vcombine.low %v2831, %v2832
        %v2935 = vcombine.low %v2833, %v2834
        %v2937 = vunpack.c.l.s4 1966171168
        %v2938 = vunpack.c.0.s8 %v2937
        %v2939 = vlaneseq
        %v2940 = vshrl.u32 %v2939, 7
        %v2941 = vsub.s32 %v2938, %v2940
        %v2942 = vrot.slane %v2934, %v2941
        %v2944 = vunpack.c.l.s4 1966171168
        %v2945 = vunpack.c.0.s8 %v2944
        %v2946 = vlaneseq
        %v2947 = vshrl.u32 %v2946, 7
        %v2948 = vsub.s32 %v2945, %v2947
        %v2949 = vrot.slane %v2935, %v2948
        %v2951 = vunpack.c.l.s4 1966171168
        %v2952 = vunpack.c.0.s8 %v2951
        %v2953 = vlaneseq
        %v2954 = vshrl.u32 %v2953, 7
        %v2955 = vsub.s32 %v2952, %v2954
        %v2956 = vrot.slane %v2835, %v2955
        %v2957 = vcombine.low %v2942, %v2949
        %v2959 = vunpack.c.l.s4 1966171168
        %v2960 = vunpack.c.0.s8 %v2959
        %v2961 = vlaneseq
        %v2962 = vshrl.u32 %v2961, 7
        %v2963 = vsub.s32 %v2960, %v2962
        %v2964 = vrot.slane %v2957, %v2963
        %v2966 = vunpack.c.l.s4 1966171168
        %v2967 = vunpack.c.0.s8 %v2966
        %v2968 = vlaneseq
        %v2969 = vshrl.u32 %v2968, 7
        %v2970 = vsub.s32 %v2967, %v2969
        %v2971 = vrot.slane %v2956, %v2970
        %v2972 = vcombine.low %v2964, %v2971
        %v2974 = vsel %vm601, %v2884, 0
        %v2977 = vsel %vm601, %v2933, 0
        %v2980 = vsel %vm601, %v2972, 0
        %v2983 = vsel %vm611, %v2814, 0
        %2985 = vmatprep.subr.bf16.mxu0 0
        %2986 = vmatpush1.bf16.msra.mxu0 0
        %2987 = vmatprep.subr.bf16.mxu0 0
        %2988 = vmatpush1.bf16.msra.mxu0 0
        %2989 = vmatprep.subr.bf16.mxu0 0
        %2990 = vmatpush1.bf16.msra.mxu0 0
        %2991 = vmatprep.subr.bf16.mxu0 0
        %2992 = vmatpush1.bf16.msra.mxu0 0
        %2993 = vmatprep.subr.bf16.mxu0 0
        %2994 = vmatpush1.bf16.msra.mxu0 0
        %2995 = vmatprep.subr.bf16.mxu0 0
        %2996 = vmatpush1.bf16.msra.mxu0 0
        %2997 = vmatprep.subr.bf16.mxu0 0
        %2998 = vmatpush1.bf16.msra.mxu0 0
        %2999 = vmatprep.subr.bf16.mxu0 0
        %3000 = vmatpush1.bf16.msra.mxu0 %v2983
        %3001 = vmatprep.subr.bf16.mxu0 0
        %3002 = vmatpush2.bf16.msra.mxu0 0
        %3003 = vmatprep.subr.bf16.mxu0 0
        %3004 = vmatpush2.bf16.msra.mxu0 0
        %3005 = vmatprep.subr.bf16.mxu0 0
        %3006 = vmatpush2.bf16.msra.mxu0 0
        %3007 = vmatprep.subr.bf16.mxu0 0
        %3008 = vmatpush2.bf16.msra.mxu0 0
        %3009 = vmatprep.subr.bf16.mxu0 0
        %3010 = vmatpush2.bf16.msra.mxu0 0
        %3011 = vmatprep.subr.bf16.mxu0 0
        %3012 = vmatpush2.bf16.msra.mxu0 0
        %3013 = vmatprep.subr.bf16.mxu0 0
        %3014 = vmatpush2.bf16.msra.mxu0 0
        %3015 = vmatprep.subr.bf16.mxu0 0
        %3016 = vmatpush2.bf16.msra.mxu0 0
        %3017 = vmatprep.mubr.bf16.mxu0 0
        %3018 = vmatmul.mubr.bf16.gmra.mxu0 %v2974
        %v3019 = vpop.f32.mrf.mxu0
        %v3020 = vadd.f32 0.0, %v3019
        %v3021 = vpop.f32.mrf.mxu0
        %v3022 = vpop.f32.mrf.mxu0
        %v3023 = vadd.f32 0.0, %v3022
        %v3024 = vpop.f32.mrf.mxu0
        %3025 = vmatprep.mubr.bf16.mxu0 0
        %3026 = vmatmul.mubr.bf16.gmra.mxu0 %v2977
        %v3027 = vpop.f32.mrf.mxu0
        %v3028 = vadd.f32 0.0, %v3027
        %v3029 = vpop.f32.mrf.mxu0
        %v3030 = vpop.f32.mrf.mxu0
        %v3031 = vadd.f32 0.0, %v3030
        %v3032 = vpop.f32.mrf.mxu0
        %3033 = vmatprep.mubr.bf16.mxu0 0
        %3034 = vmatmul.mubr.bf16.gmra.mxu0 %v2980
        %v3035 = vpop.f32.mrf.mxu0
        %v3036 = vadd.f32 0.0, %v3035
        %v3037 = vpop.f32.mrf.mxu0
        %v3038 = vpop.f32.mrf.mxu0
        %v3039 = vadd.f32 0.0, %v3038
        %v3040 = vpop.f32.mrf.mxu0
        %3041 = vdwg.mxu0
        %v3042 = vadd.f32 %v2511, %v3020
        %v3043 = vadd.f32 %v2512, %v3023
        %v3044 = vadd.f32 %v2513, %v3028
        %v3045 = vadd.f32 %v2514, %v3031
        %v3046 = vadd.f32 %v2515, %v3036
        %v3047 = vadd.f32 %v2516, %v3039
        %s3048 = scalar_lea.vmem %s209, 16
        %v3049 = vld [vmem:[%s3048] sm:$0xf]
        %v3050 = vld [vmem:[%s3048 + $0x8] sm:$0xf]
        %v3051 = vld [vmem:[%s3048 + $0x10] sm:$0xf]
        %v3052 = vld [vmem:[%s3048 + $0x18] sm:$0xf]
        %v3053 = vld [vmem:[%s3048 + $0x20] sm:$0xf]
        %v3054 = vld [vmem:[%s3048 + $0x28] sm:$0xf]
        %v3062 = vunpack.c.l.s4 1966171168
        %v3063 = vunpack.c.0.s8 %v3062
        %v3064 = vlaneseq
        %v3065 = vshrl.u32 %v3064, 7
        %v3066 = vsub.s32 %v3063, %v3065
        %v3067 = vrot.slane %v3049, %v3066
        %v3068 = vcombine.high %v3067, %v3067
        %v3070 = vunpack.c.l.s4 1966171168
        %v3071 = vunpack.c.0.s8 %v3070
        %v3072 = vlaneseq
        %v3073 = vshrl.u32 %v3072, 7
        %v3074 = vsub.s32 %v3071, %v3073
        %v3075 = vrot.slane %v3067, %v3074
        %v3077 = vunpack.c.l.s4 1966171168
        %v3078 = vunpack.c.0.s8 %v3077
        %v3079 = vlaneseq
        %v3080 = vshrl.u32 %v3079, 7
        %v3081 = vsub.s32 %v3078, %v3080
        %v3082 = vrot.slane %v3068, %v3081
        %v3083 = vcombine.high %v3075, %v3075
        %v3084 = vcombine.high %v3082, %v3082
        %v3086 = vunpack.c.l.s4 1966171168
        %v3087 = vunpack.c.0.s8 %v3086
        %v3088 = vlaneseq
        %v3089 = vshrl.u32 %v3088, 7
        %v3090 = vsub.s32 %v3087, %v3089
        %v3091 = vrot.slane %v3050, %v3090
        %v3092 = vcombine.high %v3091, %v3091
        %v3094 = vunpack.c.l.s4 1966171168
        %v3095 = vunpack.c.0.s8 %v3094
        %v3096 = vlaneseq
        %v3097 = vshrl.u32 %v3096, 7
        %v3098 = vsub.s32 %v3095, %v3097
        %v3099 = vrot.slane %v3091, %v3098
        %v3101 = vunpack.c.l.s4 1966171168
        %v3102 = vunpack.c.0.s8 %v3101
        %v3103 = vlaneseq
        %v3104 = vshrl.u32 %v3103, 7
        %v3105 = vsub.s32 %v3102, %v3104
        %v3106 = vrot.slane %v3092, %v3105
        %v3107 = vcombine.high %v3099, %v3099
        %v3108 = vcombine.high %v3106, %v3106
        %v3110 = vunpack.c.l.s4 1966171168
        %v3111 = vunpack.c.0.s8 %v3110
        %v3112 = vlaneseq
        %v3113 = vshrl.u32 %v3112, 7
        %v3114 = vsub.s32 %v3111, %v3113
        %v3115 = vrot.slane %v3051, %v3114
        %v3116 = vcombine.high %v3115, %v3115
        %v3118 = vunpack.c.l.s4 1966171168
        %v3119 = vunpack.c.0.s8 %v3118
        %v3120 = vlaneseq
        %v3121 = vshrl.u32 %v3120, 7
        %v3122 = vsub.s32 %v3119, %v3121
        %v3123 = vrot.slane %v3115, %v3122
        %v3125 = vunpack.c.l.s4 1966171168
        %v3126 = vunpack.c.0.s8 %v3125
        %v3127 = vlaneseq
        %v3128 = vshrl.u32 %v3127, 7
        %v3129 = vsub.s32 %v3126, %v3128
        %v3130 = vrot.slane %v3116, %v3129
        %v3131 = vcombine.high %v3123, %v3123
        %v3132 = vcombine.high %v3130, %v3130
        %v3134 = vunpack.c.l.s4 1966171168
        %v3135 = vunpack.c.0.s8 %v3134
        %v3136 = vlaneseq
        %v3137 = vshrl.u32 %v3136, 7
        %v3138 = vsub.s32 %v3135, %v3137
        %v3139 = vrot.slane %v3052, %v3138
        %v3140 = vcombine.high %v3139, %v3139
        %v3142 = vunpack.c.l.s4 1966171168
        %v3143 = vunpack.c.0.s8 %v3142
        %v3144 = vlaneseq
        %v3145 = vshrl.u32 %v3144, 7
        %v3146 = vsub.s32 %v3143, %v3145
        %v3147 = vrot.slane %v3139, %v3146
        %v3149 = vunpack.c.l.s4 1966171168
        %v3150 = vunpack.c.0.s8 %v3149
        %v3151 = vlaneseq
        %v3152 = vshrl.u32 %v3151, 7
        %v3153 = vsub.s32 %v3150, %v3152
        %v3154 = vrot.slane %v3140, %v3153
        %v3155 = vcombine.high %v3147, %v3147
        %v3156 = vcombine.high %v3154, %v3154
        %v3158 = vunpack.c.l.s4 1966171168
        %v3159 = vunpack.c.0.s8 %v3158
        %v3160 = vlaneseq
        %v3161 = vshrl.u32 %v3160, 7
        %v3162 = vsub.s32 %v3159, %v3161
        %v3163 = vrot.slane %v3053, %v3162
        %v3164 = vcombine.high %v3163, %v3163
        %v3166 = vunpack.c.l.s4 1966171168
        %v3167 = vunpack.c.0.s8 %v3166
        %v3168 = vlaneseq
        %v3169 = vshrl.u32 %v3168, 7
        %v3170 = vsub.s32 %v3167, %v3169
        %v3171 = vrot.slane %v3163, %v3170
        %v3173 = vunpack.c.l.s4 1966171168
        %v3174 = vunpack.c.0.s8 %v3173
        %v3175 = vlaneseq
        %v3176 = vshrl.u32 %v3175, 7
        %v3177 = vsub.s32 %v3174, %v3176
        %v3178 = vrot.slane %v3164, %v3177
        %v3179 = vcombine.high %v3171, %v3171
        %v3180 = vcombine.high %v3178, %v3178
        %v3182 = vunpack.c.l.s4 1966171168
        %v3183 = vunpack.c.0.s8 %v3182
        %v3184 = vlaneseq
        %v3185 = vshrl.u32 %v3184, 7
        %v3186 = vsub.s32 %v3183, %v3185
        %v3187 = vrot.slane %v3054, %v3186
        %v3188 = vcombine.high %v3187, %v3187
        %v3190 = vunpack.c.l.s4 1966171168
        %v3191 = vunpack.c.0.s8 %v3190
        %v3192 = vlaneseq
        %v3193 = vshrl.u32 %v3192, 7
        %v3194 = vsub.s32 %v3191, %v3193
        %v3195 = vrot.slane %v3187, %v3194
        %v3197 = vunpack.c.l.s4 1966171168
        %v3198 = vunpack.c.0.s8 %v3197
        %v3199 = vlaneseq
        %v3200 = vshrl.u32 %v3199, 7
        %v3201 = vsub.s32 %v3198, %v3200
        %v3202 = vrot.slane %v3188, %v3201
        %v3203 = vcombine.high %v3195, %v3195
        %v3204 = vcombine.high %v3202, %v3202
        %v3205 = vunpack.i.l.s16 %v3075
        %v3206 = vunpack.i.h.s16 %v3075
        %v3207 = vunpack.i.l.s16 %v3082
        %v3208 = vunpack.i.h.s16 %v3082
        %v3209 = vunpack.i.l.s16 %v3083
        %v3210 = vunpack.i.h.s16 %v3083
        %v3211 = vunpack.i.l.s16 %v3084
        %v3212 = vunpack.i.l.s16 %v3099
        %v3213 = vunpack.i.h.s16 %v3099
        %v3214 = vunpack.i.l.s16 %v3106
        %v3215 = vunpack.i.h.s16 %v3106
        %v3216 = vunpack.i.l.s16 %v3107
        %v3217 = vunpack.i.h.s16 %v3107
        %v3218 = vunpack.i.l.s16 %v3108
        %v3219 = vunpack.i.l.s16 %v3123
        %v3220 = vunpack.i.h.s16 %v3123
        %v3221 = vunpack.i.l.s16 %v3130
        %v3222 = vunpack.i.h.s16 %v3130
        %v3223 = vunpack.i.l.s16 %v3131
        %v3224 = vunpack.i.h.s16 %v3131
        %v3225 = vunpack.i.l.s16 %v3132
        %v3226 = vunpack.i.l.s16 %v3147
        %v3227 = vunpack.i.h.s16 %v3147
        %v3228 = vunpack.i.l.s16 %v3154
        %v3229 = vunpack.i.h.s16 %v3154
        %v3230 = vunpack.i.l.s16 %v3155
        %v3231 = vunpack.i.h.s16 %v3155
        %v3232 = vunpack.i.l.s16 %v3156
        %v3233 = vunpack.i.l.s16 %v3171
        %v3234 = vunpack.i.h.s16 %v3171
        %v3235 = vunpack.i.l.s16 %v3178
        %v3236 = vunpack.i.h.s16 %v3178
        %v3237 = vunpack.i.l.s16 %v3179
        %v3238 = vunpack.i.h.s16 %v3179
        %v3239 = vunpack.i.l.s16 %v3180
        %v3240 = vunpack.i.l.s16 %v3195
        %v3241 = vunpack.i.h.s16 %v3195
        %v3242 = vunpack.i.l.s16 %v3202
        %v3243 = vunpack.i.h.s16 %v3202
        %v3244 = vunpack.i.l.s16 %v3203
        %v3245 = vunpack.i.h.s16 %v3203
        %v3246 = vunpack.i.l.s16 %v3204
        %s3247 = sadd.s32 %s1843, 2
        %s3248 = smul.u32 %s3247, 3
        %s3249 = smul.addr %s3248, 4
        %s3250 = scalar_lea.vmem %s1, %s3249
        %v3251 = vld [vmem:[%s3250] sm:$0xf]
        %v3252 = vpack.i.b16 %v3206, %v3205
        %v3253 = vpack.i.b16 %v3208, %v3207
        %v3254 = vpack.i.b16 %v3210, %v3209
        %v3255 = vpack.i.b16 %v3212, %v3211
        %v3256 = vpack.i.b16 %v3214, %v3213
        %v3257 = vpack.i.b16 %v3216, %v3215
        %v3258 = vpack.i.b16 %v3218, %v3217
        %v3259 = vpack.i.b16 %v3220, %v3219
        %v3260 = vpack.i.b16 %v3222, %v3221
        %v3261 = vpack.i.b16 %v3224, %v3223
        %v3262 = vpack.i.b16 %v3226, %v3225
        %v3263 = vpack.i.b16 %v3228, %v3227
        %v3264 = vpack.i.b16 %v3230, %v3229
        %v3265 = vpack.i.b16 %v3232, %v3231
        %v3266 = vpack.i.b16 %v3234, %v3233
        %v3267 = vpack.i.b16 %v3236, %v3235
        %v3268 = vpack.i.b16 %v3238, %v3237
        %v3269 = vpack.i.b16 %v3240, %v3239
        %v3270 = vpack.i.b16 %v3242, %v3241
        %v3271 = vpack.i.b16 %v3244, %v3243
        %v3272 = vpack.i.b16 %v3246, %v3245
        %v3273 = vcombine.low %v3252, %v3253
        %v3274 = vcombine.low %v3254, %v3255
        %v3275 = vcombine.low %v3256, %v3257
        %v3276 = vcombine.low %v3258, %v3259
        %v3278 = vunpack.c.l.s4 1966171168
        %v3279 = vunpack.c.0.s8 %v3278
        %v3280 = vlaneseq
        %v3281 = vshrl.u32 %v3280, 7
        %v3282 = vsub.s32 %v3279, %v3281
        %v3283 = vrot.slane %v3273, %v3282
        %v3285 = vunpack.c.l.s4 1966171168
        %v3286 = vunpack.c.0.s8 %v3285
        %v3287 = vlaneseq
        %v3288 = vshrl.u32 %v3287, 7
        %v3289 = vsub.s32 %v3286, %v3288
        %v3290 = vrot.slane %v3274, %v3289
        %v3292 = vunpack.c.l.s4 1966171168
        %v3293 = vunpack.c.0.s8 %v3292
        %v3294 = vlaneseq
        %v3295 = vshrl.u32 %v3294, 7
        %v3296 = vsub.s32 %v3293, %v3295
        %v3297 = vrot.slane %v3275, %v3296
        %v3299 = vunpack.c.l.s4 1966171168
        %v3300 = vunpack.c.0.s8 %v3299
        %v3301 = vlaneseq
        %v3302 = vshrl.u32 %v3301, 7
        %v3303 = vsub.s32 %v3300, %v3302
        %v3304 = vrot.slane %v3276, %v3303
        %v3305 = vcombine.low %v3283, %v3290
        %v3306 = vcombine.low %v3297, %v3304
        %v3308 = vunpack.c.l.s4 1966171168
        %v3309 = vunpack.c.0.s8 %v3308
        %v3310 = vlaneseq
        %v3311 = vshrl.u32 %v3310, 7
        %v3312 = vsub.s32 %v3309, %v3311
        %v3313 = vrot.slane %v3305, %v3312
        %v3315 = vunpack.c.l.s4 1966171168
        %v3316 = vunpack.c.0.s8 %v3315
        %v3317 = vlaneseq
        %v3318 = vshrl.u32 %v3317, 7
        %v3319 = vsub.s32 %v3316, %v3318
        %v3320 = vrot.slane %v3306, %v3319
        %v3321 = vcombine.low %v3313, %v3320
        %v3322 = vcombine.low %v3260, %v3261
        %v3323 = vcombine.low %v3262, %v3263
        %v3324 = vcombine.low %v3264, %v3265
        %v3325 = vcombine.low %v3266, %v3267
        %v3327 = vunpack.c.l.s4 1966171168
        %v3328 = vunpack.c.0.s8 %v3327
        %v3329 = vlaneseq
        %v3330 = vshrl.u32 %v3329, 7
        %v3331 = vsub.s32 %v3328, %v3330
        %v3332 = vrot.slane %v3322, %v3331
        %v3334 = vunpack.c.l.s4 1966171168
        %v3335 = vunpack.c.0.s8 %v3334
        %v3336 = vlaneseq
        %v3337 = vshrl.u32 %v3336, 7
        %v3338 = vsub.s32 %v3335, %v3337
        %v3339 = vrot.slane %v3323, %v3338
        %v3341 = vunpack.c.l.s4 1966171168
        %v3342 = vunpack.c.0.s8 %v3341
        %v3343 = vlaneseq
        %v3344 = vshrl.u32 %v3343, 7
        %v3345 = vsub.s32 %v3342, %v3344
        %v3346 = vrot.slane %v3324, %v3345
        %v3348 = vunpack.c.l.s4 1966171168
        %v3349 = vunpack.c.0.s8 %v3348
        %v3350 = vlaneseq
        %v3351 = vshrl.u32 %v3350, 7
        %v3352 = vsub.s32 %v3349, %v3351
        %v3353 = vrot.slane %v3325, %v3352
        %v3354 = vcombine.low %v3332, %v3339
        %v3355 = vcombine.low %v3346, %v3353
        %v3357 = vunpack.c.l.s4 1966171168
        %v3358 = vunpack.c.0.s8 %v3357
        %v3359 = vlaneseq
        %v3360 = vshrl.u32 %v3359, 7
        %v3361 = vsub.s32 %v3358, %v3360
        %v3362 = vrot.slane %v3354, %v3361
        %v3364 = vunpack.c.l.s4 1966171168
        %v3365 = vunpack.c.0.s8 %v3364
        %v3366 = vlaneseq
        %v3367 = vshrl.u32 %v3366, 7
        %v3368 = vsub.s32 %v3365, %v3367
        %v3369 = vrot.slane %v3355, %v3368
        %v3370 = vcombine.low %v3362, %v3369
        %v3371 = vcombine.low %v3268, %v3269
        %v3372 = vcombine.low %v3270, %v3271
        %v3374 = vunpack.c.l.s4 1966171168
        %v3375 = vunpack.c.0.s8 %v3374
        %v3376 = vlaneseq
        %v3377 = vshrl.u32 %v3376, 7
        %v3378 = vsub.s32 %v3375, %v3377
        %v3379 = vrot.slane %v3371, %v3378
        %v3381 = vunpack.c.l.s4 1966171168
        %v3382 = vunpack.c.0.s8 %v3381
        %v3383 = vlaneseq
        %v3384 = vshrl.u32 %v3383, 7
        %v3385 = vsub.s32 %v3382, %v3384
        %v3386 = vrot.slane %v3372, %v3385
        %v3388 = vunpack.c.l.s4 1966171168
        %v3389 = vunpack.c.0.s8 %v3388
        %v3390 = vlaneseq
        %v3391 = vshrl.u32 %v3390, 7
        %v3392 = vsub.s32 %v3389, %v3391
        %v3393 = vrot.slane %v3272, %v3392
        %v3394 = vcombine.low %v3379, %v3386
        %v3396 = vunpack.c.l.s4 1966171168
        %v3397 = vunpack.c.0.s8 %v3396
        %v3398 = vlaneseq
        %v3399 = vshrl.u32 %v3398, 7
        %v3400 = vsub.s32 %v3397, %v3399
        %v3401 = vrot.slane %v3394, %v3400
        %v3403 = vunpack.c.l.s4 1966171168
        %v3404 = vunpack.c.0.s8 %v3403
        %v3405 = vlaneseq
        %v3406 = vshrl.u32 %v3405, 7
        %v3407 = vsub.s32 %v3404, %v3406
        %v3408 = vrot.slane %v3393, %v3407
        %v3409 = vcombine.low %v3401, %v3408
        %v3411 = vsel %vm601, %v3321, 0
        %v3414 = vsel %vm601, %v3370, 0
        %v3417 = vsel %vm601, %v3409, 0
        %v3420 = vsel %vm611, %v3251, 0
        %3422 = vmatprep.subr.bf16.mxu0 0
        %3423 = vmatpush1.bf16.msra.mxu0 0
        %3424 = vmatprep.subr.bf16.mxu0 0
        %3425 = vmatpush1.bf16.msra.mxu0 0
        %3426 = vmatprep.subr.bf16.mxu0 0
        %3427 = vmatpush1.bf16.msra.mxu0 0
        %3428 = vmatprep.subr.bf16.mxu0 0
        %3429 = vmatpush1.bf16.msra.mxu0 0
        %3430 = vmatprep.subr.bf16.mxu0 0
        %3431 = vmatpush1.bf16.msra.mxu0 0
        %3432 = vmatprep.subr.bf16.mxu0 0
        %3433 = vmatpush1.bf16.msra.mxu0 0
        %3434 = vmatprep.subr.bf16.mxu0 0
        %3435 = vmatpush1.bf16.msra.mxu0 0
        %3436 = vmatprep.subr.bf16.mxu0 0
        %3437 = vmatpush1.bf16.msra.mxu0 %v3420
        %3438 = vmatprep.subr.bf16.mxu0 0
        %3439 = vmatpush2.bf16.msra.mxu0 0
        %3440 = vmatprep.subr.bf16.mxu0 0
        %3441 = vmatpush2.bf16.msra.mxu0 0
        %3442 = vmatprep.subr.bf16.mxu0 0
        %3443 = vmatpush2.bf16.msra.mxu0 0
        %3444 = vmatprep.subr.bf16.mxu0 0
        %3445 = vmatpush2.bf16.msra.mxu0 0
        %3446 = vmatprep.subr.bf16.mxu0 0
        %3447 = vmatpush2.bf16.msra.mxu0 0
        %3448 = vmatprep.subr.bf16.mxu0 0
        %3449 = vmatpush2.bf16.msra.mxu0 0
        %3450 = vmatprep.subr.bf16.mxu0 0
        %3451 = vmatpush2.bf16.msra.mxu0 0
        %3452 = vmatprep.subr.bf16.mxu0 0
        %3453 = vmatpush2.bf16.msra.mxu0 0
        %3454 = vmatprep.mubr.bf16.mxu0 0
        %3455 = vmatmul.mubr.bf16.gmra.mxu0 %v3411
        %v3456 = vpop.f32.mrf.mxu0
        %v3457 = vadd.f32 0.0, %v3456
        %v3458 = vpop.f32.mrf.mxu0
        %v3459 = vpop.f32.mrf.mxu0
        %v3460 = vadd.f32 0.0, %v3459
        %v3461 = vpop.f32.mrf.mxu0
        %3462 = vmatprep.mubr.bf16.mxu0 0
        %3463 = vmatmul.mubr.bf16.gmra.mxu0 %v3414
        %v3464 = vpop.f32.mrf.mxu0
        %v3465 = vadd.f32 0.0, %v3464
        %v3466 = vpop.f32.mrf.mxu0
        %v3467 = vpop.f32.mrf.mxu0
        %v3468 = vadd.f32 0.0, %v3467
        %v3469 = vpop.f32.mrf.mxu0
        %3470 = vmatprep.mubr.bf16.mxu0 0
        %3471 = vmatmul.mubr.bf16.gmra.mxu0 %v3417
        %v3472 = vpop.f32.mrf.mxu0
        %v3473 = vadd.f32 0.0, %v3472
        %v3474 = vpop.f32.mrf.mxu0
        %v3475 = vpop.f32.mrf.mxu0
        %v3476 = vadd.f32 0.0, %v3475
        %v3477 = vpop.f32.mrf.mxu0
        %3478 = vdwg.mxu0
        %v3479 = vadd.f32 %v3042, %v3457
        %v3480 = vadd.f32 %v3043, %v3460
        %v3481 = vadd.f32 %v3044, %v3465
        %v3482 = vadd.f32 %v3045, %v3468
        %v3483 = vadd.f32 %v3046, %v3473
        %v3484 = vadd.f32 %v3047, %v3476
        %v3485 = vld [vmem:[%s3048] sm:$0xf]
        %v3486 = vld [vmem:[%s3048 + $0x8] sm:$0xf]
        %v3487 = vld [vmem:[%s3048 + $0x10] sm:$0xf]
        %v3488 = vld [vmem:[%s3048 + $0x18] sm:$0xf]
        %v3489 = vld [vmem:[%s3048 + $0x20] sm:$0xf]
        %v3490 = vld [vmem:[%s3048 + $0x28] sm:$0xf]
        %v3498 = vunpack.c.l.s4 1966171168
        %v3499 = vunpack.c.0.s8 %v3498
        %v3500 = vlaneseq
        %v3501 = vshrl.u32 %v3500, 7
        %v3502 = vsub.s32 %v3499, %v3501
        %v3503 = vrot.slane %v3485, %v3502
        %v3504 = vcombine.high %v3503, %v3503
        %v3506 = vunpack.c.l.s4 1966171168
        %v3507 = vunpack.c.0.s8 %v3506
        %v3508 = vlaneseq
        %v3509 = vshrl.u32 %v3508, 7
        %v3510 = vsub.s32 %v3507, %v3509
        %v3511 = vrot.slane %v3503, %v3510
        %v3513 = vunpack.c.l.s4 1966171168
        %v3514 = vunpack.c.0.s8 %v3513
        %v3515 = vlaneseq
        %v3516 = vshrl.u32 %v3515, 7
        %v3517 = vsub.s32 %v3514, %v3516
        %v3518 = vrot.slane %v3504, %v3517
        %v3519 = vcombine.high %v3511, %v3511
        %v3520 = vcombine.high %v3518, %v3518
        %v3522 = vunpack.c.l.s4 1966171168
        %v3523 = vunpack.c.0.s8 %v3522
        %v3524 = vlaneseq
        %v3525 = vshrl.u32 %v3524, 7
        %v3526 = vsub.s32 %v3523, %v3525
        %v3527 = vrot.slane %v3486, %v3526
        %v3528 = vcombine.high %v3527, %v3527
        %v3530 = vunpack.c.l.s4 1966171168
        %v3531 = vunpack.c.0.s8 %v3530
        %v3532 = vlaneseq
        %v3533 = vshrl.u32 %v3532, 7
        %v3534 = vsub.s32 %v3531, %v3533
        %v3535 = vrot.slane %v3527, %v3534
        %v3537 = vunpack.c.l.s4 1966171168
        %v3538 = vunpack.c.0.s8 %v3537
        %v3539 = vlaneseq
        %v3540 = vshrl.u32 %v3539, 7
        %v3541 = vsub.s32 %v3538, %v3540
        %v3542 = vrot.slane %v3528, %v3541
        %v3543 = vcombine.high %v3535, %v3535
        %v3544 = vcombine.high %v3542, %v3542
        %v3546 = vunpack.c.l.s4 1966171168
        %v3547 = vunpack.c.0.s8 %v3546
        %v3548 = vlaneseq
        %v3549 = vshrl.u32 %v3548, 7
        %v3550 = vsub.s32 %v3547, %v3549
        %v3551 = vrot.slane %v3487, %v3550
        %v3552 = vcombine.high %v3551, %v3551
        %v3554 = vunpack.c.l.s4 1966171168
        %v3555 = vunpack.c.0.s8 %v3554
        %v3556 = vlaneseq
        %v3557 = vshrl.u32 %v3556, 7
        %v3558 = vsub.s32 %v3555, %v3557
        %v3559 = vrot.slane %v3551, %v3558
        %v3561 = vunpack.c.l.s4 1966171168
        %v3562 = vunpack.c.0.s8 %v3561
        %v3563 = vlaneseq
        %v3564 = vshrl.u32 %v3563, 7
        %v3565 = vsub.s32 %v3562, %v3564
        %v3566 = vrot.slane %v3552, %v3565
        %v3567 = vcombine.high %v3559, %v3559
        %v3568 = vcombine.high %v3566, %v3566
        %v3570 = vunpack.c.l.s4 1966171168
        %v3571 = vunpack.c.0.s8 %v3570
        %v3572 = vlaneseq
        %v3573 = vshrl.u32 %v3572, 7
        %v3574 = vsub.s32 %v3571, %v3573
        %v3575 = vrot.slane %v3488, %v3574
        %v3576 = vcombine.high %v3575, %v3575
        %v3578 = vunpack.c.l.s4 1966171168
        %v3579 = vunpack.c.0.s8 %v3578
        %v3580 = vlaneseq
        %v3581 = vshrl.u32 %v3580, 7
        %v3582 = vsub.s32 %v3579, %v3581
        %v3583 = vrot.slane %v3575, %v3582
        %v3585 = vunpack.c.l.s4 1966171168
        %v3586 = vunpack.c.0.s8 %v3585
        %v3587 = vlaneseq
        %v3588 = vshrl.u32 %v3587, 7
        %v3589 = vsub.s32 %v3586, %v3588
        %v3590 = vrot.slane %v3576, %v3589
        %v3591 = vcombine.high %v3583, %v3583
        %v3592 = vcombine.high %v3590, %v3590
        %v3594 = vunpack.c.l.s4 1966171168
        %v3595 = vunpack.c.0.s8 %v3594
        %v3596 = vlaneseq
        %v3597 = vshrl.u32 %v3596, 7
        %v3598 = vsub.s32 %v3595, %v3597
        %v3599 = vrot.slane %v3489, %v3598
        %v3600 = vcombine.high %v3599, %v3599
        %v3602 = vunpack.c.l.s4 1966171168
        %v3603 = vunpack.c.0.s8 %v3602
        %v3604 = vlaneseq
        %v3605 = vshrl.u32 %v3604, 7
        %v3606 = vsub.s32 %v3603, %v3605
        %v3607 = vrot.slane %v3599, %v3606
        %v3609 = vunpack.c.l.s4 1966171168
        %v3610 = vunpack.c.0.s8 %v3609
        %v3611 = vlaneseq
        %v3612 = vshrl.u32 %v3611, 7
        %v3613 = vsub.s32 %v3610, %v3612
        %v3614 = vrot.slane %v3600, %v3613
        %v3615 = vcombine.high %v3607, %v3607
        %v3616 = vcombine.high %v3614, %v3614
        %v3618 = vunpack.c.l.s4 1966171168
        %v3619 = vunpack.c.0.s8 %v3618
        %v3620 = vlaneseq
        %v3621 = vshrl.u32 %v3620, 7
        %v3622 = vsub.s32 %v3619, %v3621
        %v3623 = vrot.slane %v3490, %v3622
        %v3624 = vcombine.high %v3623, %v3623
        %v3626 = vunpack.c.l.s4 1966171168
        %v3627 = vunpack.c.0.s8 %v3626
        %v3628 = vlaneseq
        %v3629 = vshrl.u32 %v3628, 7
        %v3630 = vsub.s32 %v3627, %v3629
        %v3631 = vrot.slane %v3623, %v3630
        %v3633 = vunpack.c.l.s4 1966171168
        %v3634 = vunpack.c.0.s8 %v3633
        %v3635 = vlaneseq
        %v3636 = vshrl.u32 %v3635, 7
        %v3637 = vsub.s32 %v3634, %v3636
        %v3638 = vrot.slane %v3624, %v3637
        %v3639 = vcombine.high %v3631, %v3631
        %v3640 = vcombine.high %v3638, %v3638
        %v3641 = vunpack.i.h.s16 %v3511
        %v3642 = vunpack.i.l.s16 %v3518
        %v3643 = vunpack.i.h.s16 %v3518
        %v3644 = vunpack.i.l.s16 %v3519
        %v3645 = vunpack.i.h.s16 %v3519
        %v3646 = vunpack.i.l.s16 %v3520
        %v3647 = vunpack.i.h.s16 %v3520
        %v3648 = vunpack.i.h.s16 %v3535
        %v3649 = vunpack.i.l.s16 %v3542
        %v3650 = vunpack.i.h.s16 %v3542
        %v3651 = vunpack.i.l.s16 %v3543
        %v3652 = vunpack.i.h.s16 %v3543
        %v3653 = vunpack.i.l.s16 %v3544
        %v3654 = vunpack.i.h.s16 %v3544
        %v3655 = vunpack.i.h.s16 %v3559
        %v3656 = vunpack.i.l.s16 %v3566
        %v3657 = vunpack.i.h.s16 %v3566
        %v3658 = vunpack.i.l.s16 %v3567
        %v3659 = vunpack.i.h.s16 %v3567
        %v3660 = vunpack.i.l.s16 %v3568
        %v3661 = vunpack.i.h.s16 %v3568
        %v3662 = vunpack.i.h.s16 %v3583
        %v3663 = vunpack.i.l.s16 %v3590
        %v3664 = vunpack.i.h.s16 %v3590
        %v3665 = vunpack.i.l.s16 %v3591
        %v3666 = vunpack.i.h.s16 %v3591
        %v3667 = vunpack.i.l.s16 %v3592
        %v3668 = vunpack.i.h.s16 %v3592
        %v3669 = vunpack.i.h.s16 %v3607
        %v3670 = vunpack.i.l.s16 %v3614
        %v3671 = vunpack.i.h.s16 %v3614
        %v3672 = vunpack.i.l.s16 %v3615
        %v3673 = vunpack.i.h.s16 %v3615
        %v3674 = vunpack.i.l.s16 %v3616
        %v3675 = vunpack.i.h.s16 %v3616
        %v3676 = vunpack.i.h.s16 %v3631
        %v3677 = vunpack.i.l.s16 %v3638
        %v3678 = vunpack.i.h.s16 %v3638
        %v3679 = vunpack.i.l.s16 %v3639
        %v3680 = vunpack.i.h.s16 %v3639
        %v3681 = vunpack.i.l.s16 %v3640
        %v3682 = vunpack.i.h.s16 %v3640
        %s3683 = sadd.s32 %s3248, 1
        %s3684 = smul.addr %s3683, 4
        %s3685 = scalar_lea.vmem %s1, %s3684
        %v3686 = vld [vmem:[%s3685] sm:$0xf]
        %v3687 = vpack.i.b16 %v3642, %v3641
        %v3688 = vpack.i.b16 %v3644, %v3643
        %v3689 = vpack.i.b16 %v3646, %v3645
        %v3690 = vpack.i.b16 %v3648, %v3647
        %v3691 = vpack.i.b16 %v3650, %v3649
        %v3692 = vpack.i.b16 %v3652, %v3651
        %v3693 = vpack.i.b16 %v3654, %v3653
        %v3694 = vpack.i.b16 %v3656, %v3655
        %v3695 = vpack.i.b16 %v3658, %v3657
        %v3696 = vpack.i.b16 %v3660, %v3659
        %v3697 = vpack.i.b16 %v3662, %v3661
        %v3698 = vpack.i.b16 %v3664, %v3663
        %v3699 = vpack.i.b16 %v3666, %v3665
        %v3700 = vpack.i.b16 %v3668, %v3667
        %v3701 = vpack.i.b16 %v3670, %v3669
        %v3702 = vpack.i.b16 %v3672, %v3671
        %v3703 = vpack.i.b16 %v3674, %v3673
        %v3704 = vpack.i.b16 %v3676, %v3675
        %v3705 = vpack.i.b16 %v3678, %v3677
        %v3706 = vpack.i.b16 %v3680, %v3679
        %v3707 = vpack.i.b16 %v3682, %v3681
        %v3708 = vcombine.low %v3687, %v3688
        %v3709 = vcombine.low %v3689, %v3690
        %v3710 = vcombine.low %v3691, %v3692
        %v3711 = vcombine.low %v3693, %v3694
        %v3713 = vunpack.c.l.s4 1966171168
        %v3714 = vunpack.c.0.s8 %v3713
        %v3715 = vlaneseq
        %v3716 = vshrl.u32 %v3715, 7
        %v3717 = vsub.s32 %v3714, %v3716
        %v3718 = vrot.slane %v3708, %v3717
        %v3720 = vunpack.c.l.s4 1966171168
        %v3721 = vunpack.c.0.s8 %v3720
        %v3722 = vlaneseq
        %v3723 = vshrl.u32 %v3722, 7
        %v3724 = vsub.s32 %v3721, %v3723
        %v3725 = vrot.slane %v3709, %v3724
        %v3727 = vunpack.c.l.s4 1966171168
        %v3728 = vunpack.c.0.s8 %v3727
        %v3729 = vlaneseq
        %v3730 = vshrl.u32 %v3729, 7
        %v3731 = vsub.s32 %v3728, %v3730
        %v3732 = vrot.slane %v3710, %v3731
        %v3734 = vunpack.c.l.s4 1966171168
        %v3735 = vunpack.c.0.s8 %v3734
        %v3736 = vlaneseq
        %v3737 = vshrl.u32 %v3736, 7
        %v3738 = vsub.s32 %v3735, %v3737
        %v3739 = vrot.slane %v3711, %v3738
        %v3740 = vcombine.low %v3718, %v3725
        %v3741 = vcombine.low %v3732, %v3739
        %v3743 = vunpack.c.l.s4 1966171168
        %v3744 = vunpack.c.0.s8 %v3743
        %v3745 = vlaneseq
        %v3746 = vshrl.u32 %v3745, 7
        %v3747 = vsub.s32 %v3744, %v3746
        %v3748 = vrot.slane %v3740, %v3747
        %v3750 = vunpack.c.l.s4 1966171168
        %v3751 = vunpack.c.0.s8 %v3750
        %v3752 = vlaneseq
        %v3753 = vshrl.u32 %v3752, 7
        %v3754 = vsub.s32 %v3751, %v3753
        %v3755 = vrot.slane %v3741, %v3754
        %v3756 = vcombine.low %v3748, %v3755
        %v3757 = vcombine.low %v3695, %v3696
        %v3758 = vcombine.low %v3697, %v3698
        %v3759 = vcombine.low %v3699, %v3700
        %v3760 = vcombine.low %v3701, %v3702
        %v3762 = vunpack.c.l.s4 1966171168
        %v3763 = vunpack.c.0.s8 %v3762
        %v3764 = vlaneseq
        %v3765 = vshrl.u32 %v3764, 7
        %v3766 = vsub.s32 %v3763, %v3765
        %v3767 = vrot.slane %v3757, %v3766
        %v3769 = vunpack.c.l.s4 1966171168
        %v3770 = vunpack.c.0.s8 %v3769
        %v3771 = vlaneseq
        %v3772 = vshrl.u32 %v3771, 7
        %v3773 = vsub.s32 %v3770, %v3772
        %v3774 = vrot.slane %v3758, %v3773
        %v3776 = vunpack.c.l.s4 1966171168
        %v3777 = vunpack.c.0.s8 %v3776
        %v3778 = vlaneseq
        %v3779 = vshrl.u32 %v3778, 7
        %v3780 = vsub.s32 %v3777, %v3779
        %v3781 = vrot.slane %v3759, %v3780
        %v3783 = vunpack.c.l.s4 1966171168
        %v3784 = vunpack.c.0.s8 %v3783
        %v3785 = vlaneseq
        %v3786 = vshrl.u32 %v3785, 7
        %v3787 = vsub.s32 %v3784, %v3786
        %v3788 = vrot.slane %v3760, %v3787
        %v3789 = vcombine.low %v3767, %v3774
        %v3790 = vcombine.low %v3781, %v3788
        %v3792 = vunpack.c.l.s4 1966171168
        %v3793 = vunpack.c.0.s8 %v3792
        %v3794 = vlaneseq
        %v3795 = vshrl.u32 %v3794, 7
        %v3796 = vsub.s32 %v3793, %v3795
        %v3797 = vrot.slane %v3789, %v3796
        %v3799 = vunpack.c.l.s4 1966171168
        %v3800 = vunpack.c.0.s8 %v3799
        %v3801 = vlaneseq
        %v3802 = vshrl.u32 %v3801, 7
        %v3803 = vsub.s32 %v3800, %v3802
        %v3804 = vrot.slane %v3790, %v3803
        %v3805 = vcombine.low %v3797, %v3804
        %v3806 = vcombine.low %v3703, %v3704
        %v3807 = vcombine.low %v3705, %v3706
        %v3809 = vunpack.c.l.s4 1966171168
        %v3810 = vunpack.c.0.s8 %v3809
        %v3811 = vlaneseq
        %v3812 = vshrl.u32 %v3811, 7
        %v3813 = vsub.s32 %v3810, %v3812
        %v3814 = vrot.slane %v3806, %v3813
        %v3816 = vunpack.c.l.s4 1966171168
        %v3817 = vunpack.c.0.s8 %v3816
        %v3818 = vlaneseq
        %v3819 = vshrl.u32 %v3818, 7
        %v3820 = vsub.s32 %v3817, %v3819
        %v3821 = vrot.slane %v3807, %v3820
        %v3823 = vunpack.c.l.s4 1966171168
        %v3824 = vunpack.c.0.s8 %v3823
        %v3825 = vlaneseq
        %v3826 = vshrl.u32 %v3825, 7
        %v3827 = vsub.s32 %v3824, %v3826
        %v3828 = vrot.slane %v3707, %v3827
        %v3829 = vcombine.low %v3814, %v3821
        %v3831 = vunpack.c.l.s4 1966171168
        %v3832 = vunpack.c.0.s8 %v3831
        %v3833 = vlaneseq
        %v3834 = vshrl.u32 %v3833, 7
        %v3835 = vsub.s32 %v3832, %v3834
        %v3836 = vrot.slane %v3829, %v3835
        %v3838 = vunpack.c.l.s4 1966171168
        %v3839 = vunpack.c.0.s8 %v3838
        %v3840 = vlaneseq
        %v3841 = vshrl.u32 %v3840, 7
        %v3842 = vsub.s32 %v3839, %v3841
        %v3843 = vrot.slane %v3828, %v3842
        %v3844 = vcombine.low %v3836, %v3843
        %v3846 = vsel %vm601, %v3756, 0
        %v3849 = vsel %vm601, %v3805, 0
        %v3852 = vsel %vm601, %v3844, 0
        %v3855 = vsel %vm611, %v3686, 0
        %3857 = vmatprep.subr.bf16.mxu0 0
        %3858 = vmatpush1.bf16.msra.mxu0 0
        %3859 = vmatprep.subr.bf16.mxu0 0
        %3860 = vmatpush1.bf16.msra.mxu0 0
        %3861 = vmatprep.subr.bf16.mxu0 0
        %3862 = vmatpush1.bf16.msra.mxu0 0
        %3863 = vmatprep.subr.bf16.mxu0 0
        %3864 = vmatpush1.bf16.msra.mxu0 0
        %3865 = vmatprep.subr.bf16.mxu0 0
        %3866 = vmatpush1.bf16.msra.mxu0 0
        %3867 = vmatprep.subr.bf16.mxu0 0
        %3868 = vmatpush1.bf16.msra.mxu0 0
        %3869 = vmatprep.subr.bf16.mxu0 0
        %3870 = vmatpush1.bf16.msra.mxu0 0
        %3871 = vmatprep.subr.bf16.mxu0 0
        %3872 = vmatpush1.bf16.msra.mxu0 %v3855
        %3873 = vmatprep.subr.bf16.mxu0 0
        %3874 = vmatpush2.bf16.msra.mxu0 0
        %3875 = vmatprep.subr.bf16.mxu0 0
        %3876 = vmatpush2.bf16.msra.mxu0 0
        %3877 = vmatprep.subr.bf16.mxu0 0
        %3878 = vmatpush2.bf16.msra.mxu0 0
        %3879 = vmatprep.subr.bf16.mxu0 0
        %3880 = vmatpush2.bf16.msra.mxu0 0
        %3881 = vmatprep.subr.bf16.mxu0 0
        %3882 = vmatpush2.bf16.msra.mxu0 0
        %3883 = vmatprep.subr.bf16.mxu0 0
        %3884 = vmatpush2.bf16.msra.mxu0 0
        %3885 = vmatprep.subr.bf16.mxu0 0
        %3886 = vmatpush2.bf16.msra.mxu0 0
        %3887 = vmatprep.subr.bf16.mxu0 0
        %3888 = vmatpush2.bf16.msra.mxu0 0
        %3889 = vmatprep.mubr.bf16.mxu0 0
        %3890 = vmatmul.mubr.bf16.gmra.mxu0 %v3846
        %v3891 = vpop.f32.mrf.mxu0
        %v3892 = vadd.f32 0.0, %v3891
        %v3893 = vpop.f32.mrf.mxu0
        %v3894 = vpop.f32.mrf.mxu0
        %v3895 = vadd.f32 0.0, %v3894
        %v3896 = vpop.f32.mrf.mxu0
        %3897 = vmatprep.mubr.bf16.mxu0 0
        %3898 = vmatmul.mubr.bf16.gmra.mxu0 %v3849
        %v3899 = vpop.f32.mrf.mxu0
        %v3900 = vadd.f32 0.0, %v3899
        %v3901 = vpop.f32.mrf.mxu0
        %v3902 = vpop.f32.mrf.mxu0
        %v3903 = vadd.f32 0.0, %v3902
        %v3904 = vpop.f32.mrf.mxu0
        %3905 = vmatprep.mubr.bf16.mxu0 0
        %3906 = vmatmul.mubr.bf16.gmra.mxu0 %v3852
        %v3907 = vpop.f32.mrf.mxu0
        %v3908 = vadd.f32 0.0, %v3907
        %v3909 = vpop.f32.mrf.mxu0
        %v3910 = vpop.f32.mrf.mxu0
        %v3911 = vadd.f32 0.0, %v3910
        %v3912 = vpop.f32.mrf.mxu0
        %3913 = vdwg.mxu0
        %v3914 = vadd.f32 %v3479, %v3892
        %v3915 = vadd.f32 %v3480, %v3895
        %v3916 = vadd.f32 %v3481, %v3900
        %v3917 = vadd.f32 %v3482, %v3903
        %v3918 = vadd.f32 %v3483, %v3908
        %v3919 = vadd.f32 %v3484, %v3911
        %v3920 = vld [vmem:[%s3048] sm:$0xe]
        %v3921 = vld [vmem:[%s3048 + $0x4] sm:$0x1]
        %v3922 = vld [vmem:[%s3048 + $0x8] sm:$0xe]
        %v3923 = vld [vmem:[%s3048 + $0xc] sm:$0x1]
        %v3924 = vld [vmem:[%s3048 + $0x10] sm:$0xe]
        %v3925 = vld [vmem:[%s3048 + $0x14] sm:$0x1]
        %v3926 = vld [vmem:[%s3048 + $0x18] sm:$0xe]
        %v3927 = vld [vmem:[%s3048 + $0x1c] sm:$0x1]
        %v3928 = vld [vmem:[%s3048 + $0x20] sm:$0xe]
        %v3929 = vld [vmem:[%s3048 + $0x24] sm:$0x1]
        %v3930 = vld [vmem:[%s3048 + $0x28] sm:$0xe]
        %v3931 = vld [vmem:[%s3048 + $0x2c] sm:$0x1]
        %v3945 = vunpack.c.l.s4 1966171168
        %v3946 = vunpack.c.0.s8 %v3945
        %v3947 = vlaneseq
        %v3948 = vshrl.u32 %v3947, 7
        %v3949 = vsub.s32 %v3946, %v3948
        %v3950 = vrot.slane %v3920, %v3949
        %v3951 = vcombine.high %v3950, %v3950
        %v3953 = vunpack.c.l.s4 1966171168
        %v3954 = vunpack.c.0.s8 %v3953
        %v3955 = vlaneseq
        %v3956 = vshrl.u32 %v3955, 7
        %v3957 = vsub.s32 %v3954, %v3956
        %v3958 = vrot.slane %v3950, %v3957
        %v3960 = vunpack.c.l.s4 1966171168
        %v3961 = vunpack.c.0.s8 %v3960
        %v3962 = vlaneseq
        %v3963 = vshrl.u32 %v3962, 7
        %v3964 = vsub.s32 %v3961, %v3963
        %v3965 = vrot.slane %v3951, %v3964
        %v3966 = vcombine.high %v3958, %v3958
        %v3967 = vcombine.high %v3965, %v3965
        %v3969 = vunpack.c.l.s4 1966171168
        %v3970 = vunpack.c.0.s8 %v3969
        %v3971 = vlaneseq
        %v3972 = vshrl.u32 %v3971, 7
        %v3973 = vsub.s32 %v3970, %v3972
        %v3974 = vrot.slane %v3921, %v3973
        %v3976 = vunpack.c.l.s4 1966171168
        %v3977 = vunpack.c.0.s8 %v3976
        %v3978 = vlaneseq
        %v3979 = vshrl.u32 %v3978, 7
        %v3980 = vsub.s32 %v3977, %v3979
        %v3981 = vrot.slane %v3974, %v3980
        %v3983 = vunpack.c.l.s4 1966171168
        %v3984 = vunpack.c.0.s8 %v3983
        %v3985 = vlaneseq
        %v3986 = vshrl.u32 %v3985, 7
        %v3987 = vsub.s32 %v3984, %v3986
        %v3988 = vrot.slane %v3922, %v3987
        %v3989 = vcombine.high %v3988, %v3988
        %v3991 = vunpack.c.l.s4 1966171168
        %v3992 = vunpack.c.0.s8 %v3991
        %v3993 = vlaneseq
        %v3994 = vshrl.u32 %v3993, 7
        %v3995 = vsub.s32 %v3992, %v3994
        %v3996 = vrot.slane %v3988, %v3995
        %v3998 = vunpack.c.l.s4 1966171168
        %v3999 = vunpack.c.0.s8 %v3998
        %v4000 = vlaneseq
        %v4001 = vshrl.u32 %v4000, 7
        %v4002 = vsub.s32 %v3999, %v4001
        %v4003 = vrot.slane %v3989, %v4002
        %v4004 = vcombine.high %v3996, %v3996
        %v4005 = vcombine.high %v4003, %v4003
        %v4007 = vunpack.c.l.s4 1966171168
        %v4008 = vunpack.c.0.s8 %v4007
        %v4009 = vlaneseq
        %v4010 = vshrl.u32 %v4009, 7
        %v4011 = vsub.s32 %v4008, %v4010
        %v4012 = vrot.slane %v3923, %v4011
        %v4014 = vunpack.c.l.s4 1966171168
        %v4015 = vunpack.c.0.s8 %v4014
        %v4016 = vlaneseq
        %v4017 = vshrl.u32 %v4016, 7
        %v4018 = vsub.s32 %v4015, %v4017
        %v4019 = vrot.slane %v4012, %v4018
        %v4021 = vunpack.c.l.s4 1966171168
        %v4022 = vunpack.c.0.s8 %v4021
        %v4023 = vlaneseq
        %v4024 = vshrl.u32 %v4023, 7
        %v4025 = vsub.s32 %v4022, %v4024
        %v4026 = vrot.slane %v3924, %v4025
        %v4027 = vcombine.high %v4026, %v4026
        %v4029 = vunpack.c.l.s4 1966171168
        %v4030 = vunpack.c.0.s8 %v4029
        %v4031 = vlaneseq
        %v4032 = vshrl.u32 %v4031, 7
        %v4033 = vsub.s32 %v4030, %v4032
        %v4034 = vrot.slane %v4026, %v4033
        %v4036 = vunpack.c.l.s4 1966171168
        %v4037 = vunpack.c.0.s8 %v4036
        %v4038 = vlaneseq
        %v4039 = vshrl.u32 %v4038, 7
        %v4040 = vsub.s32 %v4037, %v4039
        %v4041 = vrot.slane %v4027, %v4040
        %v4042 = vcombine.high %v4034, %v4034
        %v4043 = vcombine.high %v4041, %v4041
        %v4045 = vunpack.c.l.s4 1966171168
        %v4046 = vunpack.c.0.s8 %v4045
        %v4047 = vlaneseq
        %v4048 = vshrl.u32 %v4047, 7
        %v4049 = vsub.s32 %v4046, %v4048
        %v4050 = vrot.slane %v3925, %v4049
        %v4052 = vunpack.c.l.s4 1966171168
        %v4053 = vunpack.c.0.s8 %v4052
        %v4054 = vlaneseq
        %v4055 = vshrl.u32 %v4054, 7
        %v4056 = vsub.s32 %v4053, %v4055
        %v4057 = vrot.slane %v4050, %v4056
        %v4059 = vunpack.c.l.s4 1966171168
        %v4060 = vunpack.c.0.s8 %v4059
        %v4061 = vlaneseq
        %v4062 = vshrl.u32 %v4061, 7
        %v4063 = vsub.s32 %v4060, %v4062
        %v4064 = vrot.slane %v3926, %v4063
        %v4065 = vcombine.high %v4064, %v4064
        %v4067 = vunpack.c.l.s4 1966171168
        %v4068 = vunpack.c.0.s8 %v4067
        %v4069 = vlaneseq
        %v4070 = vshrl.u32 %v4069, 7
        %v4071 = vsub.s32 %v4068, %v4070
        %v4072 = vrot.slane %v4064, %v4071
        %v4074 = vunpack.c.l.s4 1966171168
        %v4075 = vunpack.c.0.s8 %v4074
        %v4076 = vlaneseq
        %v4077 = vshrl.u32 %v4076, 7
        %v4078 = vsub.s32 %v4075, %v4077
        %v4079 = vrot.slane %v4065, %v4078
        %v4080 = vcombine.high %v4072, %v4072
        %v4081 = vcombine.high %v4079, %v4079
        %v4083 = vunpack.c.l.s4 1966171168
        %v4084 = vunpack.c.0.s8 %v4083
        %v4085 = vlaneseq
        %v4086 = vshrl.u32 %v4085, 7
        %v4087 = vsub.s32 %v4084, %v4086
        %v4088 = vrot.slane %v3927, %v4087
        %v4090 = vunpack.c.l.s4 1966171168
        %v4091 = vunpack.c.0.s8 %v4090
        %v4092 = vlaneseq
        %v4093 = vshrl.u32 %v4092, 7
        %v4094 = vsub.s32 %v4091, %v4093
        %v4095 = vrot.slane %v4088, %v4094
        %v4097 = vunpack.c.l.s4 1966171168
        %v4098 = vunpack.c.0.s8 %v4097
        %v4099 = vlaneseq
        %v4100 = vshrl.u32 %v4099, 7
        %v4101 = vsub.s32 %v4098, %v4100
        %v4102 = vrot.slane %v3928, %v4101
        %v4103 = vcombine.high %v4102, %v4102
        %v4105 = vunpack.c.l.s4 1966171168
        %v4106 = vunpack.c.0.s8 %v4105
        %v4107 = vlaneseq
        %v4108 = vshrl.u32 %v4107, 7
        %v4109 = vsub.s32 %v4106, %v4108
        %v4110 = vrot.slane %v4102, %v4109
        %v4112 = vunpack.c.l.s4 1966171168
        %v4113 = vunpack.c.0.s8 %v4112
        %v4114 = vlaneseq
        %v4115 = vshrl.u32 %v4114, 7
        %v4116 = vsub.s32 %v4113, %v4115
        %v4117 = vrot.slane %v4103, %v4116
        %v4118 = vcombine.high %v4110, %v4110
        %v4119 = vcombine.high %v4117, %v4117
        %v4121 = vunpack.c.l.s4 1966171168
        %v4122 = vunpack.c.0.s8 %v4121
        %v4123 = vlaneseq
        %v4124 = vshrl.u32 %v4123, 7
        %v4125 = vsub.s32 %v4122, %v4124
        %v4126 = vrot.slane %v3929, %v4125
        %v4128 = vunpack.c.l.s4 1966171168
        %v4129 = vunpack.c.0.s8 %v4128
        %v4130 = vlaneseq
        %v4131 = vshrl.u32 %v4130, 7
        %v4132 = vsub.s32 %v4129, %v4131
        %v4133 = vrot.slane %v4126, %v4132
        %v4135 = vunpack.c.l.s4 1966171168
        %v4136 = vunpack.c.0.s8 %v4135
        %v4137 = vlaneseq
        %v4138 = vshrl.u32 %v4137, 7
        %v4139 = vsub.s32 %v4136, %v4138
        %v4140 = vrot.slane %v3930, %v4139
        %v4141 = vcombine.high %v4140, %v4140
        %v4143 = vunpack.c.l.s4 1966171168
        %v4144 = vunpack.c.0.s8 %v4143
        %v4145 = vlaneseq
        %v4146 = vshrl.u32 %v4145, 7
        %v4147 = vsub.s32 %v4144, %v4146
        %v4148 = vrot.slane %v4140, %v4147
        %v4150 = vunpack.c.l.s4 1966171168
        %v4151 = vunpack.c.0.s8 %v4150
        %v4152 = vlaneseq
        %v4153 = vshrl.u32 %v4152, 7
        %v4154 = vsub.s32 %v4151, %v4153
        %v4155 = vrot.slane %v4141, %v4154
        %v4156 = vcombine.high %v4148, %v4148
        %v4157 = vcombine.high %v4155, %v4155
        %v4159 = vunpack.c.l.s4 1966171168
        %v4160 = vunpack.c.0.s8 %v4159
        %v4161 = vlaneseq
        %v4162 = vshrl.u32 %v4161, 7
        %v4163 = vsub.s32 %v4160, %v4162
        %v4164 = vrot.slane %v3931, %v4163
        %v4166 = vunpack.c.l.s4 1966171168
        %v4167 = vunpack.c.0.s8 %v4166
        %v4168 = vlaneseq
        %v4169 = vshrl.u32 %v4168, 7
        %v4170 = vsub.s32 %v4167, %v4169
        %v4171 = vrot.slane %v4164, %v4170
        %v4172 = vunpack.i.l.s16 %v3965
        %v4173 = vunpack.i.h.s16 %v3965
        %v4174 = vunpack.i.l.s16 %v3966
        %v4175 = vunpack.i.h.s16 %v3966
        %v4176 = vunpack.i.l.s16 %v3967
        %v4177 = vunpack.i.h.s16 %v3967
        %v4178 = vunpack.i.l.s16 %v3981
        %v4179 = vunpack.i.l.s16 %v4003
        %v4180 = vunpack.i.h.s16 %v4003
        %v4181 = vunpack.i.l.s16 %v4004
        %v4182 = vunpack.i.h.s16 %v4004
        %v4183 = vunpack.i.l.s16 %v4005
        %v4184 = vunpack.i.h.s16 %v4005
        %v4185 = vunpack.i.l.s16 %v4019
        %v4186 = vunpack.i.l.s16 %v4041
        %v4187 = vunpack.i.h.s16 %v4041
        %v4188 = vunpack.i.l.s16 %v4042
        %v4189 = vunpack.i.h.s16 %v4042
        %v4190 = vunpack.i.l.s16 %v4043
        %v4191 = vunpack.i.h.s16 %v4043
        %v4192 = vunpack.i.l.s16 %v4057
        %v4193 = vunpack.i.l.s16 %v4079
        %v4194 = vunpack.i.h.s16 %v4079
        %v4195 = vunpack.i.l.s16 %v4080
        %v4196 = vunpack.i.h.s16 %v4080
        %v4197 = vunpack.i.l.s16 %v4081
        %v4198 = vunpack.i.h.s16 %v4081
        %v4199 = vunpack.i.l.s16 %v4095
        %v4200 = vunpack.i.l.s16 %v4117
        %v4201 = vunpack.i.h.s16 %v4117
        %v4202 = vunpack.i.l.s16 %v4118
        %v4203 = vunpack.i.h.s16 %v4118
        %v4204 = vunpack.i.l.s16 %v4119
        %v4205 = vunpack.i.h.s16 %v4119
        %v4206 = vunpack.i.l.s16 %v4133
        %v4207 = vunpack.i.l.s16 %v4155
        %v4208 = vunpack.i.h.s16 %v4155
        %v4209 = vunpack.i.l.s16 %v4156
        %v4210 = vunpack.i.h.s16 %v4156
        %v4211 = vunpack.i.l.s16 %v4157
        %v4212 = vunpack.i.h.s16 %v4157
        %v4213 = vunpack.i.l.s16 %v4171
        %s4214 = sadd.s32 %s3248, 2
        %s4215 = smul.addr %s4214, 4
        %s4216 = scalar_lea.vmem %s1, %s4215
        %v4217 = vld [vmem:[%s4216] sm:$0xf]
        %v4218 = vpack.i.b16 %v4173, %v4172
        %v4219 = vpack.i.b16 %v4175, %v4174
        %v4220 = vpack.i.b16 %v4177, %v4176
        %v4221 = vpack.i.b16 %v4179, %v4178
        %v4222 = vpack.i.b16 %v4181, %v4180
        %v4223 = vpack.i.b16 %v4183, %v4182
        %v4224 = vpack.i.b16 %v4185, %v4184
        %v4225 = vpack.i.b16 %v4187, %v4186
        %v4226 = vpack.i.b16 %v4189, %v4188
        %v4227 = vpack.i.b16 %v4191, %v4190
        %v4228 = vpack.i.b16 %v4193, %v4192
        %v4229 = vpack.i.b16 %v4195, %v4194
        %v4230 = vpack.i.b16 %v4197, %v4196
        %v4231 = vpack.i.b16 %v4199, %v4198
        %v4232 = vpack.i.b16 %v4201, %v4200
        %v4233 = vpack.i.b16 %v4203, %v4202
        %v4234 = vpack.i.b16 %v4205, %v4204
        %v4235 = vpack.i.b16 %v4207, %v4206
        %v4236 = vpack.i.b16 %v4209, %v4208
        %v4237 = vpack.i.b16 %v4211, %v4210
        %v4238 = vpack.i.b16 %v4213, %v4212
        %v4239 = vcombine.low %v4218, %v4219
        %v4240 = vcombine.low %v4220, %v4221
        %v4241 = vcombine.low %v4222, %v4223
        %v4242 = vcombine.low %v4224, %v4225
        %v4244 = vunpack.c.l.s4 1966171168
        %v4245 = vunpack.c.0.s8 %v4244
        %v4246 = vlaneseq
        %v4247 = vshrl.u32 %v4246, 7
        %v4248 = vsub.s32 %v4245, %v4247
        %v4249 = vrot.slane %v4239, %v4248
        %v4251 = vunpack.c.l.s4 1966171168
        %v4252 = vunpack.c.0.s8 %v4251
        %v4253 = vlaneseq
        %v4254 = vshrl.u32 %v4253, 7
        %v4255 = vsub.s32 %v4252, %v4254
        %v4256 = vrot.slane %v4240, %v4255
        %v4258 = vunpack.c.l.s4 1966171168
        %v4259 = vunpack.c.0.s8 %v4258
        %v4260 = vlaneseq
        %v4261 = vshrl.u32 %v4260, 7
        %v4262 = vsub.s32 %v4259, %v4261
        %v4263 = vrot.slane %v4241, %v4262
        %v4265 = vunpack.c.l.s4 1966171168
        %v4266 = vunpack.c.0.s8 %v4265
        %v4267 = vlaneseq
        %v4268 = vshrl.u32 %v4267, 7
        %v4269 = vsub.s32 %v4266, %v4268
        %v4270 = vrot.slane %v4242, %v4269
        %v4271 = vcombine.low %v4249, %v4256
        %v4272 = vcombine.low %v4263, %v4270
        %v4274 = vunpack.c.l.s4 1966171168
        %v4275 = vunpack.c.0.s8 %v4274
        %v4276 = vlaneseq
        %v4277 = vshrl.u32 %v4276, 7
        %v4278 = vsub.s32 %v4275, %v4277
        %v4279 = vrot.slane %v4271, %v4278
        %v4281 = vunpack.c.l.s4 1966171168
        %v4282 = vunpack.c.0.s8 %v4281
        %v4283 = vlaneseq
        %v4284 = vshrl.u32 %v4283, 7
        %v4285 = vsub.s32 %v4282, %v4284
        %v4286 = vrot.slane %v4272, %v4285
        %v4287 = vcombine.low %v4279, %v4286
        %v4288 = vcombine.low %v4226, %v4227
        %v4289 = vcombine.low %v4228, %v4229
        %v4290 = vcombine.low %v4230, %v4231
        %v4291 = vcombine.low %v4232, %v4233
        %v4293 = vunpack.c.l.s4 1966171168
        %v4294 = vunpack.c.0.s8 %v4293
        %v4295 = vlaneseq
        %v4296 = vshrl.u32 %v4295, 7
        %v4297 = vsub.s32 %v4294, %v4296
        %v4298 = vrot.slane %v4288, %v4297
        %v4300 = vunpack.c.l.s4 1966171168
        %v4301 = vunpack.c.0.s8 %v4300
        %v4302 = vlaneseq
        %v4303 = vshrl.u32 %v4302, 7
        %v4304 = vsub.s32 %v4301, %v4303
        %v4305 = vrot.slane %v4289, %v4304
        %v4307 = vunpack.c.l.s4 1966171168
        %v4308 = vunpack.c.0.s8 %v4307
        %v4309 = vlaneseq
        %v4310 = vshrl.u32 %v4309, 7
        %v4311 = vsub.s32 %v4308, %v4310
        %v4312 = vrot.slane %v4290, %v4311
        %v4314 = vunpack.c.l.s4 1966171168
        %v4315 = vunpack.c.0.s8 %v4314
        %v4316 = vlaneseq
        %v4317 = vshrl.u32 %v4316, 7
        %v4318 = vsub.s32 %v4315, %v4317
        %v4319 = vrot.slane %v4291, %v4318
        %v4320 = vcombine.low %v4298, %v4305
        %v4321 = vcombine.low %v4312, %v4319
        %v4323 = vunpack.c.l.s4 1966171168
        %v4324 = vunpack.c.0.s8 %v4323
        %v4325 = vlaneseq
        %v4326 = vshrl.u32 %v4325, 7
        %v4327 = vsub.s32 %v4324, %v4326
        %v4328 = vrot.slane %v4320, %v4327
        %v4330 = vunpack.c.l.s4 1966171168
        %v4331 = vunpack.c.0.s8 %v4330
        %v4332 = vlaneseq
        %v4333 = vshrl.u32 %v4332, 7
        %v4334 = vsub.s32 %v4331, %v4333
        %v4335 = vrot.slane %v4321, %v4334
        %v4336 = vcombine.low %v4328, %v4335
        %v4337 = vcombine.low %v4234, %v4235
        %v4338 = vcombine.low %v4236, %v4237
        %v4340 = vunpack.c.l.s4 1966171168
        %v4341 = vunpack.c.0.s8 %v4340
        %v4342 = vlaneseq
        %v4343 = vshrl.u32 %v4342, 7
        %v4344 = vsub.s32 %v4341, %v4343
        %v4345 = vrot.slane %v4337, %v4344
        %v4347 = vunpack.c.l.s4 1966171168
        %v4348 = vunpack.c.0.s8 %v4347
        %v4349 = vlaneseq
        %v4350 = vshrl.u32 %v4349, 7
        %v4351 = vsub.s32 %v4348, %v4350
        %v4352 = vrot.slane %v4338, %v4351
        %v4354 = vunpack.c.l.s4 1966171168
        %v4355 = vunpack.c.0.s8 %v4354
        %v4356 = vlaneseq
        %v4357 = vshrl.u32 %v4356, 7
        %v4358 = vsub.s32 %v4355, %v4357
        %v4359 = vrot.slane %v4238, %v4358
        %v4360 = vcombine.low %v4345, %v4352
        %v4362 = vunpack.c.l.s4 1966171168
        %v4363 = vunpack.c.0.s8 %v4362
        %v4364 = vlaneseq
        %v4365 = vshrl.u32 %v4364, 7
        %v4366 = vsub.s32 %v4363, %v4365
        %v4367 = vrot.slane %v4360, %v4366
        %v4369 = vunpack.c.l.s4 1966171168
        %v4370 = vunpack.c.0.s8 %v4369
        %v4371 = vlaneseq
        %v4372 = vshrl.u32 %v4371, 7
        %v4373 = vsub.s32 %v4370, %v4372
        %v4374 = vrot.slane %v4359, %v4373
        %v4375 = vcombine.low %v4367, %v4374
        %v4377 = vsel %vm601, %v4287, 0
        %v4380 = vsel %vm601, %v4336, 0
        %v4383 = vsel %vm601, %v4375, 0
        %v4386 = vsel %vm611, %v4217, 0
        %4388 = vmatprep.subr.bf16.mxu0 0
        %4389 = vmatpush1.bf16.msra.mxu0 0
        %4390 = vmatprep.subr.bf16.mxu0 0
        %4391 = vmatpush1.bf16.msra.mxu0 0
        %4392 = vmatprep.subr.bf16.mxu0 0
        %4393 = vmatpush1.bf16.msra.mxu0 0
        %4394 = vmatprep.subr.bf16.mxu0 0
        %4395 = vmatpush1.bf16.msra.mxu0 0
        %4396 = vmatprep.subr.bf16.mxu0 0
        %4397 = vmatpush1.bf16.msra.mxu0 0
        %4398 = vmatprep.subr.bf16.mxu0 0
        %4399 = vmatpush1.bf16.msra.mxu0 0
        %4400 = vmatprep.subr.bf16.mxu0 0
        %4401 = vmatpush1.bf16.msra.mxu0 0
        %4402 = vmatprep.subr.bf16.mxu0 0
        %4403 = vmatpush1.bf16.msra.mxu0 %v4386
        %4404 = vmatprep.subr.bf16.mxu0 0
        %4405 = vmatpush2.bf16.msra.mxu0 0
        %4406 = vmatprep.subr.bf16.mxu0 0
        %4407 = vmatpush2.bf16.msra.mxu0 0
        %4408 = vmatprep.subr.bf16.mxu0 0
        %4409 = vmatpush2.bf16.msra.mxu0 0
        %4410 = vmatprep.subr.bf16.mxu0 0
        %4411 = vmatpush2.bf16.msra.mxu0 0
        %4412 = vmatprep.subr.bf16.mxu0 0
        %4413 = vmatpush2.bf16.msra.mxu0 0
        %4414 = vmatprep.subr.bf16.mxu0 0
        %4415 = vmatpush2.bf16.msra.mxu0 0
        %4416 = vmatprep.subr.bf16.mxu0 0
        %4417 = vmatpush2.bf16.msra.mxu0 0
        %4418 = vmatprep.subr.bf16.mxu0 0
        %4419 = vmatpush2.bf16.msra.mxu0 0
        %4420 = vmatprep.mubr.bf16.mxu0 0
        %4421 = vmatmul.mubr.bf16.gmra.mxu0 %v4377
        %v4422 = vpop.f32.mrf.mxu0
        %v4423 = vadd.f32 0.0, %v4422
        %v4424 = vpop.f32.mrf.mxu0
        %v4425 = vpop.f32.mrf.mxu0
        %v4426 = vadd.f32 0.0, %v4425
        %v4427 = vpop.f32.mrf.mxu0
        %4428 = vmatprep.mubr.bf16.mxu0 0
        %4429 = vmatmul.mubr.bf16.gmra.mxu0 %v4380
        %v4430 = vpop.f32.mrf.mxu0
        %v4431 = vadd.f32 0.0, %v4430
        %v4432 = vpop.f32.mrf.mxu0
        %v4433 = vpop.f32.mrf.mxu0
        %v4434 = vadd.f32 0.0, %v4433
        %v4435 = vpop.f32.mrf.mxu0
        %4436 = vmatprep.mubr.bf16.mxu0 0
        %4437 = vmatmul.mubr.bf16.gmra.mxu0 %v4383
        %v4438 = vpop.f32.mrf.mxu0
        %v4439 = vadd.f32 0.0, %v4438
        %v4440 = vpop.f32.mrf.mxu0
        %v4441 = vpop.f32.mrf.mxu0
        %v4442 = vadd.f32 0.0, %v4441
        %v4443 = vpop.f32.mrf.mxu0
        %4444 = vdwg.mxu0
        %v4445 = vadd.f32 %v3914, %v4423
        %v4446 = vadd.f32 %v3915, %v4426
        %v4447 = vadd.f32 %v3916, %v4431
        %v4448 = vadd.f32 %v3917, %v4434
        %v4449 = vadd.f32 %v3918, %v4439
        %v4450 = vadd.f32 %v3919, %v4442
        %vm4451 = vcmask 130048
        %4452 = vst.msk [vmem:[#allocation2] sm:$0xff] %vm4451, %v4445
        %4453 = vst.msk [vmem:[#allocation2 + $0x8] sm:$0xff] %vm4451, %v4446
        %4454 = vst.msk [vmem:[#allocation2 + $0x10] sm:$0xff] %vm4451, %v4447
        %4455 = vst.msk [vmem:[#allocation2 + $0x18] sm:$0xff] %vm4451, %v4448
        %4456 = vst.msk [vmem:[#allocation2 + $0x20] sm:$0xff] %vm4451, %v4449
        %vm4457 = vcmask 123904
        %4458 = vst.msk [vmem:[#allocation2 + $0x28] sm:$0x3] %vm4457, %v4450
        %p4459 = scmp.eq.s32.totalorder %s24, 2
        // Predicated region
        $region37: #{tpu_custom_call.1} parent=31 // pred_check
          %p4460 = pneg %p4459
        $region38: #{tpu_custom_call.1} parent=31 // pred_check_branch
          %4462 = sbr.rel (%p4460) target = $region40
        $region39: #{tpu_custom_call.1} parent=31 // pred_region
          %v4463 = vld [vmem:[#allocation2] sm:$0xff]
          %v4464 = vld [vmem:[#allocation2 + $0x8] sm:$0xff]
          %v4465 = vld [vmem:[#allocation2 + $0x10] sm:$0xff]
          %v4466 = vld [vmem:[#allocation2 + $0x18] sm:$0xff]
          %v4467 = vld [vmem:[#allocation2 + $0x20] sm:$0xff]
          %v4468 = vld [vmem:[#allocation2 + $0x28] sm:$0x3]
          %v4475 = vcombine.high %v4463, %v4463
          %v4477 = vunpack.c.l.s4 1966171168
          %v4478 = vunpack.c.0.s8 %v4477
          %v4479 = vlaneseq
          %v4480 = vshrl.u32 %v4479, 7
          %v4481 = vsub.s32 %v4478, %v4480
          %v4482 = vrot.slane %v4463, %v4481
          %v4484 = vunpack.c.l.s4 1966171168
          %v4485 = vunpack.c.0.s8 %v4484
          %v4486 = vlaneseq
          %v4487 = vshrl.u32 %v4486, 7
          %v4488 = vsub.s32 %v4485, %v4487
          %v4489 = vrot.slane %v4475, %v4488
          %v4490 = vcombine.high %v4482, %v4482
          %v4491 = vcombine.high %v4489, %v4489
          %v4493 = vunpack.c.l.s4 1966171168
          %v4494 = vunpack.c.0.s8 %v4493
          %v4495 = vlaneseq
          %v4496 = vshrl.u32 %v4495, 7
          %v4497 = vsub.s32 %v4494, %v4496
          %v4498 = vrot.slane %v4482, %v4497
          %v4500 = vunpack.c.l.s4 1966171168
          %v4501 = vunpack.c.0.s8 %v4500
          %v4502 = vlaneseq
          %v4503 = vshrl.u32 %v4502, 7
          %v4504 = vsub.s32 %v4501, %v4503
          %v4505 = vrot.slane %v4489, %v4504
          %v4507 = vunpack.c.l.s4 1966171168
          %v4508 = vunpack.c.0.s8 %v4507
          %v4509 = vlaneseq
          %v4510 = vshrl.u32 %v4509, 7
          %v4511 = vsub.s32 %v4508, %v4510
          %v4512 = vrot.slane %v4490, %v4511
          %v4514 = vunpack.c.l.s4 1966171168
          %v4515 = vunpack.c.0.s8 %v4514
          %v4516 = vlaneseq
          %v4517 = vshrl.u32 %v4516, 7
          %v4518 = vsub.s32 %v4515, %v4517
          %v4519 = vrot.slane %v4491, %v4518
          %v4520 = vcombine.high %v4498, %v4498
          %v4521 = vcombine.high %v4505, %v4505
          %v4522 = vcombine.high %v4512, %v4512
          %v4523 = vcombine.high %v4519, %v4519
          %v4524 = vcombine.high %v4464, %v4464
          %v4526 = vunpack.c.l.s4 1966171168
          %v4527 = vunpack.c.0.s8 %v4526
          %v4528 = vlaneseq
          %v4529 = vshrl.u32 %v4528, 7
          %v4530 = vsub.s32 %v4527, %v4529
          %v4531 = vrot.slane %v4464, %v4530
          %v4533 = vunpack.c.l.s4 1966171168
          %v4534 = vunpack.c.0.s8 %v4533
          %v4535 = vlaneseq
          %v4536 = vshrl.u32 %v4535, 7
          %v4537 = vsub.s32 %v4534, %v4536
          %v4538 = vrot.slane %v4524, %v4537
          %v4539 = vcombine.high %v4531, %v4531
          %v4540 = vcombine.high %v4538, %v4538
          %v4542 = vunpack.c.l.s4 1966171168
          %v4543 = vunpack.c.0.s8 %v4542
          %v4544 = vlaneseq
          %v4545 = vshrl.u32 %v4544, 7
          %v4546 = vsub.s32 %v4543, %v4545
          %v4547 = vrot.slane %v4531, %v4546
          %v4549 = vunpack.c.l.s4 1966171168
          %v4550 = vunpack.c.0.s8 %v4549
          %v4551 = vlaneseq
          %v4552 = vshrl.u32 %v4551, 7
          %v4553 = vsub.s32 %v4550, %v4552
          %v4554 = vrot.slane %v4538, %v4553
          %v4556 = vunpack.c.l.s4 1966171168
          %v4557 = vunpack.c.0.s8 %v4556
          %v4558 = vlaneseq
          %v4559 = vshrl.u32 %v4558, 7
          %v4560 = vsub.s32 %v4557, %v4559
          %v4561 = vrot.slane %v4539, %v4560
          %v4563 = vunpack.c.l.s4 1966171168
          %v4564 = vunpack.c.0.s8 %v4563
          %v4565 = vlaneseq
          %v4566 = vshrl.u32 %v4565, 7
          %v4567 = vsub.s32 %v4564, %v4566
          %v4568 = vrot.slane %v4540, %v4567
          %v4569 = vcombine.high %v4547, %v4547
          %v4570 = vcombine.high %v4554, %v4554
          %v4571 = vcombine.high %v4561, %v4561
          %v4572 = vcombine.high %v4568, %v4568
          %v4573 = vcombine.high %v4465, %v4465
          %v4575 = vunpack.c.l.s4 1966171168
          %v4576 = vunpack.c.0.s8 %v4575
          %v4577 = vlaneseq
          %v4578 = vshrl.u32 %v4577, 7
          %v4579 = vsub.s32 %v4576, %v4578
          %v4580 = vrot.slane %v4465, %v4579
          %v4582 = vunpack.c.l.s4 1966171168
          %v4583 = vunpack.c.0.s8 %v4582
          %v4584 = vlaneseq
          %v4585 = vshrl.u32 %v4584, 7
          %v4586 = vsub.s32 %v4583, %v4585
          %v4587 = vrot.slane %v4573, %v4586
          %v4588 = vcombine.high %v4580, %v4580
          %v4589 = vcombine.high %v4587, %v4587
          %v4591 = vunpack.c.l.s4 1966171168
          %v4592 = vunpack.c.0.s8 %v4591
          %v4593 = vlaneseq
          %v4594 = vshrl.u32 %v4593, 7
          %v4595 = vsub.s32 %v4592, %v4594
          %v4596 = vrot.slane %v4580, %v4595
          %v4598 = vunpack.c.l.s4 1966171168
          %v4599 = vunpack.c.0.s8 %v4598
          %v4600 = vlaneseq
          %v4601 = vshrl.u32 %v4600, 7
          %v4602 = vsub.s32 %v4599, %v4601
          %v4603 = vrot.slane %v4587, %v4602
          %v4605 = vunpack.c.l.s4 1966171168
          %v4606 = vunpack.c.0.s8 %v4605
          %v4607 = vlaneseq
          %v4608 = vshrl.u32 %v4607, 7
          %v4609 = vsub.s32 %v4606, %v4608
          %v4610 = vrot.slane %v4588, %v4609
          %v4612 = vunpack.c.l.s4 1966171168
          %v4613 = vunpack.c.0.s8 %v4612
          %v4614 = vlaneseq
          %v4615 = vshrl.u32 %v4614, 7
          %v4616 = vsub.s32 %v4613, %v4615
          %v4617 = vrot.slane %v4589, %v4616
          %v4618 = vcombine.high %v4596, %v4596
          %v4619 = vcombine.high %v4603, %v4603
          %v4620 = vcombine.high %v4610, %v4610
          %v4621 = vcombine.high %v4617, %v4617
          %v4622 = vcombine.high %v4466, %v4466
          %v4624 = vunpack.c.l.s4 1966171168
          %v4625 = vunpack.c.0.s8 %v4624
          %v4626 = vlaneseq
          %v4627 = vshrl.u32 %v4626, 7
          %v4628 = vsub.s32 %v4625, %v4627
          %v4629 = vrot.slane %v4466, %v4628
          %v4631 = vunpack.c.l.s4 1966171168
          %v4632 = vunpack.c.0.s8 %v4631
          %v4633 = vlaneseq
          %v4634 = vshrl.u32 %v4633, 7
          %v4635 = vsub.s32 %v4632, %v4634
          %v4636 = vrot.slane %v4622, %v4635
          %v4637 = vcombine.high %v4629, %v4629
          %v4638 = vcombine.high %v4636, %v4636
          %v4640 = vunpack.c.l.s4 1966171168
          %v4641 = vunpack.c.0.s8 %v4640
          %v4642 = vlaneseq
          %v4643 = vshrl.u32 %v4642, 7
          %v4644 = vsub.s32 %v4641, %v4643
          %v4645 = vrot.slane %v4629, %v4644
          %v4647 = vunpack.c.l.s4 1966171168
          %v4648 = vunpack.c.0.s8 %v4647
          %v4649 = vlaneseq
          %v4650 = vshrl.u32 %v4649, 7
          %v4651 = vsub.s32 %v4648, %v4650
          %v4652 = vrot.slane %v4636, %v4651
          %v4654 = vunpack.c.l.s4 1966171168
          %v4655 = vunpack.c.0.s8 %v4654
          %v4656 = vlaneseq
          %v4657 = vshrl.u32 %v4656, 7
          %v4658 = vsub.s32 %v4655, %v4657
          %v4659 = vrot.slane %v4637, %v4658
          %v4661 = vunpack.c.l.s4 1966171168
          %v4662 = vunpack.c.0.s8 %v4661
          %v4663 = vlaneseq
          %v4664 = vshrl.u32 %v4663, 7
          %v4665 = vsub.s32 %v4662, %v4664
          %v4666 = vrot.slane %v4638, %v4665
          %v4667 = vcombine.high %v4645, %v4645
          %v4668 = vcombine.high %v4652, %v4652
          %v4669 = vcombine.high %v4659, %v4659
          %v4670 = vcombine.high %v4666, %v4666
          %v4671 = vcombine.high %v4467, %v4467
          %v4673 = vunpack.c.l.s4 1966171168
          %v4674 = vunpack.c.0.s8 %v4673
          %v4675 = vlaneseq
          %v4676 = vshrl.u32 %v4675, 7
          %v4677 = vsub.s32 %v4674, %v4676
          %v4678 = vrot.slane %v4467, %v4677
          %v4680 = vunpack.c.l.s4 1966171168
          %v4681 = vunpack.c.0.s8 %v4680
          %v4682 = vlaneseq
          %v4683 = vshrl.u32 %v4682, 7
          %v4684 = vsub.s32 %v4681, %v4683
          %v4685 = vrot.slane %v4671, %v4684
          %v4686 = vcombine.high %v4678, %v4678
          %v4687 = vcombine.high %v4685, %v4685
          %v4689 = vunpack.c.l.s4 1966171168
          %v4690 = vunpack.c.0.s8 %v4689
          %v4691 = vlaneseq
          %v4692 = vshrl.u32 %v4691, 7
          %v4693 = vsub.s32 %v4690, %v4692
          %v4694 = vrot.slane %v4678, %v4693
          %v4696 = vunpack.c.l.s4 1966171168
          %v4697 = vunpack.c.0.s8 %v4696
          %v4698 = vlaneseq
          %v4699 = vshrl.u32 %v4698, 7
          %v4700 = vsub.s32 %v4697, %v4699
          %v4701 = vrot.slane %v4685, %v4700
          %v4703 = vunpack.c.l.s4 1966171168
          %v4704 = vunpack.c.0.s8 %v4703
          %v4705 = vlaneseq
          %v4706 = vshrl.u32 %v4705, 7
          %v4707 = vsub.s32 %v4704, %v4706
          %v4708 = vrot.slane %v4686, %v4707
          %v4710 = vunpack.c.l.s4 1966171168
          %v4711 = vunpack.c.0.s8 %v4710
          %v4712 = vlaneseq
          %v4713 = vshrl.u32 %v4712, 7
          %v4714 = vsub.s32 %v4711, %v4713
          %v4715 = vrot.slane %v4687, %v4714
          %v4716 = vcombine.high %v4694, %v4694
          %v4717 = vcombine.high %v4701, %v4701
          %v4718 = vcombine.high %v4708, %v4708
          %v4719 = vcombine.high %v4715, %v4715
          %v4721 = vunpack.c.l.s4 1966171168
          %v4722 = vunpack.c.0.s8 %v4721
          %v4723 = vlaneseq
          %v4724 = vshrl.u32 %v4723, 7
          %v4725 = vsub.s32 %v4722, %v4724
          %v4726 = vrot.slane %v4468, %v4725
          %v4727 = vcombine.high %v4726, %v4726
          %v4729 = vunpack.c.l.s4 1966171168
          %v4730 = vunpack.c.0.s8 %v4729
          %v4731 = vlaneseq
          %v4732 = vshrl.u32 %v4731, 7
          %v4733 = vsub.s32 %v4730, %v4732
          %v4734 = vrot.slane %v4726, %v4733
          %v4736 = vunpack.c.l.s4 1966171168
          %v4737 = vunpack.c.0.s8 %v4736
          %v4738 = vlaneseq
          %v4739 = vshrl.u32 %v4738, 7
          %v4740 = vsub.s32 %v4737, %v4739
          %v4741 = vrot.slane %v4727, %v4740
          %v4742 = vcombine.low %v4498, %v4512
          %v4743 = vcombine.low %v4520, %v4522
          %v4744 = vcombine.low %v4505, %v4519
          %v4746 = vunpack.c.l.s4 1966171168
          %v4747 = vunpack.c.0.s8 %v4746
          %v4748 = vlaneseq
          %v4749 = vshrl.u32 %v4748, 7
          %v4750 = vsub.s32 %v4747, %v4749
          %v4751 = vrot.slane %v4742, %v4750
          %v4753 = vunpack.c.l.s4 1966171168
          %v4754 = vunpack.c.0.s8 %v4753
          %v4755 = vlaneseq
          %v4756 = vshrl.u32 %v4755, 7
          %v4757 = vsub.s32 %v4754, %v4756
          %v4758 = vrot.slane %v4743, %v4757
          %v4760 = vunpack.c.l.s4 1966171168
          %v4761 = vunpack.c.0.s8 %v4760
          %v4762 = vlaneseq
          %v4763 = vshrl.u32 %v4762, 7
          %v4764 = vsub.s32 %v4761, %v4763
          %v4765 = vrot.slane %v4744, %v4764
          %v4767 = vunpack.c.l.s4 1966171168
          %v4768 = vunpack.c.0.s8 %v4767
          %v4769 = vlaneseq
          %v4770 = vshrl.u32 %v4769, 7
          %v4771 = vsub.s32 %v4768, %v4770
          %v4772 = vrot.slane %v4521, %v4771
          %v4773 = vcombine.low %v4751, %v4758
          %v4774 = vcombine.low %v4765, %v4772
          %v4776 = vunpack.c.l.s4 1966171168
          %v4777 = vunpack.c.0.s8 %v4776
          %v4778 = vlaneseq
          %v4779 = vshrl.u32 %v4778, 7
          %v4780 = vsub.s32 %v4777, %v4779
          %v4781 = vrot.slane %v4773, %v4780
          %v4783 = vunpack.c.l.s4 1966171168
          %v4784 = vunpack.c.0.s8 %v4783
          %v4785 = vlaneseq
          %v4786 = vshrl.u32 %v4785, 7
          %v4787 = vsub.s32 %v4784, %v4786
          %v4788 = vrot.slane %v4774, %v4787
          %v4789 = vcombine.low %v4781, %v4788
          %v4790 = vcombine.low %v4523, %v4547
          %v4791 = vcombine.low %v4561, %v4569
          %v4792 = vcombine.low %v4571, %v4554
          %v4794 = vunpack.c.l.s4 1966171168
          %v4795 = vunpack.c.0.s8 %v4794
          %v4796 = vlaneseq
          %v4797 = vshrl.u32 %v4796, 7
          %v4798 = vsub.s32 %v4795, %v4797
          %v4799 = vrot.slane %v4790, %v4798
          %v4801 = vunpack.c.l.s4 1966171168
          %v4802 = vunpack.c.0.s8 %v4801
          %v4803 = vlaneseq
          %v4804 = vshrl.u32 %v4803, 7
          %v4805 = vsub.s32 %v4802, %v4804
          %v4806 = vrot.slane %v4791, %v4805
          %v4808 = vunpack.c.l.s4 1966171168
          %v4809 = vunpack.c.0.s8 %v4808
          %v4810 = vlaneseq
          %v4811 = vshrl.u32 %v4810, 7
          %v4812 = vsub.s32 %v4809, %v4811
          %v4813 = vrot.slane %v4792, %v4812
          %v4815 = vunpack.c.l.s4 1966171168
          %v4816 = vunpack.c.0.s8 %v4815
          %v4817 = vlaneseq
          %v4818 = vshrl.u32 %v4817, 7
          %v4819 = vsub.s32 %v4816, %v4818
          %v4820 = vrot.slane %v4568, %v4819
          %v4821 = vcombine.low %v4799, %v4806
          %v4822 = vcombine.low %v4813, %v4820
          %v4824 = vunpack.c.l.s4 1966171168
          %v4825 = vunpack.c.0.s8 %v4824
          %v4826 = vlaneseq
          %v4827 = vshrl.u32 %v4826, 7
          %v4828 = vsub.s32 %v4825, %v4827
          %v4829 = vrot.slane %v4821, %v4828
          %v4831 = vunpack.c.l.s4 1966171168
          %v4832 = vunpack.c.0.s8 %v4831
          %v4833 = vlaneseq
          %v4834 = vshrl.u32 %v4833, 7
          %v4835 = vsub.s32 %v4832, %v4834
          %v4836 = vrot.slane %v4822, %v4835
          %v4837 = vcombine.low %v4829, %v4836
          %v4838 = vcombine.low %v4570, %v4572
          %v4839 = vcombine.low %v4596, %v4610
          %v4840 = vcombine.low %v4618, %v4620
          %v4842 = vunpack.c.l.s4 1966171168
          %v4843 = vunpack.c.0.s8 %v4842
          %v4844 = vlaneseq
          %v4845 = vshrl.u32 %v4844, 7
          %v4846 = vsub.s32 %v4843, %v4845
          %v4847 = vrot.slane %v4838, %v4846
          %v4849 = vunpack.c.l.s4 1966171168
          %v4850 = vunpack.c.0.s8 %v4849
          %v4851 = vlaneseq
          %v4852 = vshrl.u32 %v4851, 7
          %v4853 = vsub.s32 %v4850, %v4852
          %v4854 = vrot.slane %v4839, %v4853
          %v4856 = vunpack.c.l.s4 1966171168
          %v4857 = vunpack.c.0.s8 %v4856
          %v4858 = vlaneseq
          %v4859 = vshrl.u32 %v4858, 7
          %v4860 = vsub.s32 %v4857, %v4859
          %v4861 = vrot.slane %v4840, %v4860
          %v4863 = vunpack.c.l.s4 1966171168
          %v4864 = vunpack.c.0.s8 %v4863
          %v4865 = vlaneseq
          %v4866 = vshrl.u32 %v4865, 7
          %v4867 = vsub.s32 %v4864, %v4866
          %v4868 = vrot.slane %v4603, %v4867
          %v4869 = vcombine.low %v4847, %v4854
          %v4870 = vcombine.low %v4861, %v4868
          %v4872 = vunpack.c.l.s4 1966171168
          %v4873 = vunpack.c.0.s8 %v4872
          %v4874 = vlaneseq
          %v4875 = vshrl.u32 %v4874, 7
          %v4876 = vsub.s32 %v4873, %v4875
          %v4877 = vrot.slane %v4869, %v4876
          %v4879 = vunpack.c.l.s4 1966171168
          %v4880 = vunpack.c.0.s8 %v4879
          %v4881 = vlaneseq
          %v4882 = vshrl.u32 %v4881, 7
          %v4883 = vsub.s32 %v4880, %v4882
          %v4884 = vrot.slane %v4870, %v4883
          %v4885 = vcombine.low %v4877, %v4884
          %v4886 = vcombine.low %v4617, %v4619
          %v4887 = vcombine.low %v4621, %v4645
          %v4888 = vcombine.low %v4659, %v4667
          %v4890 = vunpack.c.l.s4 1966171168
          %v4891 = vunpack.c.0.s8 %v4890
          %v4892 = vlaneseq
          %v4893 = vshrl.u32 %v4892, 7
          %v4894 = vsub.s32 %v4891, %v4893
          %v4895 = vrot.slane %v4886, %v4894
          %v4897 = vunpack.c.l.s4 1966171168
          %v4898 = vunpack.c.0.s8 %v4897
          %v4899 = vlaneseq
          %v4900 = vshrl.u32 %v4899, 7
          %v4901 = vsub.s32 %v4898, %v4900
          %v4902 = vrot.slane %v4887, %v4901
          %v4904 = vunpack.c.l.s4 1966171168
          %v4905 = vunpack.c.0.s8 %v4904
          %v4906 = vlaneseq
          %v4907 = vshrl.u32 %v4906, 7
          %v4908 = vsub.s32 %v4905, %v4907
          %v4909 = vrot.slane %v4888, %v4908
          %v4911 = vunpack.c.l.s4 1966171168
          %v4912 = vunpack.c.0.s8 %v4911
          %v4913 = vlaneseq
          %v4914 = vshrl.u32 %v4913, 7
          %v4915 = vsub.s32 %v4912, %v4914
          %v4916 = vrot.slane %v4669, %v4915
          %v4917 = vcombine.low %v4895, %v4902
          %v4918 = vcombine.low %v4909, %v4916
          %v4920 = vunpack.c.l.s4 1966171168
          %v4921 = vunpack.c.0.s8 %v4920
          %v4922 = vlaneseq
          %v4923 = vshrl.u32 %v4922, 7
          %v4924 = vsub.s32 %v4921, %v4923
          %v4925 = vrot.slane %v4917, %v4924
          %v4927 = vunpack.c.l.s4 1966171168
          %v4928 = vunpack.c.0.s8 %v4927
          %v4929 = vlaneseq
          %v4930 = vshrl.u32 %v4929, 7
          %v4931 = vsub.s32 %v4928, %v4930
          %v4932 = vrot.slane %v4918, %v4931
          %v4933 = vcombine.low %v4925, %v4932
          %v4934 = vcombine.low %v4652, %v4666
          %v4935 = vcombine.low %v4668, %v4670
          %v4936 = vcombine.low %v4694, %v4708
          %v4938 = vunpack.c.l.s4 1966171168
          %v4939 = vunpack.c.0.s8 %v4938
          %v4940 = vlaneseq
          %v4941 = vshrl.u32 %v4940, 7
          %v4942 = vsub.s32 %v4939, %v4941
          %v4943 = vrot.slane %v4934, %v4942
          %v4945 = vunpack.c.l.s4 1966171168
          %v4946 = vunpack.c.0.s8 %v4945
          %v4947 = vlaneseq
          %v4948 = vshrl.u32 %v4947, 7
          %v4949 = vsub.s32 %v4946, %v4948
          %v4950 = vrot.slane %v4935, %v4949
          %v4952 = vunpack.c.l.s4 1966171168
          %v4953 = vunpack.c.0.s8 %v4952
          %v4954 = vlaneseq
          %v4955 = vshrl.u32 %v4954, 7
          %v4956 = vsub.s32 %v4953, %v4955
          %v4957 = vrot.slane %v4936, %v4956
          %v4959 = vunpack.c.l.s4 1966171168
          %v4960 = vunpack.c.0.s8 %v4959
          %v4961 = vlaneseq
          %v4962 = vshrl.u32 %v4961, 7
          %v4963 = vsub.s32 %v4960, %v4962
          %v4964 = vrot.slane %v4716, %v4963
          %v4965 = vcombine.low %v4943, %v4950
          %v4966 = vcombine.low %v4957, %v4964
          %v4968 = vunpack.c.l.s4 1966171168
          %v4969 = vunpack.c.0.s8 %v4968
          %v4970 = vlaneseq
          %v4971 = vshrl.u32 %v4970, 7
          %v4972 = vsub.s32 %v4969, %v4971
          %v4973 = vrot.slane %v4965, %v4972
          %v4975 = vunpack.c.l.s4 1966171168
          %v4976 = vunpack.c.0.s8 %v4975
          %v4977 = vlaneseq
          %v4978 = vshrl.u32 %v4977, 7
          %v4979 = vsub.s32 %v4976, %v4978
          %v4980 = vrot.slane %v4966, %v4979
          %v4981 = vcombine.low %v4973, %v4980
          %v4982 = vcombine.low %v4718, %v4701
          %v4983 = vcombine.low %v4715, %v4717
          %v4984 = vcombine.low %v4719, %v4734
          %v4986 = vunpack.c.l.s4 1966171168
          %v4987 = vunpack.c.0.s8 %v4986
          %v4988 = vlaneseq
          %v4989 = vshrl.u32 %v4988, 7
          %v4990 = vsub.s32 %v4987, %v4989
          %v4991 = vrot.slane %v4982, %v4990
          %v4993 = vunpack.c.l.s4 1966171168
          %v4994 = vunpack.c.0.s8 %v4993
          %v4995 = vlaneseq
          %v4996 = vshrl.u32 %v4995, 7
          %v4997 = vsub.s32 %v4994, %v4996
          %v4998 = vrot.slane %v4983, %v4997
          %v5000 = vunpack.c.l.s4 1966171168
          %v5001 = vunpack.c.0.s8 %v5000
          %v5002 = vlaneseq
          %v5003 = vshrl.u32 %v5002, 7
          %v5004 = vsub.s32 %v5001, %v5003
          %v5005 = vrot.slane %v4984, %v5004
          %v5007 = vunpack.c.l.s4 1966171168
          %v5008 = vunpack.c.0.s8 %v5007
          %v5009 = vlaneseq
          %v5010 = vshrl.u32 %v5009, 7
          %v5011 = vsub.s32 %v5008, %v5010
          %v5012 = vrot.slane %v4741, %v5011
          %v5013 = vcombine.low %v4991, %v4998
          %v5014 = vcombine.low %v5005, %v5012
          %v5016 = vunpack.c.l.s4 1966171168
          %v5017 = vunpack.c.0.s8 %v5016
          %v5018 = vlaneseq
          %v5019 = vshrl.u32 %v5018, 7
          %v5020 = vsub.s32 %v5017, %v5019
          %v5021 = vrot.slane %v5013, %v5020
          %v5023 = vunpack.c.l.s4 1966171168
          %v5024 = vunpack.c.0.s8 %v5023
          %v5025 = vlaneseq
          %v5026 = vshrl.u32 %v5025, 7
          %v5027 = vsub.s32 %v5024, %v5026
          %v5028 = vrot.slane %v5014, %v5027
          %v5029 = vcombine.low %v5021, %v5028
          %vm5036 = vcmask 129024
          %5037 = vst.msk [vmem:[%s201] sm:$0x7f] %vm5036, %v4789
          %5038 = vst.msk [vmem:[%s201 + $0x8] sm:$0x7f] %vm5036, %v4837
          %5039 = vst.msk [vmem:[%s201 + $0x10] sm:$0x7f] %vm5036, %v4885
          %5040 = vst.msk [vmem:[%s201 + $0x18] sm:$0x7f] %vm5036, %v4933
          %5041 = vst.msk [vmem:[%s201 + $0x20] sm:$0x7f] %vm5036, %v4981
          %5042 = vst.msk [vmem:[%s201 + $0x28] sm:$0x7f] %vm5036, %v5029
        $region40: #{tpu_custom_call.1} parent=31 // pred_fallthru
          _
        %s5043 = sand.u32 %s122, 1
        %s5044 = scalar_lea.sflag [#allocation4], %s5043
        %s5045 = sand.u32 %s122, 1
        %s5046 = smul.addr %s5045, 48
        %s5047 = scalar_lea.vmem [#allocation3], %s5046
        // Predicated region
        $region41: #{tpu_custom_call.1} parent=31 // pred_check
          %p5048 = pneg %p132
        $region42: #{tpu_custom_call.1} parent=31 // pred_check_branch
          %5050 = sbr.rel (%p5048) target = $region44
        $region43: #{tpu_custom_call.1} parent=31 // pred_region
          %s5051 = smul.u32 %s22, 5
          %s5052 = sadd.s32 %s5051, %s23
          %s5054 = ssub.s32 768, 768
          %5055 = vsyncadd %s5044, %s5054
          %s5056 = smul.addr %s5052, 6
          %s5057 = smul.addr %s5056, 128
          %s5058 = scalar_lea.hbm %s3, %s5057
          %s5059 = sshll.u32 %s5047, 4
          %s5060 = int_to_ptr.vmem [resolvable:$true] %s5059
          %5065 = dma.vmem_to_hbm [thread:$0]  %s5060, 768, %s5058, %s5044, 128, 128, 8
        $region44: #{tpu_custom_call.1} parent=31 // pred_fallthru
          _
      $region32: #{tpu_custom_call.1} parent=5 // pred_fallthru
        _
      %p5066 = scmp.le.s32.totalorder 2, %s12
      // Predicated region
      $region45: #{tpu_custom_call.1} parent=5 // pred_check
        %p5067 = pneg %p5066
      $region46: #{tpu_custom_call.1} parent=5 // pred_check_branch
        %5069 = sbr.rel (%p5067) target = $region48
      $region47: #{tpu_custom_call.1} parent=5 // pred_region
        %s5070 = ssub.s32 %s12, 2
        // Predicated region
        $region49: #{tpu_custom_call.1} parent=47 // pred_check
          %p5071 = pneg %p138
        $region50: #{tpu_custom_call.1} parent=47 // pred_check_branch
          %5073 = sbr.rel (%p5071) target = $region52
        $region51: #{tpu_custom_call.1} parent=47 // pred_region
          %s5074 = sand.u32 %s123, 1
          %s5075 = scalar_lea.sflag [#allocation4], %s5074
          %s5076 = sand.u32 %s123, 1
          %s5077 = smul.addr %s5076, 48
          %s5078 = scalar_lea.vmem [#allocation3], %s5077
          %5079 = dma.done %s5075, 768
        $region52: #{tpu_custom_call.1} parent=47 // pred_fallthru
          _
      $region48: #{tpu_custom_call.1} parent=5 // pred_fallthru
        _
    $region6: #{tpu_custom_call.1} parent=1 // loop_footer
      %s16 = sadd.s32 1, %s12
    $region7: #{tpu_custom_call.1} parent=1 // loop_footer_branch
      %11 = sbr.rel target = $region3
    $region8: #{tpu_custom_call.1} parent=1 // loop_exit
      _
    %5080 = vsyncpa [#allocation4], 1
    %s5081 = scalar_lea.sflag [#allocation4], 1
    %5082 = vsyncpa %s5081, 1

</llo_original>
